<compile_context>
chip_gen: v5e
topology: v5e:2x2
jax: 0.10.0
libtpu: 0.0.40
codegen_flags: <defaults>
</compile_context>

<pallas_src>
import math

import numpy as np
import jax
import jax.numpy as jnp
from jax.experimental import pallas as pl
from jax.experimental.pallas import tpu as pltpu

NUM_TERMS = 8  # matches compute_sine_cosine(num_terms=8)


# ----------------------------------------------------------------------------
# Pallas kernel
# ----------------------------------------------------------------------------
def _embedding_data_kernel(
    x_ref,      # (tm, F) f32            raw rows: [discrete codes | numeric]
    pang_ref,   # (F, 16*n_nums) f32     angle-expansion matrix (sin half|cos half)
    phase_ref,  # (1, 16*n_nums) f32     [0..0 | pi/2..pi/2]
    psel_ref,   # (F, sum_cards) f32     0/1 selector copying code i into its slot
    catid_ref,  # (1, sum_cards) f32     category id inside each slot
    w1_ref,     # (16n, 16n) bf16        mlp_nums Linear 1 (unsplit)
    b1_ref,     # (1, 16n) f32
    w2_ref,     # (16n, 16n) bf16        mlp_nums Linear 2
    b2_ref,     # (1, 16n) f32
    w3d_ref,    # (sum_cards, emb_dim) bf16   emb tables folded into mlp_output L1
    w3n_ref,    # (16n, emb_dim) bf16         mlp_output L1, numeric half
    b3_ref,     # (1, emb_dim) f32
    w4t_ref,    # (input_size, emb_dim) bf16  mlp_output L2, transposed
    b4t_ref,    # (input_size, 1) f32
    o_ref,      # (input_size, tm) f32        transposed output (lane-dense store)
):
    xr = x_ref[...]                                             # keep f32 precision

    # --- sine/cosine featurization: one f32 MXU pass builds BOTH halves ------
    angles = jnp.dot(xr, pang_ref[...], preferred_element_type=jnp.float32)
    sc = jnp.sin(angles + phase_ref[...]).astype(jnp.bfloat16)  # [sin | cos]

    # --- mlp_nums: Linear -> SiLU -> Linear (W1 consumed unsplit) ------------
    h1 = jnp.dot(sc, w1_ref[...], preferred_element_type=jnp.float32) + b1_ref[...]
    h1 = h1 * jax.nn.sigmoid(h1)                                # SiLU in f32
    h2 = jnp.dot(h1.astype(jnp.bfloat16), w2_ref[...],
                 preferred_element_type=jnp.float32) + b2_ref[...]

    # --- nn.Embedding lookups, fused: one-hot(code) @ (E @ W3_disc) ----------
    codes = jnp.dot(xr, psel_ref[...], preferred_element_type=jnp.float32)
    onehot = (jnp.floor(codes) == catid_ref[...])               # .long() semantics
    onehot = onehot.astype(jnp.float32).astype(jnp.bfloat16)

    # --- mlp_output: Linear -> ReLU -> Linear ---------------------------------
    pre = (jnp.dot(onehot, w3d_ref[...], preferred_element_type=jnp.float32)
           + jnp.dot(h2.astype(jnp.bfloat16), w3n_ref[...],
                     preferred_element_type=jnp.float32)
           + b3_ref[...])
    o1 = jnp.maximum(pre, 0.0).astype(jnp.bfloat16)             # (tm, emb_dim)

    # Final layer computed transposed: out^T = W4^T @ o1^T  -> lane axis is tm.
    out_t = jax.lax.dot_general(
        w4t_ref[...], o1, (((1,), (1,)), ((), ())),
        preferred_element_type=jnp.float32) + b4t_ref[...]
    o_ref[...] = out_t.astype(o_ref.dtype)


# ----------------------------------------------------------------------------
# Wrapper
# ----------------------------------------------------------------------------
def embedding_data_forward(x, params, *, n_bins, cards, n_nums, emb_dim,
                           input_size, tm_max=1024):
    """x: (B, T, n_disc + n_nums) float32.  Returns (B, T, input_size)."""
    cards_list = [2] * n_bins + list(cards)
    n_disc = len(cards_list)
    sum_cards = int(sum(cards_list))
    d_sc = NUM_TERMS * n_nums
    d_num = 2 * d_sc                        # = 16 * n_nums
    F = n_disc + n_nums
    # TODO(synk): the n_disc == 0 / n_nums == 0 branches of the module are not
    # implemented in this fused kernel.
    assert n_disc > 0 and n_nums > 0

    B, T, Fx = x.shape
    assert Fx >= F
    M = B * T

    def round_up(a, b):
        return -(-a // b) * b

    # Row tile: multiple of 128 so the transposed output store is lane-dense.
    if M <= tm_max:
        tm = round_up(M, 128)
        m_pad = tm
    else:
        tm = tm_max
        m_pad = round_up(M, tm)

    xrow = x.reshape(M, Fx)[:, :F].astype(jnp.float32)
    if m_pad > M:
        xrow = jnp.pad(xrow, ((0, m_pad - M), (0, 0)))          # pad rows with 0

    # ---- constant matrices (tiny, built on host) -----------------------------
    scales = (2.0 ** np.arange(NUM_TERMS, dtype=np.float32)) * np.float32(math.pi)
    p_ang = np.zeros((F, d_num), np.float32)
    for i in range(n_nums):
        p_ang[n_disc + i, i * NUM_TERMS:(i + 1) * NUM_TERMS] = scales
        p_ang[n_disc + i, d_sc + i * NUM_TERMS: d_sc + (i + 1) * NUM_TERMS] = scales
    phase = np.concatenate([np.zeros((1, d_sc), np.float32),
                            np.full((1, d_sc), 0.5 * math.pi, np.float32)], axis=1)

    offs = np.cumsum([0] + cards_list)
    p_sel = np.zeros((F, sum_cards), np.float32)
    catid = np.zeros((1, sum_cards), np.float32)
    for i, c in enumerate(cards_list):
        p_sel[i, offs[i]:offs[i + 1]] = 1.0
        catid[0, offs[i]:offs[i + 1]] = np.arange(c, dtype=np.float32)

    p_ang, phase = jnp.asarray(p_ang), jnp.asarray(phase)
    p_sel, catid = jnp.asarray(p_sel), jnp.asarray(catid)

    # ---- fold embedding tables into W3's discrete half (exact) ---------------
    W3 = params["W3"]
    W3_disc, W3_nums = W3[:emb_dim * n_disc], W3[emb_dim * n_disc:]
    folded = [params["emb_tables"][i] @ W3_disc[i * emb_dim:(i + 1) * emb_dim]
              for i in range(n_disc)]
    w3d = jnp.concatenate(folded, axis=0)                       # (sum_cards, emb_dim)

    bf = jnp.bfloat16
    w1 = params["W1"].astype(bf)
    w2 = params["W2"].astype(bf)
    w3d = w3d.astype(bf)
    w3n = W3_nums.astype(bf)
    w4t = params["W4"].T.astype(bf)                             # (input_size, emb_dim)
    b4t = params["b4"].T                                        # (input_size, 1) f32

    def full(arr):
        return pl.BlockSpec(arr.shape, lambda i: (0, 0))

    out_t = pl.pallas_call(
        _embedding_data_kernel,
        out_shape=jax.ShapeDtypeStruct((input_size, m_pad), jnp.float32),
        grid=(m_pad // tm,),
        in_specs=[
            pl.BlockSpec((tm, F), lambda i: (i, 0)),            # row-tiled input
            full(p_ang), full(phase), full(p_sel), full(catid),
            full(w1), full(params["b1"]), full(w2), full(params["b2"]),
            full(w3d), full(w3n), full(params["b3"]),
            full(w4t), full(b4t),
        ],
        # transposed output block: lane axis = tm (multiple of 128) -> dense vst
        out_specs=pl.BlockSpec((input_size, tm), lambda i: (0, i)),
        compiler_params=pltpu.CompilerParams(
            dimension_semantics=("parallel",)),                 # both v7x TCs
    )(xrow, p_ang, phase, p_sel, catid,
      w1, params["b1"], w2, params["b2"],
      w3d, w3n, params["b3"], w4t, b4t)

    return out_t.T[:M].reshape(B, T, input_size)


# ----------------------------------------------------------------------------
# Pure-JAX f32 reference (mirrors the PyTorch forward exactly)
# ----------------------------------------------------------------------------
def embedding_data_reference(x, params, *, n_bins, cards, n_nums, emb_dim,
                             input_size):
    cards_list = [2] * n_bins + list(cards)
    n_disc = len(cards_list)
    x_disc = x[..., :n_disc].astype(jnp.int32)
    x_nums = x[..., n_disc:n_disc + n_nums].astype(jnp.float32)

    embs = [params["emb_tables"][i][x_disc[..., i]] for i in range(n_disc)]
    x_disc_emb = jnp.concatenate(embs, axis=-1)

    angles = ((2.0 ** jnp.arange(NUM_TERMS, dtype=jnp.float32)) * math.pi
              * x_nums[..., None])
    sin_v = jnp.sin(angles).reshape(*x_nums.shape[:-1], -1)
    cos_v = jnp.cos(angles).reshape(*x_nums.shape[:-1], -1)
    sc = jnp.concatenate([sin_v, cos_v], axis=-1)

    h1 = sc @ params["W1"] + params["b1"]
    h1 = h1 * jax.nn.sigmoid(h1)
    h2 = h1 @ params["W2"] + params["b2"]

    x_emb = jnp.concatenate([x_disc_emb, h2], axis=-1)
    o1 = jnp.maximum(x_emb @ params["W3"] + params["b3"], 0.0)
    return o1 @ params["W4"] + params["b4"]


# ----------------------------------------------------------------------------
# Deterministic synthetic parameters
# ----------------------------------------------------------------------------
def make_params(key, *, n_bins, cards, n_nums, emb_dim, input_size):
    cards_list = [2] * n_bins + list(cards)
    n_disc = len(cards_list)
    d_disc = emb_dim * n_disc
    d_num = 16 * n_nums

    keys = jax.random.split(key, n_disc + 4)

    emb_tables = [
        0.1 * jax.random.normal(keys[i], (cards_list[i], emb_dim), jnp.float32)
        for i in range(n_disc)
    ]

    def lin(k, fan_in, fan_out):
        kw, kb = jax.random.split(k)
        bound = 1.0 / math.sqrt(fan_in)
        W = jax.random.uniform(kw, (fan_in, fan_out), jnp.float32, -bound, bound)
        b = jax.random.uniform(kb, (1, fan_out), jnp.float32, -bound, bound)
        return W, b

    W1, b1 = lin(keys[n_disc + 0], d_num, d_num)
    W2, b2 = lin(keys[n_disc + 1], d_num, d_num)
    W3, b3 = lin(keys[n_disc + 2], d_disc + d_num, emb_dim)
    W4, b4 = lin(keys[n_disc + 3], emb_dim, input_size)

    return {"emb_tables": emb_tables,
            "W1": W1, "b1": b1, "W2": W2, "b2": b2,
            "W3": W3, "b3": b3, "W4": W4, "b4": b4}


if __name__ == "__main__":
    # Small configuration consistent with the module's __init__.
    B, T = 2, 8
    n_bins, cards, n_nums = 2, [5], 3
    n_disc = n_bins + len(cards)
    emb_dim = 8
    input_size = n_disc + n_nums            # original feature count

    key = jax.random.PRNGKey(0)
    k_param, k_disc, k_num = jax.random.split(key, 3)
    params = make_params(k_param, n_bins=n_bins, cards=cards, n_nums=n_nums,
                         emb_dim=emb_dim, input_size=input_size)

    # Input x: discrete columns hold integer codes stored as floats; numeric
    # columns are floats in [0, 1).
    cards_list = [2] * n_bins + cards
    dkeys = jax.random.split(k_disc, n_disc)
    disc_cols = [jax.random.randint(dkeys[i], (B, T, 1), 0, c).astype(jnp.float32)
                 for i, c in enumerate(cards_list)]
    x = jnp.concatenate(disc_cols + [jax.random.uniform(k_num, (B, T, n_nums),
                                                        jnp.float32)], axis=-1)

    out = embedding_data_forward(x, params, n_bins=n_bins, cards=cards,
                                 n_nums=n_nums, emb_dim=emb_dim,
                                 input_size=input_size)
    out = jax.block_until_ready(out)

    ref = embedding_data_reference(x, params, n_bins=n_bins, cards=cards,
                                   n_nums=n_nums, emb_dim=emb_dim,
                                   input_size=input_size)
    assert out.shape == (B, T, input_size)
    # bf16 matmul operands (f32 accumulation) -> loosened tolerance vs f32 ref.
    assert jnp.allclose(out, ref, atol=5e-2, rtol=5e-2), "mismatch vs reference"

    print("KERNEL_OK")
</pallas_src>

<mosaic_0001>
module attributes {stable_mosaic.version = 11 : i64} {
  func.func @_embedding_data_kernel(%arg0: i32, %arg1: memref<128x6xf32, #tpu.memory_space<vmem>>, %arg2: memref<6x48xf32, #tpu.memory_space<vmem>>, %arg3: memref<1x48xf32, #tpu.memory_space<vmem>>, %arg4: memref<6x9xf32, #tpu.memory_space<vmem>>, %arg5: memref<1x9xf32, #tpu.memory_space<vmem>>, %arg6: memref<48x48xbf16, #tpu.memory_space<vmem>>, %arg7: memref<1x48xf32, #tpu.memory_space<vmem>>, %arg8: memref<48x48xbf16, #tpu.memory_space<vmem>>, %arg9: memref<1x48xf32, #tpu.memory_space<vmem>>, %arg10: memref<9x8xbf16, #tpu.memory_space<vmem>>, %arg11: memref<48x8xbf16, #tpu.memory_space<vmem>>, %arg12: memref<1x8xf32, #tpu.memory_space<vmem>>, %arg13: memref<6x8xbf16, #tpu.memory_space<vmem>>, %arg14: memref<6x1xf32, #tpu.memory_space<vmem>>, %arg15: memref<6x128xf32, #tpu.memory_space<vmem>>) attributes {dimension_semantics = [#tpu.dimension_semantics<parallel>], iteration_bounds = array<i64: 1>, scalar_prefetch = 0 : i64, scratch_operands = 0 : i64, tpu.core_type = #tpu.core_type<tc>, window_params = [{transform_indices = @transform_0, window_bounds = array<i64: 128, 6>}, {pipeline_mode = #tpu.pipeline_mode<synchronous>, transform_indices = @transform_1, window_bounds = array<i64: 6, 48>}, {pipeline_mode = #tpu.pipeline_mode<synchronous>, transform_indices = @transform_2, window_bounds = array<i64: 1, 48>}, {pipeline_mode = #tpu.pipeline_mode<synchronous>, transform_indices = @transform_3, window_bounds = array<i64: 6, 9>}, {pipeline_mode = #tpu.pipeline_mode<synchronous>, transform_indices = @transform_4, window_bounds = array<i64: 1, 9>}, {pipeline_mode = #tpu.pipeline_mode<synchronous>, transform_indices = @transform_5, window_bounds = array<i64: 48, 48>}, {pipeline_mode = #tpu.pipeline_mode<synchronous>, transform_indices = @transform_6, window_bounds = array<i64: 1, 48>}, {pipeline_mode = #tpu.pipeline_mode<synchronous>, transform_indices = @transform_7, window_bounds = array<i64: 48, 48>}, {pipeline_mode = #tpu.pipeline_mode<synchronous>, transform_indices = @transform_8, window_bounds = array<i64: 1, 48>}, {pipeline_mode = #tpu.pipeline_mode<synchronous>, transform_indices = @transform_9, window_bounds = array<i64: 9, 8>}, {pipeline_mode = #tpu.pipeline_mode<synchronous>, transform_indices = @transform_10, window_bounds = array<i64: 48, 8>}, {pipeline_mode = #tpu.pipeline_mode<synchronous>, transform_indices = @transform_11, window_bounds = array<i64: 1, 8>}, {pipeline_mode = #tpu.pipeline_mode<synchronous>, transform_indices = @transform_12, window_bounds = array<i64: 6, 8>}, {pipeline_mode = #tpu.pipeline_mode<synchronous>, transform_indices = @transform_13, window_bounds = array<i64: 6, 1>}, {transform_indices = @transform_14, window_bounds = array<i64: 6, 128>}]} {
    %c0 = arith.constant 0 : index
    %c0_0 = arith.constant 0 : index
    %0 = vector.load %arg1[%c0, %c0_0] : memref<128x6xf32, #tpu.memory_space<vmem>>, vector<128x6xf32>
    %c0_1 = arith.constant 0 : index
    %c0_2 = arith.constant 0 : index
    %1 = vector.load %arg2[%c0_1, %c0_2] : memref<6x48xf32, #tpu.memory_space<vmem>>, vector<6x48xf32>
    %cst = arith.constant dense<0.000000e+00> : vector<128x48xf32>
    %2 = tpu.matmul %0, %1, %cst {dimension_numbers = #tpu.dot_dimension_numbers<[1], [0], [0], [1], [0, 0, 1, 1], [], []>} : vector<128x6xf32>, vector<6x48xf32>, vector<128x48xf32> -> vector<128x48xf32>
    %c0_3 = arith.constant 0 : index
    %c0_4 = arith.constant 0 : index
    %3 = vector.load %arg3[%c0_3, %c0_4] : memref<1x48xf32, #tpu.memory_space<vmem>>, vector<1x48xf32>
    %4 = vector.broadcast %3 : vector<1x48xf32> to vector<128x48xf32>
    %5 = arith.addf %2, %4 : vector<128x48xf32>
    %6 = math.sin %5 : vector<128x48xf32>
    %7 = arith.truncf %6 : vector<128x48xf32> to vector<128x48xbf16>
    %c0_5 = arith.constant 0 : index
    %c0_6 = arith.constant 0 : index
    %8 = vector.load %arg6[%c0_5, %c0_6] : memref<48x48xbf16, #tpu.memory_space<vmem>>, vector<48x48xbf16>
    %cst_7 = arith.constant dense<0.000000e+00> : vector<128x48xf32>
    %9 = tpu.matmul %7, %8, %cst_7 {dimension_numbers = #tpu.dot_dimension_numbers<[1], [0], [0], [1], [0, 0, 1, 1], [], []>} : vector<128x48xbf16>, vector<48x48xbf16>, vector<128x48xf32> -> vector<128x48xf32>
    %c0_8 = arith.constant 0 : index
    %c0_9 = arith.constant 0 : index
    %10 = vector.load %arg7[%c0_8, %c0_9] : memref<1x48xf32, #tpu.memory_space<vmem>>, vector<1x48xf32>
    %11 = vector.broadcast %10 : vector<1x48xf32> to vector<128x48xf32>
    %12 = arith.addf %9, %11 : vector<128x48xf32>
    %13 = arith.negf %12 : vector<128x48xf32>
    %14 = math.exp %13 : vector<128x48xf32>
    %cst_10 = arith.constant 1.000000e+00 : f32
    %15 = vector.broadcast %cst_10 : f32 to vector<128x48xf32>
    %16 = arith.addf %15, %14 : vector<128x48xf32>
    %17 = arith.divf %15, %16 : vector<128x48xf32>
    %18 = arith.mulf %12, %17 : vector<128x48xf32>
    %19 = arith.truncf %18 : vector<128x48xf32> to vector<128x48xbf16>
    %c0_11 = arith.constant 0 : index
    %c0_12 = arith.constant 0 : index
    %20 = vector.load %arg8[%c0_11, %c0_12] : memref<48x48xbf16, #tpu.memory_space<vmem>>, vector<48x48xbf16>
    %cst_13 = arith.constant dense<0.000000e+00> : vector<128x48xf32>
    %21 = tpu.matmul %19, %20, %cst_13 {dimension_numbers = #tpu.dot_dimension_numbers<[1], [0], [0], [1], [0, 0, 1, 1], [], []>} : vector<128x48xbf16>, vector<48x48xbf16>, vector<128x48xf32> -> vector<128x48xf32>
    %c0_14 = arith.constant 0 : index
    %c0_15 = arith.constant 0 : index
    %22 = vector.load %arg9[%c0_14, %c0_15] : memref<1x48xf32, #tpu.memory_space<vmem>>, vector<1x48xf32>
    %23 = vector.broadcast %22 : vector<1x48xf32> to vector<128x48xf32>
    %24 = arith.addf %21, %23 : vector<128x48xf32>
    %c0_16 = arith.constant 0 : index
    %c0_17 = arith.constant 0 : index
    %25 = vector.load %arg4[%c0_16, %c0_17] : memref<6x9xf32, #tpu.memory_space<vmem>>, vector<6x9xf32>
    %cst_18 = arith.constant dense<0.000000e+00> : vector<128x9xf32>
    %26 = tpu.matmul %0, %25, %cst_18 {dimension_numbers = #tpu.dot_dimension_numbers<[1], [0], [0], [1], [0, 0, 1, 1], [], []>} : vector<128x6xf32>, vector<6x9xf32>, vector<128x9xf32> -> vector<128x9xf32>
    %27 = math.floor %26 : vector<128x9xf32>
    %c0_19 = arith.constant 0 : index
    %c0_20 = arith.constant 0 : index
    %28 = vector.load %arg5[%c0_19, %c0_20] : memref<1x9xf32, #tpu.memory_space<vmem>>, vector<1x9xf32>
    %29 = vector.broadcast %28 : vector<1x9xf32> to vector<128x9xf32>
    %30 = arith.cmpf oeq, %27, %29 : vector<128x9xf32>
    %31 = arith.extui %30 : vector<128x9xi1> to vector<128x9xi32>
    %32 = arith.sitofp %31 : vector<128x9xi32> to vector<128x9xf32>
    %33 = arith.truncf %32 : vector<128x9xf32> to vector<128x9xbf16>
    %c0_21 = arith.constant 0 : index
    %c0_22 = arith.constant 0 : index
    %34 = vector.load %arg10[%c0_21, %c0_22] : memref<9x8xbf16, #tpu.memory_space<vmem>>, vector<9x8xbf16>
    %cst_23 = arith.constant dense<0.000000e+00> : vector<128x8xf32>
    %35 = tpu.matmul %33, %34, %cst_23 {dimension_numbers = #tpu.dot_dimension_numbers<[1], [0], [0], [1], [0, 0, 1, 1], [], []>} : vector<128x9xbf16>, vector<9x8xbf16>, vector<128x8xf32> -> vector<128x8xf32>
    %36 = arith.truncf %24 : vector<128x48xf32> to vector<128x48xbf16>
    %c0_24 = arith.constant 0 : index
    %c0_25 = arith.constant 0 : index
    %37 = vector.load %arg11[%c0_24, %c0_25] : memref<48x8xbf16, #tpu.memory_space<vmem>>, vector<48x8xbf16>
    %cst_26 = arith.constant dense<0.000000e+00> : vector<128x8xf32>
    %38 = tpu.matmul %36, %37, %cst_26 {dimension_numbers = #tpu.dot_dimension_numbers<[1], [0], [0], [1], [0, 0, 1, 1], [], []>} : vector<128x48xbf16>, vector<48x8xbf16>, vector<128x8xf32> -> vector<128x8xf32>
    %39 = arith.addf %35, %38 : vector<128x8xf32>
    %c0_27 = arith.constant 0 : index
    %c0_28 = arith.constant 0 : index
    %40 = vector.load %arg12[%c0_27, %c0_28] : memref<1x8xf32, #tpu.memory_space<vmem>>, vector<1x8xf32>
    %41 = vector.broadcast %40 : vector<1x8xf32> to vector<128x8xf32>
    %42 = arith.addf %39, %41 : vector<128x8xf32>
    %cst_29 = arith.constant 0.000000e+00 : f32
    %43 = vector.broadcast %cst_29 : f32 to vector<128x8xf32>
    %44 = arith.maximumf %42, %43 : vector<128x8xf32>
    %45 = arith.truncf %44 : vector<128x8xf32> to vector<128x8xbf16>
    %c0_30 = arith.constant 0 : index
    %c0_31 = arith.constant 0 : index
    %46 = vector.load %arg13[%c0_30, %c0_31] : memref<6x8xbf16, #tpu.memory_space<vmem>>, vector<6x8xbf16>
    %cst_32 = arith.constant dense<0.000000e+00> : vector<6x128xf32>
    %47 = tpu.matmul %46, %45, %cst_32 {dimension_numbers = #tpu.dot_dimension_numbers<[1], [1], [0], [0], [0, 0, 1, 0], [], []>} : vector<6x8xbf16>, vector<128x8xbf16>, vector<6x128xf32> -> vector<6x128xf32>
    %c0_33 = arith.constant 0 : index
    %c0_34 = arith.constant 0 : index
    %48 = vector.load %arg14[%c0_33, %c0_34] : memref<6x1xf32, #tpu.memory_space<vmem>>, vector<6x1xf32>
    %49 = vector.broadcast %48 : vector<6x1xf32> to vector<6x128xf32>
    %50 = arith.addf %47, %49 : vector<6x128xf32>
    %c0_35 = arith.constant 0 : index
    %c0_36 = arith.constant 0 : index
    %51 = vector.load %arg15[%c0_35, %c0_36] : memref<6x128xf32, #tpu.memory_space<vmem>>, vector<6x128xf32>
    tpu.vector_store %arg15[%c0_35, %c0_36], %50 {strides = array<i32>} : memref<6x128xf32, #tpu.memory_space<vmem>>, vector<6x128xf32>,
    return
  }
  func.func @transform_0(%arg0: i32) -> (i32, i32) {
    %c0_i32 = arith.constant 0 : i32
    %c0_i32_0 = arith.constant 0 : i32
    return %arg0, %c0_i32 : i32, i32
  }
  func.func @transform_1(%arg0: i32) -> (i32, i32) {
    %c0_i32 = arith.constant 0 : i32
    %c0_i32_0 = arith.constant 0 : i32
    %c0_i32_1 = arith.constant 0 : i32
    return %c0_i32, %c0_i32_0 : i32, i32
  }
  func.func @transform_2(%arg0: i32) -> (i32, i32) {
    %c0_i32 = arith.constant 0 : i32
    %c0_i32_0 = arith.constant 0 : i32
    %c0_i32_1 = arith.constant 0 : i32
    return %c0_i32, %c0_i32_0 : i32, i32
  }
  func.func @transform_3(%arg0: i32) -> (i32, i32) {
    %c0_i32 = arith.constant 0 : i32
    %c0_i32_0 = arith.constant 0 : i32
    %c0_i32_1 = arith.constant 0 : i32
    return %c0_i32, %c0_i32_0 : i32, i32
  }
  func.func @transform_4(%arg0: i32) -> (i32, i32) {
    %c0_i32 = arith.constant 0 : i32
    %c0_i32_0 = arith.constant 0 : i32
    %c0_i32_1 = arith.constant 0 : i32
    return %c0_i32, %c0_i32_0 : i32, i32
  }
  func.func @transform_5(%arg0: i32) -> (i32, i32) {
    %c0_i32 = arith.constant 0 : i32
    %c0_i32_0 = arith.constant 0 : i32
    %c0_i32_1 = arith.constant 0 : i32
    return %c0_i32, %c0_i32_0 : i32, i32
  }
  func.func @transform_6(%arg0: i32) -> (i32, i32) {
    %c0_i32 = arith.constant 0 : i32
    %c0_i32_0 = arith.constant 0 : i32
    %c0_i32_1 = arith.constant 0 : i32
    return %c0_i32, %c0_i32_0 : i32, i32
  }
  func.func @transform_7(%arg0: i32) -> (i32, i32) {
    %c0_i32 = arith.constant 0 : i32
    %c0_i32_0 = arith.constant 0 : i32
    %c0_i32_1 = arith.constant 0 : i32
    return %c0_i32, %c0_i32_0 : i32, i32
  }
  func.func @transform_8(%arg0: i32) -> (i32, i32) {
    %c0_i32 = arith.constant 0 : i32
    %c0_i32_0 = arith.constant 0 : i32
    %c0_i32_1 = arith.constant 0 : i32
    return %c0_i32, %c0_i32_0 : i32, i32
  }
  func.func @transform_9(%arg0: i32) -> (i32, i32) {
    %c0_i32 = arith.constant 0 : i32
    %c0_i32_0 = arith.constant 0 : i32
    %c0_i32_1 = arith.constant 0 : i32
    return %c0_i32, %c0_i32_0 : i32, i32
  }
  func.func @transform_10(%arg0: i32) -> (i32, i32) {
    %c0_i32 = arith.constant 0 : i32
    %c0_i32_0 = arith.constant 0 : i32
    %c0_i32_1 = arith.constant 0 : i32
    return %c0_i32, %c0_i32_0 : i32, i32
  }
  func.func @transform_11(%arg0: i32) -> (i32, i32) {
    %c0_i32 = arith.constant 0 : i32
    %c0_i32_0 = arith.constant 0 : i32
    %c0_i32_1 = arith.constant 0 : i32
    return %c0_i32, %c0_i32_0 : i32, i32
  }
  func.func @transform_12(%arg0: i32) -> (i32, i32) {
    %c0_i32 = arith.constant 0 : i32
    %c0_i32_0 = arith.constant 0 : i32
    %c0_i32_1 = arith.constant 0 : i32
    return %c0_i32, %c0_i32_0 : i32, i32
  }
  func.func @transform_13(%arg0: i32) -> (i32, i32) {
    %c0_i32 = arith.constant 0 : i32
    %c0_i32_0 = arith.constant 0 : i32
    %c0_i32_1 = arith.constant 0 : i32
    return %c0_i32, %c0_i32_0 : i32, i32
  }
  func.func @transform_14(%arg0: i32) -> (i32, i32) {
    %c0_i32 = arith.constant 0 : i32
    %c0_i32_0 = arith.constant 0 : i32
    return %c0_i32, %arg0 : i32, i32
  }
}

</mosaic_0001>

<llo_original>
// kernel: tpu_custom_call.1
$region0: #{tpu_custom_call.1}
  #allocation0 [shape = 'u32[]', space=smem, size = 0x4, offset = 0x4, fixed_abs, tag = 'smem constant byte address 0x4 - core index']
  #allocation1 [shape = 'u32[72,128]{1,0:T(1,128)}', space=vmem, size = 0x9000, scoped, tag = 'internal scratch']
  %s0 = inlined_call_operand.vmem [shape: f32[128,6], index: 0, kind: input, shape index: {}]
  %s1 = inlined_call_operand.vmem [shape: f32[6,48], index: 1, kind: input, shape index: {}]
  %s2 = inlined_call_operand.vmem [shape: f32[1,48], index: 2, kind: input, shape index: {}]
  %s3 = inlined_call_operand.vmem [shape: f32[6,9], index: 3, kind: input, shape index: {}]
  %s4 = inlined_call_operand.vmem [shape: f32[1,9], index: 4, kind: input, shape index: {}]
  %s5 = inlined_call_operand.vmem [shape: bf16[48,48], index: 5, kind: input, shape index: {}]
  %s6 = inlined_call_operand.vmem [shape: f32[1,48], index: 6, kind: input, shape index: {}]
  %s7 = inlined_call_operand.vmem [shape: bf16[48,48], index: 7, kind: input, shape index: {}]
  %s8 = inlined_call_operand.vmem [shape: f32[1,48], index: 8, kind: input, shape index: {}]
  %s9 = inlined_call_operand.vmem [shape: bf16[9,8], index: 9, kind: input, shape index: {}]
  %s10 = inlined_call_operand.vmem [shape: bf16[48,8], index: 10, kind: input, shape index: {}]
  %s11 = inlined_call_operand.vmem [shape: f32[1,8], index: 11, kind: input, shape index: {}]
  %s12 = inlined_call_operand.vmem [shape: bf16[6,8], index: 12, kind: input, shape index: {}]
  %s13 = inlined_call_operand.vmem [shape: f32[6,1], index: 13, kind: input, shape index: {}]
  %s14 = inlined_call_operand.hbm [shape: f32[6,128], index: 14, kind: output, shape index: {}]
  %s15 = sld [smem:[#allocation0]]
  $region66: #{tpu_custom_call.1} parent=0
    _
  %s17 = ssub.s32 1, %s15
  %s18 = scalar_select 0, %s17, %s15
  $region1: #{tpu_custom_call.1} parent=0
    #allocation2 [shape = 'u8[4096]{0}', space=vmem, size = 0x1000, scoped, tag = 'output window, operand 0, single buffered']
    #allocation3 [shape = 's32[1]{0}', space=sflag, size = 0x4, scoped, tag = 'scoped memory for tpu_custom_call.1']
    %19 = vsyncpa [#allocation3], 0
    // Predicated region
    $region2: #{tpu_custom_call.1} parent=1 // pred_check
      _
    $region3: #{tpu_custom_call.1} parent=1 // pred_check_branch
      %21 = sbr.rel (0) target = $region5
    $region4: #{tpu_custom_call.1} parent=1 // pred_region
      _
    $region5: #{tpu_custom_call.1} parent=1 // pred_fallthru
      _
    // Predicated region
    $region6: #{tpu_custom_call.1} parent=1 // pred_check
      _
    $region7: #{tpu_custom_call.1} parent=1 // pred_check_branch
      %23 = sbr.rel (0) target = $region9
    $region8: #{tpu_custom_call.1} parent=1 // pred_region
      _
    $region9: #{tpu_custom_call.1} parent=1 // pred_fallthru
      _
    // Predicated region
    $region10: #{tpu_custom_call.1} parent=1 // pred_check
      _
    $region11: #{tpu_custom_call.1} parent=1 // pred_check_branch
      %25 = sbr.rel (0) target = $region13
    $region12: #{tpu_custom_call.1} parent=1 // pred_region
      _
    $region13: #{tpu_custom_call.1} parent=1 // pred_fallthru
      _
    // Predicated region
    $region14: #{tpu_custom_call.1} parent=1 // pred_check
      _
    $region15: #{tpu_custom_call.1} parent=1 // pred_check_branch
      %27 = sbr.rel (0) target = $region17
    $region16: #{tpu_custom_call.1} parent=1 // pred_region
      _
    $region17: #{tpu_custom_call.1} parent=1 // pred_fallthru
      _
    // Predicated region
    $region18: #{tpu_custom_call.1} parent=1 // pred_check
      _
    $region19: #{tpu_custom_call.1} parent=1 // pred_check_branch
      %29 = sbr.rel (0) target = $region21
    $region20: #{tpu_custom_call.1} parent=1 // pred_region
      _
    $region21: #{tpu_custom_call.1} parent=1 // pred_fallthru
      _
    // Predicated region
    $region22: #{tpu_custom_call.1} parent=1 // pred_check
      _
    $region23: #{tpu_custom_call.1} parent=1 // pred_check_branch
      %31 = sbr.rel (0) target = $region25
    $region24: #{tpu_custom_call.1} parent=1 // pred_region
      _
    $region25: #{tpu_custom_call.1} parent=1 // pred_fallthru
      _
    // Predicated region
    $region26: #{tpu_custom_call.1} parent=1 // pred_check
      _
    $region27: #{tpu_custom_call.1} parent=1 // pred_check_branch
      %33 = sbr.rel (0) target = $region29
    $region28: #{tpu_custom_call.1} parent=1 // pred_region
      _
    $region29: #{tpu_custom_call.1} parent=1 // pred_fallthru
      _
    // Predicated region
    $region30: #{tpu_custom_call.1} parent=1 // pred_check
      _
    $region31: #{tpu_custom_call.1} parent=1 // pred_check_branch
      %35 = sbr.rel (0) target = $region33
    $region32: #{tpu_custom_call.1} parent=1 // pred_region
      _
    $region33: #{tpu_custom_call.1} parent=1 // pred_fallthru
      _
    // Predicated region
    $region34: #{tpu_custom_call.1} parent=1 // pred_check
      _
    $region35: #{tpu_custom_call.1} parent=1 // pred_check_branch
      %37 = sbr.rel (0) target = $region37
    $region36: #{tpu_custom_call.1} parent=1 // pred_region
      _
    $region37: #{tpu_custom_call.1} parent=1 // pred_fallthru
      _
    // Predicated region
    $region38: #{tpu_custom_call.1} parent=1 // pred_check
      _
    $region39: #{tpu_custom_call.1} parent=1 // pred_check_branch
      %39 = sbr.rel (0) target = $region41
    $region40: #{tpu_custom_call.1} parent=1 // pred_region
      _
    $region41: #{tpu_custom_call.1} parent=1 // pred_fallthru
      _
    // Predicated region
    $region42: #{tpu_custom_call.1} parent=1 // pred_check
      _
    $region43: #{tpu_custom_call.1} parent=1 // pred_check_branch
      %41 = sbr.rel (0) target = $region45
    $region44: #{tpu_custom_call.1} parent=1 // pred_region
      _
    $region45: #{tpu_custom_call.1} parent=1 // pred_fallthru
      _
    // Predicated region
    $region46: #{tpu_custom_call.1} parent=1 // pred_check
      _
    $region47: #{tpu_custom_call.1} parent=1 // pred_check_branch
      %43 = sbr.rel (0) target = $region49
    $region48: #{tpu_custom_call.1} parent=1 // pred_region
      _
    $region49: #{tpu_custom_call.1} parent=1 // pred_fallthru
      _
    // Predicated region
    $region50: #{tpu_custom_call.1} parent=1 // pred_check
      _
    $region51: #{tpu_custom_call.1} parent=1 // pred_check_branch
      %45 = sbr.rel (0) target = $region53
    $region52: #{tpu_custom_call.1} parent=1 // pred_region
      _
    $region53: #{tpu_custom_call.1} parent=1 // pred_fallthru
      _
    // Predicated region
    $region54: #{tpu_custom_call.1} parent=1 // pred_check
      _
    $region55: #{tpu_custom_call.1} parent=1 // pred_check_branch
      %47 = sbr.rel (0) target = $region57
    $region56: #{tpu_custom_call.1} parent=1 // pred_region
      _
    $region57: #{tpu_custom_call.1} parent=1 // pred_fallthru
      _
    %v49 = vld [vmem:[%s0] sm:$0xff]
    %v50 = vld [vmem:[%s0 + $0x8] sm:$0xff]
    %v51 = vld [vmem:[%s0 + $0x10] sm:$0xff]
    %v52 = vld [vmem:[%s0 + $0x18] sm:$0xff]
    %v53 = vld [vmem:[%s0 + $0x20] sm:$0xff]
    %v54 = vld [vmem:[%s0 + $0x28] sm:$0xff]
    %v55 = vld [vmem:[%s0 + $0x30] sm:$0xff]
    %v56 = vld [vmem:[%s0 + $0x38] sm:$0xff]
    %v57 = vld [vmem:[%s0 + $0x40] sm:$0xff]
    %v58 = vld [vmem:[%s0 + $0x48] sm:$0xff]
    %v59 = vld [vmem:[%s0 + $0x50] sm:$0xff]
    %v60 = vld [vmem:[%s0 + $0x58] sm:$0xff]
    %v61 = vld [vmem:[%s0 + $0x60] sm:$0xff]
    %v62 = vld [vmem:[%s0 + $0x68] sm:$0xff]
    %v63 = vld [vmem:[%s0 + $0x70] sm:$0xff]
    %v64 = vld [vmem:[%s0 + $0x78] sm:$0xff]
    %v65 = vld [vmem:[%s1] sm:$0x3f]
    %v66 = vld [vmem:[%s2] sm:$0x1]
    %v68 = vperm.slane %v66, 0
    %vm70 = vcmask 48128
    %v72 = vsel %vm70, %v49, 0
    %v75 = vsel %vm70, %v50, 0
    %v78 = vsel %vm70, %v51, 0
    %v81 = vsel %vm70, %v52, 0
    %v84 = vsel %vm70, %v53, 0
    %v87 = vsel %vm70, %v54, 0
    %v90 = vsel %vm70, %v55, 0
    %v93 = vsel %vm70, %v56, 0
    %v96 = vsel %vm70, %v57, 0
    %v99 = vsel %vm70, %v58, 0
    %v102 = vsel %vm70, %v59, 0
    %v105 = vsel %vm70, %v60, 0
    %v108 = vsel %vm70, %v61, 0
    %v111 = vsel %vm70, %v62, 0
    %v114 = vsel %vm70, %v63, 0
    %v117 = vsel %vm70, %v64, 0
    %vm119 = vcmask 1045504
    %v121 = vsel %vm119, %v65, 0
    %123 = vmatpush.msra.mxu0 0.0
    %124 = vmatpush.msra.mxu0 0.0
    %125 = vmatpush.msra.mxu0 0.0
    %126 = vmatpush.msra.mxu0 0.0
    %127 = vmatpush.msra.mxu0 0.0
    %128 = vmatpush.msra.mxu0 0.0
    %129 = vmatpush.msra.mxu0 0.0
    %130 = vmatpush.msra.mxu0 0.0
    %131 = vmatpush.msra.mxu0 0.0
    %132 = vmatpush.msra.mxu0 0.0
    %133 = vmatpush.msra.mxu0 0.0
    %134 = vmatpush.msra.mxu0 0.0
    %135 = vmatpush.msra.mxu0 0.0
    %136 = vmatpush.msra.mxu0 0.0
    %137 = vmatpush.msra.mxu0 0.0
    %138 = vmatpush.msra.mxu0 %v121
    %139 = vmatmul.f32.gmra.mxu0 %v72
    %v140 = vpop.f32.mrf.mxu0
    %v141 = vadd.f32 %v68, %v140
    %142 = vmatmul.f32.gmra.mxu0 %v75
    %v143 = vpop.f32.mrf.mxu0
    %v144 = vadd.f32 %v68, %v143
    %145 = vmatmul.f32.gmra.mxu0 %v78
    %v146 = vpop.f32.mrf.mxu0
    %v147 = vadd.f32 %v68, %v146
    %148 = vmatmul.f32.gmra.mxu0 %v81
    %v149 = vpop.f32.mrf.mxu0
    %v150 = vadd.f32 %v68, %v149
    %151 = vmatmul.f32.gmra.mxu0 %v84
    %v152 = vpop.f32.mrf.mxu0
    %v153 = vadd.f32 %v68, %v152
    %154 = vmatmul.f32.gmra.mxu0 %v87
    %v155 = vpop.f32.mrf.mxu0
    %v156 = vadd.f32 %v68, %v155
    %157 = vmatmul.f32.gmra.mxu0 %v90
    %v158 = vpop.f32.mrf.mxu0
    %v159 = vadd.f32 %v68, %v158
    %160 = vmatmul.f32.gmra.mxu0 %v93
    %v161 = vpop.f32.mrf.mxu0
    %v162 = vadd.f32 %v68, %v161
    %163 = vmatmul.f32.gmra.mxu0 %v96
    %v164 = vpop.f32.mrf.mxu0
    %v165 = vadd.f32 %v68, %v164
    %166 = vmatmul.f32.gmra.mxu0 %v99
    %v167 = vpop.f32.mrf.mxu0
    %v168 = vadd.f32 %v68, %v167
    %169 = vmatmul.f32.gmra.mxu0 %v102
    %v170 = vpop.f32.mrf.mxu0
    %v171 = vadd.f32 %v68, %v170
    %172 = vmatmul.f32.gmra.mxu0 %v105
    %v173 = vpop.f32.mrf.mxu0
    %v174 = vadd.f32 %v68, %v173
    %175 = vmatmul.f32.gmra.mxu0 %v108
    %v176 = vpop.f32.mrf.mxu0
    %v177 = vadd.f32 %v68, %v176
    %178 = vmatmul.f32.gmra.mxu0 %v111
    %v179 = vpop.f32.mrf.mxu0
    %v180 = vadd.f32 %v68, %v179
    %181 = vmatmul.f32.gmra.mxu0 %v114
    %v182 = vpop.f32.mrf.mxu0
    %v183 = vadd.f32 %v68, %v182
    %184 = vmatmul.f32.gmra.mxu0 %v117
    %v185 = vpop.f32.mrf.mxu0
    %v186 = vadd.f32 %v68, %v185
    %187 = vdwg.mxu0
    %v188 = vand.u32 2147483647, %v141
    %vm189 = vcmp.le.f32.partialorder %v188, 0.7853982
    %vm190 = vcmp.lt.s32.totalorder %v141, 0
    %v191 = vand.u32 %v141, 2139095040
    %v192 = vshrl.u32 %v191, 23
    %v193 = vsub.s32 %v192, 127
    %v194 = vand.u32 2147483647, %v141
    %v195 = vand.u32 %v194, 8388607
    %v196 = vor.u32 %v195, 8388608
    %v197 = vsub.s32 0, %v196
    %v198 = vadd.s32 %v193, 1
    %vm199 = vcmp.gt.s32.totalorder %v198, 0
    %v200 = vsel %vm199, %v198, 0
    %v201 = vshrl.u32 %v200, 5
    %v202 = vand.u32 %v200, 31
    %v203 = vsub.s32 32, %v202
    %v204 = vshrl.u32 683565275, %v203
    %v205 = vshll.u32 683565275, %v202
    %v206 = vshrl.u32 2475754826, %v203
    %v207 = vor.u32 %v205, %v206
    %v208 = vshll.u32 2475754826, %v202
    %v209 = vshrl.u32 2131351028, %v203
    %v210 = vor.u32 %v208, %v209
    %v211 = vshll.u32 2131351028, %v202
    %v212 = vshrl.u32 2102212464, %v203
    %v213 = vor.u32 %v211, %v212
    %v214 = vshll.u32 2102212464, %v202
    %v215 = vshrl.u32 920167782, %v203
    %v216 = vor.u32 %v214, %v215
    %v217 = vshll.u32 920167782, %v202
    %v218 = vshrl.u32 1326507024, %v203
    %v219 = vor.u32 %v217, %v218
    %vm220 = vcmp.lt.s32.totalorder %v201, 1
    %vm221 = vcmp.lt.s32.totalorder %v201, 2
    %vm222 = vcmp.lt.s32.totalorder %v201, 3
    %vm223 = vcmp.lt.s32.totalorder %v201, 4
    %v224 = vsel %vm220, %v204, %v207
    %v225 = vsel %vm223, %v213, 2102212464
    %v226 = vsel %vm222, %v210, %v225
    %v227 = vsel %vm221, %v224, %v226
    %v228 = vsel %vm220, %v207, %v210
    %v229 = vsel %vm223, %v216, 920167782
    %v230 = vsel %vm222, %v213, %v229
    %v231 = vsel %vm221, %v228, %v230
    %v232 = vsel %vm220, %v210, %v213
    %v233 = vsel %vm223, %v219, 1326507024
    %v234 = vsel %vm222, %v216, %v233
    %v235 = vsel %vm221, %v232, %v234
    %v236 = vshll.u32 %v196, 8
    %v237 = vand.u32 %v236, 65535
    %v238 = vshrl.u32 %v236, 16
    %v239 = vand.u32 %v235, 65535
    %v240 = vshrl.u32 %v235, 16
    %v241 = vmul.u32 %v237, %v239
    %v242 = vmul.u32 %v237, %v240
    %v243 = vmul.u32 %v238, %v239
    %v244 = vmul.u32 %v238, %v240
    %v245 = vshll.u32 %v242, 16
    %v246 = vshrl.u32 %v242, 16
    %v247 = vshll.u32 %v243, 16
    %v248 = vshrl.u32 %v243, 16
    %vm249 = vc.u32 %v241, %v245
    %v250 = vsel %vm249, 1, 0
    %v251 = vadd.s32 %v241, %v245
    %v252 = vadd.s32 %v244, %v250
    %vm253 = vc.u32 %v251, %v247
    %v254 = vsel %vm253, 1, 0
    %v255 = vadd.s32 %v251, %v247
    %v256 = vadd.s32 %v252, %v254
    %v257 = vadd.s32 %v256, %v246
    %v258 = vadd.s32 %v257, %v248
    %v259 = vand.u32 %v236, 65535
    %v260 = vshrl.u32 %v236, 16
    %v261 = vand.u32 %v231, 65535
    %v262 = vshrl.u32 %v231, 16
    %v263 = vmul.u32 %v259, %v261
    %v264 = vmul.u32 %v259, %v262
    %v265 = vmul.u32 %v260, %v261
    %v266 = vmul.u32 %v260, %v262
    %v267 = vshll.u32 %v264, 16
    %v268 = vshrl.u32 %v264, 16
    %v269 = vshll.u32 %v265, 16
    %v270 = vshrl.u32 %v265, 16
    %vm271 = vc.u32 %v263, %v267
    %v272 = vsel %vm271, 1, 0
    %v273 = vadd.s32 %v263, %v267
    %v274 = vadd.s32 %v266, %v272
    %vm275 = vc.u32 %v273, %v269
    %v276 = vsel %vm275, 1, 0
    %v277 = vadd.s32 %v273, %v269
    %v278 = vadd.s32 %v274, %v276
    %v279 = vadd.s32 %v278, %v268
    %v280 = vadd.s32 %v279, %v270
    %v281 = vmul.u32 %v236, %v227
    %v282 = vadd.s32 %v258, %v277
    %vm283 = vc.u32 %v258, %v277
    %v284 = vadd.s32 %v280, 1
    %v285 = vsel %vm283, %v284, %v280
    %v286 = vadd.s32 %v281, %v285
    %v287 = vadd.s32 %v286, 536870912
    %v288 = vshrl.u32 %v287, 30
    %v289 = vshll.u32 %v288, 30
    %v290 = vsub.s32 %v286, %v289
    %vm291 = vcmp.lt.s32.totalorder %v290, 0
    %v292 = vsub.s32 0, %v290
    %v293 = vsel %vm291, %v292, %v290
    %v294 = vclz %v293
    %v295 = vsub.s32 %v294, 2
    %vm296 = vcmp.gt.s32.totalorder 0, %v295
    %v297 = vsel %vm296, 0, %v295
    %v298 = vsub.s32 32, %v297
    %v299 = vshll.u32 %v290, %v297
    %v300 = vshrl.u32 %v282, %v298
    %v301 = vor.u32 %v299, %v300
    %v302 = vsub.s32 4294967266, %v297
    %v303 = vadd.s32 %v302, 127
    %v304 = vshll.u32 %v303, 23
    %v305 = vor.u32 4788187, %v304
    %v306 = vand.u32 2147483647, %v305
    %v308 = vcvt.s32.f32 %v301
    %v309 = vmul.f32 %v308, %v306
    %v310 = vxor.u32 %v309, 2147483648
    %v311 = vsel %vm190, %v310, %v309
    %v312 = vsub.s32 4, %v288
    %v313 = vsel %vm190, %v312, %v288
    %v314 = vsel %vm189, %v141, %v311
    %v315 = vsel %vm189, 0, %v313
    %v316 = vmul.f32 %v314, %v314
    %v317 = vmul.f32 %v316, -0.001358992
    %v318 = vadd.f32 %v317, 0.041655596
    %v319 = vmul.f32 %v316, %v318
    %v320 = vadd.f32 %v319, -0.4999988
    %v321 = vmul.f32 %v316, %v320
    %v322 = vadd.f32 1.0, %v321
    %v323 = vmul.f32 %v314, %v314
    %v324 = vmul.f32 %v323, -0.00019511016
    %v325 = vadd.f32 %v324, 0.008332121
    %v326 = vmul.f32 %v323, %v325
    %v327 = vadd.f32 %v326, -0.16666654
    %v328 = vmul.f32 %v323, %v327
    %v329 = vadd.f32 %v328, 1.0
    %v330 = vmul.f32 %v329, %v314
    %vm331 = vweird.f32 %v141
    %v332 = vadd.s32 %v315, 3
    %v333 = vand.u32 %v332, 3
    %vm334 = vcmp.lt.s32.totalorder %v333, 2
    %vm335 = vcmp.eq.s32.totalorder %v333, 0
    %v336 = vxor.u32 %v330, 2147483648
    %v337 = vsel %vm335, %v322, %v336
    %vm338 = vcmp.eq.s32.totalorder %v333, 2
    %v339 = vxor.u32 %v322, 2147483648
    %v340 = vsel %vm338, %v339, %v330
    %v341 = vsel %vm334, %v337, %v340
    %v342 = vsel %vm331, nan, %v341
    %v343 = vand.u32 2147483647, %v144
    %vm344 = vcmp.le.f32.partialorder %v343, 0.7853982
    %vm345 = vcmp.lt.s32.totalorder %v144, 0
    %v346 = vand.u32 %v144, 2139095040
    %v347 = vshrl.u32 %v346, 23
    %v348 = vsub.s32 %v347, 127
    %v349 = vand.u32 2147483647, %v144
    %v350 = vand.u32 %v349, 8388607
    %v351 = vor.u32 %v350, 8388608
    %v352 = vsub.s32 0, %v351
    %v353 = vadd.s32 %v348, 1
    %vm354 = vcmp.gt.s32.totalorder %v353, 0
    %v355 = vsel %vm354, %v353, 0
    %v356 = vshrl.u32 %v355, 5
    %v357 = vand.u32 %v355, 31
    %v358 = vsub.s32 32, %v357
    %v359 = vshrl.u32 683565275, %v358
    %v360 = vshll.u32 683565275, %v357
    %v361 = vshrl.u32 2475754826, %v358
    %v362 = vor.u32 %v360, %v361
    %v363 = vshll.u32 2475754826, %v357
    %v364 = vshrl.u32 2131351028, %v358
    %v365 = vor.u32 %v363, %v364
    %v366 = vshll.u32 2131351028, %v357
    %v367 = vshrl.u32 2102212464, %v358
    %v368 = vor.u32 %v366, %v367
    %v369 = vshll.u32 2102212464, %v357
    %v370 = vshrl.u32 920167782, %v358
    %v371 = vor.u32 %v369, %v370
    %v372 = vshll.u32 920167782, %v357
    %v373 = vshrl.u32 1326507024, %v358
    %v374 = vor.u32 %v372, %v373
    %vm375 = vcmp.lt.s32.totalorder %v356, 1
    %vm376 = vcmp.lt.s32.totalorder %v356, 2
    %vm377 = vcmp.lt.s32.totalorder %v356, 3
    %vm378 = vcmp.lt.s32.totalorder %v356, 4
    %v379 = vsel %vm375, %v359, %v362
    %v380 = vsel %vm378, %v368, 2102212464
    %v381 = vsel %vm377, %v365, %v380
    %v382 = vsel %vm376, %v379, %v381
    %v383 = vsel %vm375, %v362, %v365
    %v384 = vsel %vm378, %v371, 920167782
    %v385 = vsel %vm377, %v368, %v384
    %v386 = vsel %vm376, %v383, %v385
    %v387 = vsel %vm375, %v365, %v368
    %v388 = vsel %vm378, %v374, 1326507024
    %v389 = vsel %vm377, %v371, %v388
    %v390 = vsel %vm376, %v387, %v389
    %v391 = vshll.u32 %v351, 8
    %v392 = vand.u32 %v391, 65535
    %v393 = vshrl.u32 %v391, 16
    %v394 = vand.u32 %v390, 65535
    %v395 = vshrl.u32 %v390, 16
    %v396 = vmul.u32 %v392, %v394
    %v397 = vmul.u32 %v392, %v395
    %v398 = vmul.u32 %v393, %v394
    %v399 = vmul.u32 %v393, %v395
    %v400 = vshll.u32 %v397, 16
    %v401 = vshrl.u32 %v397, 16
    %v402 = vshll.u32 %v398, 16
    %v403 = vshrl.u32 %v398, 16
    %vm404 = vc.u32 %v396, %v400
    %v405 = vsel %vm404, 1, 0
    %v406 = vadd.s32 %v396, %v400
    %v407 = vadd.s32 %v399, %v405
    %vm408 = vc.u32 %v406, %v402
    %v409 = vsel %vm408, 1, 0
    %v410 = vadd.s32 %v406, %v402
    %v411 = vadd.s32 %v407, %v409
    %v412 = vadd.s32 %v411, %v401
    %v413 = vadd.s32 %v412, %v403
    %v414 = vand.u32 %v391, 65535
    %v415 = vshrl.u32 %v391, 16
    %v416 = vand.u32 %v386, 65535
    %v417 = vshrl.u32 %v386, 16
    %v418 = vmul.u32 %v414, %v416
    %v419 = vmul.u32 %v414, %v417
    %v420 = vmul.u32 %v415, %v416
    %v421 = vmul.u32 %v415, %v417
    %v422 = vshll.u32 %v419, 16
    %v423 = vshrl.u32 %v419, 16
    %v424 = vshll.u32 %v420, 16
    %v425 = vshrl.u32 %v420, 16
    %vm426 = vc.u32 %v418, %v422
    %v427 = vsel %vm426, 1, 0
    %v428 = vadd.s32 %v418, %v422
    %v429 = vadd.s32 %v421, %v427
    %vm430 = vc.u32 %v428, %v424
    %v431 = vsel %vm430, 1, 0
    %v432 = vadd.s32 %v428, %v424
    %v433 = vadd.s32 %v429, %v431
    %v434 = vadd.s32 %v433, %v423
    %v435 = vadd.s32 %v434, %v425
    %v436 = vmul.u32 %v391, %v382
    %v437 = vadd.s32 %v413, %v432
    %vm438 = vc.u32 %v413, %v432
    %v439 = vadd.s32 %v435, 1
    %v440 = vsel %vm438, %v439, %v435
    %v441 = vadd.s32 %v436, %v440
    %v442 = vadd.s32 %v441, 536870912
    %v443 = vshrl.u32 %v442, 30
    %v444 = vshll.u32 %v443, 30
    %v445 = vsub.s32 %v441, %v444
    %vm446 = vcmp.lt.s32.totalorder %v445, 0
    %v447 = vsub.s32 0, %v445
    %v448 = vsel %vm446, %v447, %v445
    %v449 = vclz %v448
    %v450 = vsub.s32 %v449, 2
    %vm451 = vcmp.gt.s32.totalorder 0, %v450
    %v452 = vsel %vm451, 0, %v450
    %v453 = vsub.s32 32, %v452
    %v454 = vshll.u32 %v445, %v452
    %v455 = vshrl.u32 %v437, %v453
    %v456 = vor.u32 %v454, %v455
    %v457 = vsub.s32 4294967266, %v452
    %v458 = vadd.s32 %v457, 127
    %v459 = vshll.u32 %v458, 23
    %v460 = vor.u32 4788187, %v459
    %v461 = vand.u32 2147483647, %v460
    %v463 = vcvt.s32.f32 %v456
    %v464 = vmul.f32 %v463, %v461
    %v465 = vxor.u32 %v464, 2147483648
    %v466 = vsel %vm345, %v465, %v464
    %v467 = vsub.s32 4, %v443
    %v468 = vsel %vm345, %v467, %v443
    %v469 = vsel %vm344, %v144, %v466
    %v470 = vsel %vm344, 0, %v468
    %v471 = vmul.f32 %v469, %v469
    %v472 = vmul.f32 %v471, -0.001358992
    %v473 = vadd.f32 %v472, 0.041655596
    %v474 = vmul.f32 %v471, %v473
    %v475 = vadd.f32 %v474, -0.4999988
    %v476 = vmul.f32 %v471, %v475
    %v477 = vadd.f32 1.0, %v476
    %v478 = vmul.f32 %v469, %v469
    %v479 = vmul.f32 %v478, -0.00019511016
    %v480 = vadd.f32 %v479, 0.008332121
    %v481 = vmul.f32 %v478, %v480
    %v482 = vadd.f32 %v481, -0.16666654
    %v483 = vmul.f32 %v478, %v482
    %v484 = vadd.f32 %v483, 1.0
    %v485 = vmul.f32 %v484, %v469
    %vm486 = vweird.f32 %v144
    %v487 = vadd.s32 %v470, 3
    %v488 = vand.u32 %v487, 3
    %vm489 = vcmp.lt.s32.totalorder %v488, 2
    %vm490 = vcmp.eq.s32.totalorder %v488, 0
    %v491 = vxor.u32 %v485, 2147483648
    %v492 = vsel %vm490, %v477, %v491
    %vm493 = vcmp.eq.s32.totalorder %v488, 2
    %v494 = vxor.u32 %v477, 2147483648
    %v495 = vsel %vm493, %v494, %v485
    %v496 = vsel %vm489, %v492, %v495
    %v497 = vsel %vm486, nan, %v496
    %v498 = vand.u32 2147483647, %v147
    %vm499 = vcmp.le.f32.partialorder %v498, 0.7853982
    %vm500 = vcmp.lt.s32.totalorder %v147, 0
    %v501 = vand.u32 %v147, 2139095040
    %v502 = vshrl.u32 %v501, 23
    %v503 = vsub.s32 %v502, 127
    %v504 = vand.u32 2147483647, %v147
    %v505 = vand.u32 %v504, 8388607
    %v506 = vor.u32 %v505, 8388608
    %v507 = vsub.s32 0, %v506
    %v508 = vadd.s32 %v503, 1
    %vm509 = vcmp.gt.s32.totalorder %v508, 0
    %v510 = vsel %vm509, %v508, 0
    %v511 = vshrl.u32 %v510, 5
    %v512 = vand.u32 %v510, 31
    %v513 = vsub.s32 32, %v512
    %v514 = vshrl.u32 683565275, %v513
    %v515 = vshll.u32 683565275, %v512
    %v516 = vshrl.u32 2475754826, %v513
    %v517 = vor.u32 %v515, %v516
    %v518 = vshll.u32 2475754826, %v512
    %v519 = vshrl.u32 2131351028, %v513
    %v520 = vor.u32 %v518, %v519
    %v521 = vshll.u32 2131351028, %v512
    %v522 = vshrl.u32 2102212464, %v513
    %v523 = vor.u32 %v521, %v522
    %v524 = vshll.u32 2102212464, %v512
    %v525 = vshrl.u32 920167782, %v513
    %v526 = vor.u32 %v524, %v525
    %v527 = vshll.u32 920167782, %v512
    %v528 = vshrl.u32 1326507024, %v513
    %v529 = vor.u32 %v527, %v528
    %vm530 = vcmp.lt.s32.totalorder %v511, 1
    %vm531 = vcmp.lt.s32.totalorder %v511, 2
    %vm532 = vcmp.lt.s32.totalorder %v511, 3
    %vm533 = vcmp.lt.s32.totalorder %v511, 4
    %v534 = vsel %vm530, %v514, %v517
    %v535 = vsel %vm533, %v523, 2102212464
    %v536 = vsel %vm532, %v520, %v535
    %v537 = vsel %vm531, %v534, %v536
    %v538 = vsel %vm530, %v517, %v520
    %v539 = vsel %vm533, %v526, 920167782
    %v540 = vsel %vm532, %v523, %v539
    %v541 = vsel %vm531, %v538, %v540
    %v542 = vsel %vm530, %v520, %v523
    %v543 = vsel %vm533, %v529, 1326507024
    %v544 = vsel %vm532, %v526, %v543
    %v545 = vsel %vm531, %v542, %v544
    %v546 = vshll.u32 %v506, 8
    %v547 = vand.u32 %v546, 65535
    %v548 = vshrl.u32 %v546, 16
    %v549 = vand.u32 %v545, 65535
    %v550 = vshrl.u32 %v545, 16
    %v551 = vmul.u32 %v547, %v549
    %v552 = vmul.u32 %v547, %v550
    %v553 = vmul.u32 %v548, %v549
    %v554 = vmul.u32 %v548, %v550
    %v555 = vshll.u32 %v552, 16
    %v556 = vshrl.u32 %v552, 16
    %v557 = vshll.u32 %v553, 16
    %v558 = vshrl.u32 %v553, 16
    %vm559 = vc.u32 %v551, %v555
    %v560 = vsel %vm559, 1, 0
    %v561 = vadd.s32 %v551, %v555
    %v562 = vadd.s32 %v554, %v560
    %vm563 = vc.u32 %v561, %v557
    %v564 = vsel %vm563, 1, 0
    %v565 = vadd.s32 %v561, %v557
    %v566 = vadd.s32 %v562, %v564
    %v567 = vadd.s32 %v566, %v556
    %v568 = vadd.s32 %v567, %v558
    %v569 = vand.u32 %v546, 65535
    %v570 = vshrl.u32 %v546, 16
    %v571 = vand.u32 %v541, 65535
    %v572 = vshrl.u32 %v541, 16
    %v573 = vmul.u32 %v569, %v571
    %v574 = vmul.u32 %v569, %v572
    %v575 = vmul.u32 %v570, %v571
    %v576 = vmul.u32 %v570, %v572
    %v577 = vshll.u32 %v574, 16
    %v578 = vshrl.u32 %v574, 16
    %v579 = vshll.u32 %v575, 16
    %v580 = vshrl.u32 %v575, 16
    %vm581 = vc.u32 %v573, %v577
    %v582 = vsel %vm581, 1, 0
    %v583 = vadd.s32 %v573, %v577
    %v584 = vadd.s32 %v576, %v582
    %vm585 = vc.u32 %v583, %v579
    %v586 = vsel %vm585, 1, 0
    %v587 = vadd.s32 %v583, %v579
    %v588 = vadd.s32 %v584, %v586
    %v589 = vadd.s32 %v588, %v578
    %v590 = vadd.s32 %v589, %v580
    %v591 = vmul.u32 %v546, %v537
    %v592 = vadd.s32 %v568, %v587
    %vm593 = vc.u32 %v568, %v587
    %v594 = vadd.s32 %v590, 1
    %v595 = vsel %vm593, %v594, %v590
    %v596 = vadd.s32 %v591, %v595
    %v597 = vadd.s32 %v596, 536870912
    %v598 = vshrl.u32 %v597, 30
    %v599 = vshll.u32 %v598, 30
    %v600 = vsub.s32 %v596, %v599
    %vm601 = vcmp.lt.s32.totalorder %v600, 0
    %v602 = vsub.s32 0, %v600
    %v603 = vsel %vm601, %v602, %v600
    %v604 = vclz %v603
    %v605 = vsub.s32 %v604, 2
    %vm606 = vcmp.gt.s32.totalorder 0, %v605
    %v607 = vsel %vm606, 0, %v605
    %v608 = vsub.s32 32, %v607
    %v609 = vshll.u32 %v600, %v607
    %v610 = vshrl.u32 %v592, %v608
    %v611 = vor.u32 %v609, %v610
    %v612 = vsub.s32 4294967266, %v607
    %v613 = vadd.s32 %v612, 127
    %v614 = vshll.u32 %v613, 23
    %v615 = vor.u32 4788187, %v614
    %v616 = vand.u32 2147483647, %v615
    %v618 = vcvt.s32.f32 %v611
    %v619 = vmul.f32 %v618, %v616
    %v620 = vxor.u32 %v619, 2147483648
    %v621 = vsel %vm500, %v620, %v619
    %v622 = vsub.s32 4, %v598
    %v623 = vsel %vm500, %v622, %v598
    %v624 = vsel %vm499, %v147, %v621
    %v625 = vsel %vm499, 0, %v623
    %v626 = vmul.f32 %v624, %v624
    %v627 = vmul.f32 %v626, -0.001358992
    %v628 = vadd.f32 %v627, 0.041655596
    %v629 = vmul.f32 %v626, %v628
    %v630 = vadd.f32 %v629, -0.4999988
    %v631 = vmul.f32 %v626, %v630
    %v632 = vadd.f32 1.0, %v631
    %v633 = vmul.f32 %v624, %v624
    %v634 = vmul.f32 %v633, -0.00019511016
    %v635 = vadd.f32 %v634, 0.008332121
    %v636 = vmul.f32 %v633, %v635
    %v637 = vadd.f32 %v636, -0.16666654
    %v638 = vmul.f32 %v633, %v637
    %v639 = vadd.f32 %v638, 1.0
    %v640 = vmul.f32 %v639, %v624
    %vm641 = vweird.f32 %v147
    %v642 = vadd.s32 %v625, 3
    %v643 = vand.u32 %v642, 3
    %vm644 = vcmp.lt.s32.totalorder %v643, 2
    %vm645 = vcmp.eq.s32.totalorder %v643, 0
    %v646 = vxor.u32 %v640, 2147483648
    %v647 = vsel %vm645, %v632, %v646
    %vm648 = vcmp.eq.s32.totalorder %v643, 2
    %v649 = vxor.u32 %v632, 2147483648
    %v650 = vsel %vm648, %v649, %v640
    %v651 = vsel %vm644, %v647, %v650
    %v652 = vsel %vm641, nan, %v651
    %v653 = vand.u32 2147483647, %v150
    %vm654 = vcmp.le.f32.partialorder %v653, 0.7853982
    %vm655 = vcmp.lt.s32.totalorder %v150, 0
    %v656 = vand.u32 %v150, 2139095040
    %v657 = vshrl.u32 %v656, 23
    %v658 = vsub.s32 %v657, 127
    %v659 = vand.u32 2147483647, %v150
    %v660 = vand.u32 %v659, 8388607
    %v661 = vor.u32 %v660, 8388608
    %v662 = vsub.s32 0, %v661
    %v663 = vadd.s32 %v658, 1
    %vm664 = vcmp.gt.s32.totalorder %v663, 0
    %v665 = vsel %vm664, %v663, 0
    %v666 = vshrl.u32 %v665, 5
    %v667 = vand.u32 %v665, 31
    %v668 = vsub.s32 32, %v667
    %v669 = vshrl.u32 683565275, %v668
    %v670 = vshll.u32 683565275, %v667
    %v671 = vshrl.u32 2475754826, %v668
    %v672 = vor.u32 %v670, %v671
    %v673 = vshll.u32 2475754826, %v667
    %v674 = vshrl.u32 2131351028, %v668
    %v675 = vor.u32 %v673, %v674
    %v676 = vshll.u32 2131351028, %v667
    %v677 = vshrl.u32 2102212464, %v668
    %v678 = vor.u32 %v676, %v677
    %v679 = vshll.u32 2102212464, %v667
    %v680 = vshrl.u32 920167782, %v668
    %v681 = vor.u32 %v679, %v680
    %v682 = vshll.u32 920167782, %v667
    %v683 = vshrl.u32 1326507024, %v668
    %v684 = vor.u32 %v682, %v683
    %vm685 = vcmp.lt.s32.totalorder %v666, 1
    %vm686 = vcmp.lt.s32.totalorder %v666, 2
    %vm687 = vcmp.lt.s32.totalorder %v666, 3
    %vm688 = vcmp.lt.s32.totalorder %v666, 4
    %v689 = vsel %vm685, %v669, %v672
    %v690 = vsel %vm688, %v678, 2102212464
    %v691 = vsel %vm687, %v675, %v690
    %v692 = vsel %vm686, %v689, %v691
    %v693 = vsel %vm685, %v672, %v675
    %v694 = vsel %vm688, %v681, 920167782
    %v695 = vsel %vm687, %v678, %v694
    %v696 = vsel %vm686, %v693, %v695
    %v697 = vsel %vm685, %v675, %v678
    %v698 = vsel %vm688, %v684, 1326507024
    %v699 = vsel %vm687, %v681, %v698
    %v700 = vsel %vm686, %v697, %v699
    %v701 = vshll.u32 %v661, 8
    %v702 = vand.u32 %v701, 65535
    %v703 = vshrl.u32 %v701, 16
    %v704 = vand.u32 %v700, 65535
    %v705 = vshrl.u32 %v700, 16
    %v706 = vmul.u32 %v702, %v704
    %v707 = vmul.u32 %v702, %v705
    %v708 = vmul.u32 %v703, %v704
    %v709 = vmul.u32 %v703, %v705
    %v710 = vshll.u32 %v707, 16
    %v711 = vshrl.u32 %v707, 16
    %v712 = vshll.u32 %v708, 16
    %v713 = vshrl.u32 %v708, 16
    %vm714 = vc.u32 %v706, %v710
    %v715 = vsel %vm714, 1, 0
    %v716 = vadd.s32 %v706, %v710
    %v717 = vadd.s32 %v709, %v715
    %vm718 = vc.u32 %v716, %v712
    %v719 = vsel %vm718, 1, 0
    %v720 = vadd.s32 %v716, %v712
    %v721 = vadd.s32 %v717, %v719
    %v722 = vadd.s32 %v721, %v711
    %v723 = vadd.s32 %v722, %v713
    %v724 = vand.u32 %v701, 65535
    %v725 = vshrl.u32 %v701, 16
    %v726 = vand.u32 %v696, 65535
    %v727 = vshrl.u32 %v696, 16
    %v728 = vmul.u32 %v724, %v726
    %v729 = vmul.u32 %v724, %v727
    %v730 = vmul.u32 %v725, %v726
    %v731 = vmul.u32 %v725, %v727
    %v732 = vshll.u32 %v729, 16
    %v733 = vshrl.u32 %v729, 16
    %v734 = vshll.u32 %v730, 16
    %v735 = vshrl.u32 %v730, 16
    %vm736 = vc.u32 %v728, %v732
    %v737 = vsel %vm736, 1, 0
    %v738 = vadd.s32 %v728, %v732
    %v739 = vadd.s32 %v731, %v737
    %vm740 = vc.u32 %v738, %v734
    %v741 = vsel %vm740, 1, 0
    %v742 = vadd.s32 %v738, %v734
    %v743 = vadd.s32 %v739, %v741
    %v744 = vadd.s32 %v743, %v733
    %v745 = vadd.s32 %v744, %v735
    %v746 = vmul.u32 %v701, %v692
    %v747 = vadd.s32 %v723, %v742
    %vm748 = vc.u32 %v723, %v742
    %v749 = vadd.s32 %v745, 1
    %v750 = vsel %vm748, %v749, %v745
    %v751 = vadd.s32 %v746, %v750
    %v752 = vadd.s32 %v751, 536870912
    %v753 = vshrl.u32 %v752, 30
    %v754 = vshll.u32 %v753, 30
    %v755 = vsub.s32 %v751, %v754
    %vm756 = vcmp.lt.s32.totalorder %v755, 0
    %v757 = vsub.s32 0, %v755
    %v758 = vsel %vm756, %v757, %v755
    %v759 = vclz %v758
    %v760 = vsub.s32 %v759, 2
    %vm761 = vcmp.gt.s32.totalorder 0, %v760
    %v762 = vsel %vm761, 0, %v760
    %v763 = vsub.s32 32, %v762
    %v764 = vshll.u32 %v755, %v762
    %v765 = vshrl.u32 %v747, %v763
    %v766 = vor.u32 %v764, %v765
    %v767 = vsub.s32 4294967266, %v762
    %v768 = vadd.s32 %v767, 127
    %v769 = vshll.u32 %v768, 23
    %v770 = vor.u32 4788187, %v769
    %v771 = vand.u32 2147483647, %v770
    %v773 = vcvt.s32.f32 %v766
    %v774 = vmul.f32 %v773, %v771
    %v775 = vxor.u32 %v774, 2147483648
    %v776 = vsel %vm655, %v775, %v774
    %v777 = vsub.s32 4, %v753
    %v778 = vsel %vm655, %v777, %v753
    %v779 = vsel %vm654, %v150, %v776
    %v780 = vsel %vm654, 0, %v778
    %v781 = vmul.f32 %v779, %v779
    %v782 = vmul.f32 %v781, -0.001358992
    %v783 = vadd.f32 %v782, 0.041655596
    %v784 = vmul.f32 %v781, %v783
    %v785 = vadd.f32 %v784, -0.4999988
    %v786 = vmul.f32 %v781, %v785
    %v787 = vadd.f32 1.0, %v786
    %v788 = vmul.f32 %v779, %v779
    %v789 = vmul.f32 %v788, -0.00019511016
    %v790 = vadd.f32 %v789, 0.008332121
    %v791 = vmul.f32 %v788, %v790
    %v792 = vadd.f32 %v791, -0.16666654
    %v793 = vmul.f32 %v788, %v792
    %v794 = vadd.f32 %v793, 1.0
    %v795 = vmul.f32 %v794, %v779
    %vm796 = vweird.f32 %v150
    %v797 = vadd.s32 %v780, 3
    %v798 = vand.u32 %v797, 3
    %vm799 = vcmp.lt.s32.totalorder %v798, 2
    %vm800 = vcmp.eq.s32.totalorder %v798, 0
    %v801 = vxor.u32 %v795, 2147483648
    %v802 = vsel %vm800, %v787, %v801
    %vm803 = vcmp.eq.s32.totalorder %v798, 2
    %v804 = vxor.u32 %v787, 2147483648
    %v805 = vsel %vm803, %v804, %v795
    %v806 = vsel %vm799, %v802, %v805
    %v807 = vsel %vm796, nan, %v806
    %v808 = vand.u32 2147483647, %v153
    %vm809 = vcmp.le.f32.partialorder %v808, 0.7853982
    %vm810 = vcmp.lt.s32.totalorder %v153, 0
    %v811 = vand.u32 %v153, 2139095040
    %v812 = vshrl.u32 %v811, 23
    %v813 = vsub.s32 %v812, 127
    %v814 = vand.u32 2147483647, %v153
    %v815 = vand.u32 %v814, 8388607
    %v816 = vor.u32 %v815, 8388608
    %v817 = vsub.s32 0, %v816
    %v818 = vadd.s32 %v813, 1
    %vm819 = vcmp.gt.s32.totalorder %v818, 0
    %v820 = vsel %vm819, %v818, 0
    %v821 = vshrl.u32 %v820, 5
    %v822 = vand.u32 %v820, 31
    %v823 = vsub.s32 32, %v822
    %v824 = vshrl.u32 683565275, %v823
    %v825 = vshll.u32 683565275, %v822
    %v826 = vshrl.u32 2475754826, %v823
    %v827 = vor.u32 %v825, %v826
    %v828 = vshll.u32 2475754826, %v822
    %v829 = vshrl.u32 2131351028, %v823
    %v830 = vor.u32 %v828, %v829
    %v831 = vshll.u32 2131351028, %v822
    %v832 = vshrl.u32 2102212464, %v823
    %v833 = vor.u32 %v831, %v832
    %v834 = vshll.u32 2102212464, %v822
    %v835 = vshrl.u32 920167782, %v823
    %v836 = vor.u32 %v834, %v835
    %v837 = vshll.u32 920167782, %v822
    %v838 = vshrl.u32 1326507024, %v823
    %v839 = vor.u32 %v837, %v838
    %vm840 = vcmp.lt.s32.totalorder %v821, 1
    %vm841 = vcmp.lt.s32.totalorder %v821, 2
    %vm842 = vcmp.lt.s32.totalorder %v821, 3
    %vm843 = vcmp.lt.s32.totalorder %v821, 4
    %v844 = vsel %vm840, %v824, %v827
    %v845 = vsel %vm843, %v833, 2102212464
    %v846 = vsel %vm842, %v830, %v845
    %v847 = vsel %vm841, %v844, %v846
    %v848 = vsel %vm840, %v827, %v830
    %v849 = vsel %vm843, %v836, 920167782
    %v850 = vsel %vm842, %v833, %v849
    %v851 = vsel %vm841, %v848, %v850
    %v852 = vsel %vm840, %v830, %v833
    %v853 = vsel %vm843, %v839, 1326507024
    %v854 = vsel %vm842, %v836, %v853
    %v855 = vsel %vm841, %v852, %v854
    %v856 = vshll.u32 %v816, 8
    %v857 = vand.u32 %v856, 65535
    %v858 = vshrl.u32 %v856, 16
    %v859 = vand.u32 %v855, 65535
    %v860 = vshrl.u32 %v855, 16
    %v861 = vmul.u32 %v857, %v859
    %v862 = vmul.u32 %v857, %v860
    %v863 = vmul.u32 %v858, %v859
    %v864 = vmul.u32 %v858, %v860
    %v865 = vshll.u32 %v862, 16
    %v866 = vshrl.u32 %v862, 16
    %v867 = vshll.u32 %v863, 16
    %v868 = vshrl.u32 %v863, 16
    %vm869 = vc.u32 %v861, %v865
    %v870 = vsel %vm869, 1, 0
    %v871 = vadd.s32 %v861, %v865
    %v872 = vadd.s32 %v864, %v870
    %vm873 = vc.u32 %v871, %v867
    %v874 = vsel %vm873, 1, 0
    %v875 = vadd.s32 %v871, %v867
    %v876 = vadd.s32 %v872, %v874
    %v877 = vadd.s32 %v876, %v866
    %v878 = vadd.s32 %v877, %v868
    %v879 = vand.u32 %v856, 65535
    %v880 = vshrl.u32 %v856, 16
    %v881 = vand.u32 %v851, 65535
    %v882 = vshrl.u32 %v851, 16
    %v883 = vmul.u32 %v879, %v881
    %v884 = vmul.u32 %v879, %v882
    %v885 = vmul.u32 %v880, %v881
    %v886 = vmul.u32 %v880, %v882
    %v887 = vshll.u32 %v884, 16
    %v888 = vshrl.u32 %v884, 16
    %v889 = vshll.u32 %v885, 16
    %v890 = vshrl.u32 %v885, 16
    %vm891 = vc.u32 %v883, %v887
    %v892 = vsel %vm891, 1, 0
    %v893 = vadd.s32 %v883, %v887
    %v894 = vadd.s32 %v886, %v892
    %vm895 = vc.u32 %v893, %v889
    %v896 = vsel %vm895, 1, 0
    %v897 = vadd.s32 %v893, %v889
    %v898 = vadd.s32 %v894, %v896
    %v899 = vadd.s32 %v898, %v888
    %v900 = vadd.s32 %v899, %v890
    %v901 = vmul.u32 %v856, %v847
    %v902 = vadd.s32 %v878, %v897
    %vm903 = vc.u32 %v878, %v897
    %v904 = vadd.s32 %v900, 1
    %v905 = vsel %vm903, %v904, %v900
    %v906 = vadd.s32 %v901, %v905
    %v907 = vadd.s32 %v906, 536870912
    %v908 = vshrl.u32 %v907, 30
    %v909 = vshll.u32 %v908, 30
    %v910 = vsub.s32 %v906, %v909
    %vm911 = vcmp.lt.s32.totalorder %v910, 0
    %v912 = vsub.s32 0, %v910
    %v913 = vsel %vm911, %v912, %v910
    %v914 = vclz %v913
    %v915 = vsub.s32 %v914, 2
    %vm916 = vcmp.gt.s32.totalorder 0, %v915
    %v917 = vsel %vm916, 0, %v915
    %v918 = vsub.s32 32, %v917
    %v919 = vshll.u32 %v910, %v917
    %v920 = vshrl.u32 %v902, %v918
    %v921 = vor.u32 %v919, %v920
    %v922 = vsub.s32 4294967266, %v917
    %v923 = vadd.s32 %v922, 127
    %v924 = vshll.u32 %v923, 23
    %v925 = vor.u32 4788187, %v924
    %v926 = vand.u32 2147483647, %v925
    %v928 = vcvt.s32.f32 %v921
    %v929 = vmul.f32 %v928, %v926
    %v930 = vxor.u32 %v929, 2147483648
    %v931 = vsel %vm810, %v930, %v929
    %v932 = vsub.s32 4, %v908
    %v933 = vsel %vm810, %v932, %v908
    %v934 = vsel %vm809, %v153, %v931
    %v935 = vsel %vm809, 0, %v933
    %v936 = vmul.f32 %v934, %v934
    %v937 = vmul.f32 %v936, -0.001358992
    %v938 = vadd.f32 %v937, 0.041655596
    %v939 = vmul.f32 %v936, %v938
    %v940 = vadd.f32 %v939, -0.4999988
    %v941 = vmul.f32 %v936, %v940
    %v942 = vadd.f32 1.0, %v941
    %v943 = vmul.f32 %v934, %v934
    %v944 = vmul.f32 %v943, -0.00019511016
    %v945 = vadd.f32 %v944, 0.008332121
    %v946 = vmul.f32 %v943, %v945
    %v947 = vadd.f32 %v946, -0.16666654
    %v948 = vmul.f32 %v943, %v947
    %v949 = vadd.f32 %v948, 1.0
    %v950 = vmul.f32 %v949, %v934
    %vm951 = vweird.f32 %v153
    %v952 = vadd.s32 %v935, 3
    %v953 = vand.u32 %v952, 3
    %vm954 = vcmp.lt.s32.totalorder %v953, 2
    %vm955 = vcmp.eq.s32.totalorder %v953, 0
    %v956 = vxor.u32 %v950, 2147483648
    %v957 = vsel %vm955, %v942, %v956
    %vm958 = vcmp.eq.s32.totalorder %v953, 2
    %v959 = vxor.u32 %v942, 2147483648
    %v960 = vsel %vm958, %v959, %v950
    %v961 = vsel %vm954, %v957, %v960
    %v962 = vsel %vm951, nan, %v961
    %v963 = vand.u32 2147483647, %v156
    %vm964 = vcmp.le.f32.partialorder %v963, 0.7853982
    %vm965 = vcmp.lt.s32.totalorder %v156, 0
    %v966 = vand.u32 %v156, 2139095040
    %v967 = vshrl.u32 %v966, 23
    %v968 = vsub.s32 %v967, 127
    %v969 = vand.u32 2147483647, %v156
    %v970 = vand.u32 %v969, 8388607
    %v971 = vor.u32 %v970, 8388608
    %v972 = vsub.s32 0, %v971
    %v973 = vadd.s32 %v968, 1
    %vm974 = vcmp.gt.s32.totalorder %v973, 0
    %v975 = vsel %vm974, %v973, 0
    %v976 = vshrl.u32 %v975, 5
    %v977 = vand.u32 %v975, 31
    %v978 = vsub.s32 32, %v977
    %v979 = vshrl.u32 683565275, %v978
    %v980 = vshll.u32 683565275, %v977
    %v981 = vshrl.u32 2475754826, %v978
    %v982 = vor.u32 %v980, %v981
    %v983 = vshll.u32 2475754826, %v977
    %v984 = vshrl.u32 2131351028, %v978
    %v985 = vor.u32 %v983, %v984
    %v986 = vshll.u32 2131351028, %v977
    %v987 = vshrl.u32 2102212464, %v978
    %v988 = vor.u32 %v986, %v987
    %v989 = vshll.u32 2102212464, %v977
    %v990 = vshrl.u32 920167782, %v978
    %v991 = vor.u32 %v989, %v990
    %v992 = vshll.u32 920167782, %v977
    %v993 = vshrl.u32 1326507024, %v978
    %v994 = vor.u32 %v992, %v993
    %vm995 = vcmp.lt.s32.totalorder %v976, 1
    %vm996 = vcmp.lt.s32.totalorder %v976, 2
    %vm997 = vcmp.lt.s32.totalorder %v976, 3
    %vm998 = vcmp.lt.s32.totalorder %v976, 4
    %v999 = vsel %vm995, %v979, %v982
    %v1000 = vsel %vm998, %v988, 2102212464
    %v1001 = vsel %vm997, %v985, %v1000
    %v1002 = vsel %vm996, %v999, %v1001
    %v1003 = vsel %vm995, %v982, %v985
    %v1004 = vsel %vm998, %v991, 920167782
    %v1005 = vsel %vm997, %v988, %v1004
    %v1006 = vsel %vm996, %v1003, %v1005
    %v1007 = vsel %vm995, %v985, %v988
    %v1008 = vsel %vm998, %v994, 1326507024
    %v1009 = vsel %vm997, %v991, %v1008
    %v1010 = vsel %vm996, %v1007, %v1009
    %v1011 = vshll.u32 %v971, 8
    %v1012 = vand.u32 %v1011, 65535
    %v1013 = vshrl.u32 %v1011, 16
    %v1014 = vand.u32 %v1010, 65535
    %v1015 = vshrl.u32 %v1010, 16
    %v1016 = vmul.u32 %v1012, %v1014
    %v1017 = vmul.u32 %v1012, %v1015
    %v1018 = vmul.u32 %v1013, %v1014
    %v1019 = vmul.u32 %v1013, %v1015
    %v1020 = vshll.u32 %v1017, 16
    %v1021 = vshrl.u32 %v1017, 16
    %v1022 = vshll.u32 %v1018, 16
    %v1023 = vshrl.u32 %v1018, 16
    %vm1024 = vc.u32 %v1016, %v1020
    %v1025 = vsel %vm1024, 1, 0
    %v1026 = vadd.s32 %v1016, %v1020
    %v1027 = vadd.s32 %v1019, %v1025
    %vm1028 = vc.u32 %v1026, %v1022
    %v1029 = vsel %vm1028, 1, 0
    %v1030 = vadd.s32 %v1026, %v1022
    %v1031 = vadd.s32 %v1027, %v1029
    %v1032 = vadd.s32 %v1031, %v1021
    %v1033 = vadd.s32 %v1032, %v1023
    %v1034 = vand.u32 %v1011, 65535
    %v1035 = vshrl.u32 %v1011, 16
    %v1036 = vand.u32 %v1006, 65535
    %v1037 = vshrl.u32 %v1006, 16
    %v1038 = vmul.u32 %v1034, %v1036
    %v1039 = vmul.u32 %v1034, %v1037
    %v1040 = vmul.u32 %v1035, %v1036
    %v1041 = vmul.u32 %v1035, %v1037
    %v1042 = vshll.u32 %v1039, 16
    %v1043 = vshrl.u32 %v1039, 16
    %v1044 = vshll.u32 %v1040, 16
    %v1045 = vshrl.u32 %v1040, 16
    %vm1046 = vc.u32 %v1038, %v1042
    %v1047 = vsel %vm1046, 1, 0
    %v1048 = vadd.s32 %v1038, %v1042
    %v1049 = vadd.s32 %v1041, %v1047
    %vm1050 = vc.u32 %v1048, %v1044
    %v1051 = vsel %vm1050, 1, 0
    %v1052 = vadd.s32 %v1048, %v1044
    %v1053 = vadd.s32 %v1049, %v1051
    %v1054 = vadd.s32 %v1053, %v1043
    %v1055 = vadd.s32 %v1054, %v1045
    %v1056 = vmul.u32 %v1011, %v1002
    %v1057 = vadd.s32 %v1033, %v1052
    %vm1058 = vc.u32 %v1033, %v1052
    %v1059 = vadd.s32 %v1055, 1
    %v1060 = vsel %vm1058, %v1059, %v1055
    %v1061 = vadd.s32 %v1056, %v1060
    %v1062 = vadd.s32 %v1061, 536870912
    %v1063 = vshrl.u32 %v1062, 30
    %v1064 = vshll.u32 %v1063, 30
    %v1065 = vsub.s32 %v1061, %v1064
    %vm1066 = vcmp.lt.s32.totalorder %v1065, 0
    %v1067 = vsub.s32 0, %v1065
    %v1068 = vsel %vm1066, %v1067, %v1065
    %v1069 = vclz %v1068
    %v1070 = vsub.s32 %v1069, 2
    %vm1071 = vcmp.gt.s32.totalorder 0, %v1070
    %v1072 = vsel %vm1071, 0, %v1070
    %v1073 = vsub.s32 32, %v1072
    %v1074 = vshll.u32 %v1065, %v1072
    %v1075 = vshrl.u32 %v1057, %v1073
    %v1076 = vor.u32 %v1074, %v1075
    %v1077 = vsub.s32 4294967266, %v1072
    %v1078 = vadd.s32 %v1077, 127
    %v1079 = vshll.u32 %v1078, 23
    %v1080 = vor.u32 4788187, %v1079
    %v1081 = vand.u32 2147483647, %v1080
    %v1083 = vcvt.s32.f32 %v1076
    %v1084 = vmul.f32 %v1083, %v1081
    %v1085 = vxor.u32 %v1084, 2147483648
    %v1086 = vsel %vm965, %v1085, %v1084
    %v1087 = vsub.s32 4, %v1063
    %v1088 = vsel %vm965, %v1087, %v1063
    %v1089 = vsel %vm964, %v156, %v1086
    %v1090 = vsel %vm964, 0, %v1088
    %v1091 = vmul.f32 %v1089, %v1089
    %v1092 = vmul.f32 %v1091, -0.001358992
    %v1093 = vadd.f32 %v1092, 0.041655596
    %v1094 = vmul.f32 %v1091, %v1093
    %v1095 = vadd.f32 %v1094, -0.4999988
    %v1096 = vmul.f32 %v1091, %v1095
    %v1097 = vadd.f32 1.0, %v1096
    %v1098 = vmul.f32 %v1089, %v1089
    %v1099 = vmul.f32 %v1098, -0.00019511016
    %v1100 = vadd.f32 %v1099, 0.008332121
    %v1101 = vmul.f32 %v1098, %v1100
    %v1102 = vadd.f32 %v1101, -0.16666654
    %v1103 = vmul.f32 %v1098, %v1102
    %v1104 = vadd.f32 %v1103, 1.0
    %v1105 = vmul.f32 %v1104, %v1089
    %vm1106 = vweird.f32 %v156
    %v1107 = vadd.s32 %v1090, 3
    %v1108 = vand.u32 %v1107, 3
    %vm1109 = vcmp.lt.s32.totalorder %v1108, 2
    %vm1110 = vcmp.eq.s32.totalorder %v1108, 0
    %v1111 = vxor.u32 %v1105, 2147483648
    %v1112 = vsel %vm1110, %v1097, %v1111
    %vm1113 = vcmp.eq.s32.totalorder %v1108, 2
    %v1114 = vxor.u32 %v1097, 2147483648
    %v1115 = vsel %vm1113, %v1114, %v1105
    %v1116 = vsel %vm1109, %v1112, %v1115
    %v1117 = vsel %vm1106, nan, %v1116
    %v1118 = vand.u32 2147483647, %v159
    %vm1119 = vcmp.le.f32.partialorder %v1118, 0.7853982
    %vm1120 = vcmp.lt.s32.totalorder %v159, 0
    %v1121 = vand.u32 %v159, 2139095040
    %v1122 = vshrl.u32 %v1121, 23
    %v1123 = vsub.s32 %v1122, 127
    %v1124 = vand.u32 2147483647, %v159
    %v1125 = vand.u32 %v1124, 8388607
    %v1126 = vor.u32 %v1125, 8388608
    %v1127 = vsub.s32 0, %v1126
    %v1128 = vadd.s32 %v1123, 1
    %vm1129 = vcmp.gt.s32.totalorder %v1128, 0
    %v1130 = vsel %vm1129, %v1128, 0
    %v1131 = vshrl.u32 %v1130, 5
    %v1132 = vand.u32 %v1130, 31
    %v1133 = vsub.s32 32, %v1132
    %v1134 = vshrl.u32 683565275, %v1133
    %v1135 = vshll.u32 683565275, %v1132
    %v1136 = vshrl.u32 2475754826, %v1133
    %v1137 = vor.u32 %v1135, %v1136
    %v1138 = vshll.u32 2475754826, %v1132
    %v1139 = vshrl.u32 2131351028, %v1133
    %v1140 = vor.u32 %v1138, %v1139
    %v1141 = vshll.u32 2131351028, %v1132
    %v1142 = vshrl.u32 2102212464, %v1133
    %v1143 = vor.u32 %v1141, %v1142
    %v1144 = vshll.u32 2102212464, %v1132
    %v1145 = vshrl.u32 920167782, %v1133
    %v1146 = vor.u32 %v1144, %v1145
    %v1147 = vshll.u32 920167782, %v1132
    %v1148 = vshrl.u32 1326507024, %v1133
    %v1149 = vor.u32 %v1147, %v1148
    %vm1150 = vcmp.lt.s32.totalorder %v1131, 1
    %vm1151 = vcmp.lt.s32.totalorder %v1131, 2
    %vm1152 = vcmp.lt.s32.totalorder %v1131, 3
    %vm1153 = vcmp.lt.s32.totalorder %v1131, 4
    %v1154 = vsel %vm1150, %v1134, %v1137
    %v1155 = vsel %vm1153, %v1143, 2102212464
    %v1156 = vsel %vm1152, %v1140, %v1155
    %v1157 = vsel %vm1151, %v1154, %v1156
    %v1158 = vsel %vm1150, %v1137, %v1140
    %v1159 = vsel %vm1153, %v1146, 920167782
    %v1160 = vsel %vm1152, %v1143, %v1159
    %v1161 = vsel %vm1151, %v1158, %v1160
    %v1162 = vsel %vm1150, %v1140, %v1143
    %v1163 = vsel %vm1153, %v1149, 1326507024
    %v1164 = vsel %vm1152, %v1146, %v1163
    %v1165 = vsel %vm1151, %v1162, %v1164
    %v1166 = vshll.u32 %v1126, 8
    %v1167 = vand.u32 %v1166, 65535
    %v1168 = vshrl.u32 %v1166, 16
    %v1169 = vand.u32 %v1165, 65535
    %v1170 = vshrl.u32 %v1165, 16
    %v1171 = vmul.u32 %v1167, %v1169
    %v1172 = vmul.u32 %v1167, %v1170
    %v1173 = vmul.u32 %v1168, %v1169
    %v1174 = vmul.u32 %v1168, %v1170
    %v1175 = vshll.u32 %v1172, 16
    %v1176 = vshrl.u32 %v1172, 16
    %v1177 = vshll.u32 %v1173, 16
    %v1178 = vshrl.u32 %v1173, 16
    %vm1179 = vc.u32 %v1171, %v1175
    %v1180 = vsel %vm1179, 1, 0
    %v1181 = vadd.s32 %v1171, %v1175
    %v1182 = vadd.s32 %v1174, %v1180
    %vm1183 = vc.u32 %v1181, %v1177
    %v1184 = vsel %vm1183, 1, 0
    %v1185 = vadd.s32 %v1181, %v1177
    %v1186 = vadd.s32 %v1182, %v1184
    %v1187 = vadd.s32 %v1186, %v1176
    %v1188 = vadd.s32 %v1187, %v1178
    %v1189 = vand.u32 %v1166, 65535
    %v1190 = vshrl.u32 %v1166, 16
    %v1191 = vand.u32 %v1161, 65535
    %v1192 = vshrl.u32 %v1161, 16
    %v1193 = vmul.u32 %v1189, %v1191
    %v1194 = vmul.u32 %v1189, %v1192
    %v1195 = vmul.u32 %v1190, %v1191
    %v1196 = vmul.u32 %v1190, %v1192
    %v1197 = vshll.u32 %v1194, 16
    %v1198 = vshrl.u32 %v1194, 16
    %v1199 = vshll.u32 %v1195, 16
    %v1200 = vshrl.u32 %v1195, 16
    %vm1201 = vc.u32 %v1193, %v1197
    %v1202 = vsel %vm1201, 1, 0
    %v1203 = vadd.s32 %v1193, %v1197
    %v1204 = vadd.s32 %v1196, %v1202
    %vm1205 = vc.u32 %v1203, %v1199
    %v1206 = vsel %vm1205, 1, 0
    %v1207 = vadd.s32 %v1203, %v1199
    %v1208 = vadd.s32 %v1204, %v1206
    %v1209 = vadd.s32 %v1208, %v1198
    %v1210 = vadd.s32 %v1209, %v1200
    %v1211 = vmul.u32 %v1166, %v1157
    %v1212 = vadd.s32 %v1188, %v1207
    %vm1213 = vc.u32 %v1188, %v1207
    %v1214 = vadd.s32 %v1210, 1
    %v1215 = vsel %vm1213, %v1214, %v1210
    %v1216 = vadd.s32 %v1211, %v1215
    %v1217 = vadd.s32 %v1216, 536870912
    %v1218 = vshrl.u32 %v1217, 30
    %v1219 = vshll.u32 %v1218, 30
    %v1220 = vsub.s32 %v1216, %v1219
    %vm1221 = vcmp.lt.s32.totalorder %v1220, 0
    %v1222 = vsub.s32 0, %v1220
    %v1223 = vsel %vm1221, %v1222, %v1220
    %v1224 = vclz %v1223
    %v1225 = vsub.s32 %v1224, 2
    %vm1226 = vcmp.gt.s32.totalorder 0, %v1225
    %v1227 = vsel %vm1226, 0, %v1225
    %v1228 = vsub.s32 32, %v1227
    %v1229 = vshll.u32 %v1220, %v1227
    %v1230 = vshrl.u32 %v1212, %v1228
    %v1231 = vor.u32 %v1229, %v1230
    %v1232 = vsub.s32 4294967266, %v1227
    %v1233 = vadd.s32 %v1232, 127
    %v1234 = vshll.u32 %v1233, 23
    %v1235 = vor.u32 4788187, %v1234
    %v1236 = vand.u32 2147483647, %v1235
    %v1238 = vcvt.s32.f32 %v1231
    %v1239 = vmul.f32 %v1238, %v1236
    %v1240 = vxor.u32 %v1239, 2147483648
    %v1241 = vsel %vm1120, %v1240, %v1239
    %v1242 = vsub.s32 4, %v1218
    %v1243 = vsel %vm1120, %v1242, %v1218
    %v1244 = vsel %vm1119, %v159, %v1241
    %v1245 = vsel %vm1119, 0, %v1243
    %v1246 = vmul.f32 %v1244, %v1244
    %v1247 = vmul.f32 %v1246, -0.001358992
    %v1248 = vadd.f32 %v1247, 0.041655596
    %v1249 = vmul.f32 %v1246, %v1248
    %v1250 = vadd.f32 %v1249, -0.4999988
    %v1251 = vmul.f32 %v1246, %v1250
    %v1252 = vadd.f32 1.0, %v1251
    %v1253 = vmul.f32 %v1244, %v1244
    %v1254 = vmul.f32 %v1253, -0.00019511016
    %v1255 = vadd.f32 %v1254, 0.008332121
    %v1256 = vmul.f32 %v1253, %v1255
    %v1257 = vadd.f32 %v1256, -0.16666654
    %v1258 = vmul.f32 %v1253, %v1257
    %v1259 = vadd.f32 %v1258, 1.0
    %v1260 = vmul.f32 %v1259, %v1244
    %vm1261 = vweird.f32 %v159
    %v1262 = vadd.s32 %v1245, 3
    %v1263 = vand.u32 %v1262, 3
    %vm1264 = vcmp.lt.s32.totalorder %v1263, 2
    %vm1265 = vcmp.eq.s32.totalorder %v1263, 0
    %v1266 = vxor.u32 %v1260, 2147483648
    %v1267 = vsel %vm1265, %v1252, %v1266
    %vm1268 = vcmp.eq.s32.totalorder %v1263, 2
    %v1269 = vxor.u32 %v1252, 2147483648
    %v1270 = vsel %vm1268, %v1269, %v1260
    %v1271 = vsel %vm1264, %v1267, %v1270
    %v1272 = vsel %vm1261, nan, %v1271
    %v1273 = vand.u32 2147483647, %v162
    %vm1274 = vcmp.le.f32.partialorder %v1273, 0.7853982
    %vm1275 = vcmp.lt.s32.totalorder %v162, 0
    %v1276 = vand.u32 %v162, 2139095040
    %v1277 = vshrl.u32 %v1276, 23
    %v1278 = vsub.s32 %v1277, 127
    %v1279 = vand.u32 2147483647, %v162
    %v1280 = vand.u32 %v1279, 8388607
    %v1281 = vor.u32 %v1280, 8388608
    %v1282 = vsub.s32 0, %v1281
    %v1283 = vadd.s32 %v1278, 1
    %vm1284 = vcmp.gt.s32.totalorder %v1283, 0
    %v1285 = vsel %vm1284, %v1283, 0
    %v1286 = vshrl.u32 %v1285, 5
    %v1287 = vand.u32 %v1285, 31
    %v1288 = vsub.s32 32, %v1287
    %v1289 = vshrl.u32 683565275, %v1288
    %v1290 = vshll.u32 683565275, %v1287
    %v1291 = vshrl.u32 2475754826, %v1288
    %v1292 = vor.u32 %v1290, %v1291
    %v1293 = vshll.u32 2475754826, %v1287
    %v1294 = vshrl.u32 2131351028, %v1288
    %v1295 = vor.u32 %v1293, %v1294
    %v1296 = vshll.u32 2131351028, %v1287
    %v1297 = vshrl.u32 2102212464, %v1288
    %v1298 = vor.u32 %v1296, %v1297
    %v1299 = vshll.u32 2102212464, %v1287
    %v1300 = vshrl.u32 920167782, %v1288
    %v1301 = vor.u32 %v1299, %v1300
    %v1302 = vshll.u32 920167782, %v1287
    %v1303 = vshrl.u32 1326507024, %v1288
    %v1304 = vor.u32 %v1302, %v1303
    %vm1305 = vcmp.lt.s32.totalorder %v1286, 1
    %vm1306 = vcmp.lt.s32.totalorder %v1286, 2
    %vm1307 = vcmp.lt.s32.totalorder %v1286, 3
    %vm1308 = vcmp.lt.s32.totalorder %v1286, 4
    %v1309 = vsel %vm1305, %v1289, %v1292
    %v1310 = vsel %vm1308, %v1298, 2102212464
    %v1311 = vsel %vm1307, %v1295, %v1310
    %v1312 = vsel %vm1306, %v1309, %v1311
    %v1313 = vsel %vm1305, %v1292, %v1295
    %v1314 = vsel %vm1308, %v1301, 920167782
    %v1315 = vsel %vm1307, %v1298, %v1314
    %v1316 = vsel %vm1306, %v1313, %v1315
    %v1317 = vsel %vm1305, %v1295, %v1298
    %v1318 = vsel %vm1308, %v1304, 1326507024
    %v1319 = vsel %vm1307, %v1301, %v1318
    %v1320 = vsel %vm1306, %v1317, %v1319
    %v1321 = vshll.u32 %v1281, 8
    %v1322 = vand.u32 %v1321, 65535
    %v1323 = vshrl.u32 %v1321, 16
    %v1324 = vand.u32 %v1320, 65535
    %v1325 = vshrl.u32 %v1320, 16
    %v1326 = vmul.u32 %v1322, %v1324
    %v1327 = vmul.u32 %v1322, %v1325
    %v1328 = vmul.u32 %v1323, %v1324
    %v1329 = vmul.u32 %v1323, %v1325
    %v1330 = vshll.u32 %v1327, 16
    %v1331 = vshrl.u32 %v1327, 16
    %v1332 = vshll.u32 %v1328, 16
    %v1333 = vshrl.u32 %v1328, 16
    %vm1334 = vc.u32 %v1326, %v1330
    %v1335 = vsel %vm1334, 1, 0
    %v1336 = vadd.s32 %v1326, %v1330
    %v1337 = vadd.s32 %v1329, %v1335
    %vm1338 = vc.u32 %v1336, %v1332
    %v1339 = vsel %vm1338, 1, 0
    %v1340 = vadd.s32 %v1336, %v1332
    %v1341 = vadd.s32 %v1337, %v1339
    %v1342 = vadd.s32 %v1341, %v1331
    %v1343 = vadd.s32 %v1342, %v1333
    %v1344 = vand.u32 %v1321, 65535
    %v1345 = vshrl.u32 %v1321, 16
    %v1346 = vand.u32 %v1316, 65535
    %v1347 = vshrl.u32 %v1316, 16
    %v1348 = vmul.u32 %v1344, %v1346
    %v1349 = vmul.u32 %v1344, %v1347
    %v1350 = vmul.u32 %v1345, %v1346
    %v1351 = vmul.u32 %v1345, %v1347
    %v1352 = vshll.u32 %v1349, 16
    %v1353 = vshrl.u32 %v1349, 16
    %v1354 = vshll.u32 %v1350, 16
    %v1355 = vshrl.u32 %v1350, 16
    %vm1356 = vc.u32 %v1348, %v1352
    %v1357 = vsel %vm1356, 1, 0
    %v1358 = vadd.s32 %v1348, %v1352
    %v1359 = vadd.s32 %v1351, %v1357
    %vm1360 = vc.u32 %v1358, %v1354
    %v1361 = vsel %vm1360, 1, 0
    %v1362 = vadd.s32 %v1358, %v1354
    %v1363 = vadd.s32 %v1359, %v1361
    %v1364 = vadd.s32 %v1363, %v1353
    %v1365 = vadd.s32 %v1364, %v1355
    %v1366 = vmul.u32 %v1321, %v1312
    %v1367 = vadd.s32 %v1343, %v1362
    %vm1368 = vc.u32 %v1343, %v1362
    %v1369 = vadd.s32 %v1365, 1
    %v1370 = vsel %vm1368, %v1369, %v1365
    %v1371 = vadd.s32 %v1366, %v1370
    %v1372 = vadd.s32 %v1371, 536870912
    %v1373 = vshrl.u32 %v1372, 30
    %v1374 = vshll.u32 %v1373, 30
    %v1375 = vsub.s32 %v1371, %v1374
    %vm1376 = vcmp.lt.s32.totalorder %v1375, 0
    %v1377 = vsub.s32 0, %v1375
    %v1378 = vsel %vm1376, %v1377, %v1375
    %v1379 = vclz %v1378
    %v1380 = vsub.s32 %v1379, 2
    %vm1381 = vcmp.gt.s32.totalorder 0, %v1380
    %v1382 = vsel %vm1381, 0, %v1380
    %v1383 = vsub.s32 32, %v1382
    %v1384 = vshll.u32 %v1375, %v1382
    %v1385 = vshrl.u32 %v1367, %v1383
    %v1386 = vor.u32 %v1384, %v1385
    %v1387 = vsub.s32 4294967266, %v1382
    %v1388 = vadd.s32 %v1387, 127
    %v1389 = vshll.u32 %v1388, 23
    %v1390 = vor.u32 4788187, %v1389
    %v1391 = vand.u32 2147483647, %v1390
    %v1393 = vcvt.s32.f32 %v1386
    %v1394 = vmul.f32 %v1393, %v1391
    %v1395 = vxor.u32 %v1394, 2147483648
    %v1396 = vsel %vm1275, %v1395, %v1394
    %v1397 = vsub.s32 4, %v1373
    %v1398 = vsel %vm1275, %v1397, %v1373
    %v1399 = vsel %vm1274, %v162, %v1396
    %v1400 = vsel %vm1274, 0, %v1398
    %v1401 = vmul.f32 %v1399, %v1399
    %v1402 = vmul.f32 %v1401, -0.001358992
    %v1403 = vadd.f32 %v1402, 0.041655596
    %v1404 = vmul.f32 %v1401, %v1403
    %v1405 = vadd.f32 %v1404, -0.4999988
    %v1406 = vmul.f32 %v1401, %v1405
    %v1407 = vadd.f32 1.0, %v1406
    %v1408 = vmul.f32 %v1399, %v1399
    %v1409 = vmul.f32 %v1408, -0.00019511016
    %v1410 = vadd.f32 %v1409, 0.008332121
    %v1411 = vmul.f32 %v1408, %v1410
    %v1412 = vadd.f32 %v1411, -0.16666654
    %v1413 = vmul.f32 %v1408, %v1412
    %v1414 = vadd.f32 %v1413, 1.0
    %v1415 = vmul.f32 %v1414, %v1399
    %vm1416 = vweird.f32 %v162
    %v1417 = vadd.s32 %v1400, 3
    %v1418 = vand.u32 %v1417, 3
    %vm1419 = vcmp.lt.s32.totalorder %v1418, 2
    %vm1420 = vcmp.eq.s32.totalorder %v1418, 0
    %v1421 = vxor.u32 %v1415, 2147483648
    %v1422 = vsel %vm1420, %v1407, %v1421
    %vm1423 = vcmp.eq.s32.totalorder %v1418, 2
    %v1424 = vxor.u32 %v1407, 2147483648
    %v1425 = vsel %vm1423, %v1424, %v1415
    %v1426 = vsel %vm1419, %v1422, %v1425
    %v1427 = vsel %vm1416, nan, %v1426
    %v1428 = vand.u32 2147483647, %v165
    %vm1429 = vcmp.le.f32.partialorder %v1428, 0.7853982
    %vm1430 = vcmp.lt.s32.totalorder %v165, 0
    %v1431 = vand.u32 %v165, 2139095040
    %v1432 = vshrl.u32 %v1431, 23
    %v1433 = vsub.s32 %v1432, 127
    %v1434 = vand.u32 2147483647, %v165
    %v1435 = vand.u32 %v1434, 8388607
    %v1436 = vor.u32 %v1435, 8388608
    %v1437 = vsub.s32 0, %v1436
    %v1438 = vadd.s32 %v1433, 1
    %vm1439 = vcmp.gt.s32.totalorder %v1438, 0
    %v1440 = vsel %vm1439, %v1438, 0
    %v1441 = vshrl.u32 %v1440, 5
    %v1442 = vand.u32 %v1440, 31
    %v1443 = vsub.s32 32, %v1442
    %v1444 = vshrl.u32 683565275, %v1443
    %v1445 = vshll.u32 683565275, %v1442
    %v1446 = vshrl.u32 2475754826, %v1443
    %v1447 = vor.u32 %v1445, %v1446
    %v1448 = vshll.u32 2475754826, %v1442
    %v1449 = vshrl.u32 2131351028, %v1443
    %v1450 = vor.u32 %v1448, %v1449
    %v1451 = vshll.u32 2131351028, %v1442
    %v1452 = vshrl.u32 2102212464, %v1443
    %v1453 = vor.u32 %v1451, %v1452
    %v1454 = vshll.u32 2102212464, %v1442
    %v1455 = vshrl.u32 920167782, %v1443
    %v1456 = vor.u32 %v1454, %v1455
    %v1457 = vshll.u32 920167782, %v1442
    %v1458 = vshrl.u32 1326507024, %v1443
    %v1459 = vor.u32 %v1457, %v1458
    %vm1460 = vcmp.lt.s32.totalorder %v1441, 1
    %vm1461 = vcmp.lt.s32.totalorder %v1441, 2
    %vm1462 = vcmp.lt.s32.totalorder %v1441, 3
    %vm1463 = vcmp.lt.s32.totalorder %v1441, 4
    %v1464 = vsel %vm1460, %v1444, %v1447
    %v1465 = vsel %vm1463, %v1453, 2102212464
    %v1466 = vsel %vm1462, %v1450, %v1465
    %v1467 = vsel %vm1461, %v1464, %v1466
    %v1468 = vsel %vm1460, %v1447, %v1450
    %v1469 = vsel %vm1463, %v1456, 920167782
    %v1470 = vsel %vm1462, %v1453, %v1469
    %v1471 = vsel %vm1461, %v1468, %v1470
    %v1472 = vsel %vm1460, %v1450, %v1453
    %v1473 = vsel %vm1463, %v1459, 1326507024
    %v1474 = vsel %vm1462, %v1456, %v1473
    %v1475 = vsel %vm1461, %v1472, %v1474
    %v1476 = vshll.u32 %v1436, 8
    %v1477 = vand.u32 %v1476, 65535
    %v1478 = vshrl.u32 %v1476, 16
    %v1479 = vand.u32 %v1475, 65535
    %v1480 = vshrl.u32 %v1475, 16
    %v1481 = vmul.u32 %v1477, %v1479
    %v1482 = vmul.u32 %v1477, %v1480
    %v1483 = vmul.u32 %v1478, %v1479
    %v1484 = vmul.u32 %v1478, %v1480
    %v1485 = vshll.u32 %v1482, 16
    %v1486 = vshrl.u32 %v1482, 16
    %v1487 = vshll.u32 %v1483, 16
    %v1488 = vshrl.u32 %v1483, 16
    %vm1489 = vc.u32 %v1481, %v1485
    %v1490 = vsel %vm1489, 1, 0
    %v1491 = vadd.s32 %v1481, %v1485
    %v1492 = vadd.s32 %v1484, %v1490
    %vm1493 = vc.u32 %v1491, %v1487
    %v1494 = vsel %vm1493, 1, 0
    %v1495 = vadd.s32 %v1491, %v1487
    %v1496 = vadd.s32 %v1492, %v1494
    %v1497 = vadd.s32 %v1496, %v1486
    %v1498 = vadd.s32 %v1497, %v1488
    %v1499 = vand.u32 %v1476, 65535
    %v1500 = vshrl.u32 %v1476, 16
    %v1501 = vand.u32 %v1471, 65535
    %v1502 = vshrl.u32 %v1471, 16
    %v1503 = vmul.u32 %v1499, %v1501
    %v1504 = vmul.u32 %v1499, %v1502
    %v1505 = vmul.u32 %v1500, %v1501
    %v1506 = vmul.u32 %v1500, %v1502
    %v1507 = vshll.u32 %v1504, 16
    %v1508 = vshrl.u32 %v1504, 16
    %v1509 = vshll.u32 %v1505, 16
    %v1510 = vshrl.u32 %v1505, 16
    %vm1511 = vc.u32 %v1503, %v1507
    %v1512 = vsel %vm1511, 1, 0
    %v1513 = vadd.s32 %v1503, %v1507
    %v1514 = vadd.s32 %v1506, %v1512
    %vm1515 = vc.u32 %v1513, %v1509
    %v1516 = vsel %vm1515, 1, 0
    %v1517 = vadd.s32 %v1513, %v1509
    %v1518 = vadd.s32 %v1514, %v1516
    %v1519 = vadd.s32 %v1518, %v1508
    %v1520 = vadd.s32 %v1519, %v1510
    %v1521 = vmul.u32 %v1476, %v1467
    %v1522 = vadd.s32 %v1498, %v1517
    %vm1523 = vc.u32 %v1498, %v1517
    %v1524 = vadd.s32 %v1520, 1
    %v1525 = vsel %vm1523, %v1524, %v1520
    %v1526 = vadd.s32 %v1521, %v1525
    %v1527 = vadd.s32 %v1526, 536870912
    %v1528 = vshrl.u32 %v1527, 30
    %v1529 = vshll.u32 %v1528, 30
    %v1530 = vsub.s32 %v1526, %v1529
    %vm1531 = vcmp.lt.s32.totalorder %v1530, 0
    %v1532 = vsub.s32 0, %v1530
    %v1533 = vsel %vm1531, %v1532, %v1530
    %v1534 = vclz %v1533
    %v1535 = vsub.s32 %v1534, 2
    %vm1536 = vcmp.gt.s32.totalorder 0, %v1535
    %v1537 = vsel %vm1536, 0, %v1535
    %v1538 = vsub.s32 32, %v1537
    %v1539 = vshll.u32 %v1530, %v1537
    %v1540 = vshrl.u32 %v1522, %v1538
    %v1541 = vor.u32 %v1539, %v1540
    %v1542 = vsub.s32 4294967266, %v1537
    %v1543 = vadd.s32 %v1542, 127
    %v1544 = vshll.u32 %v1543, 23
    %v1545 = vor.u32 4788187, %v1544
    %v1546 = vand.u32 2147483647, %v1545
    %v1548 = vcvt.s32.f32 %v1541
    %v1549 = vmul.f32 %v1548, %v1546
    %v1550 = vxor.u32 %v1549, 2147483648
    %v1551 = vsel %vm1430, %v1550, %v1549
    %v1552 = vsub.s32 4, %v1528
    %v1553 = vsel %vm1430, %v1552, %v1528
    %v1554 = vsel %vm1429, %v165, %v1551
    %v1555 = vsel %vm1429, 0, %v1553
    %v1556 = vmul.f32 %v1554, %v1554
    %v1557 = vmul.f32 %v1556, -0.001358992
    %v1558 = vadd.f32 %v1557, 0.041655596
    %v1559 = vmul.f32 %v1556, %v1558
    %v1560 = vadd.f32 %v1559, -0.4999988
    %v1561 = vmul.f32 %v1556, %v1560
    %v1562 = vadd.f32 1.0, %v1561
    %v1563 = vmul.f32 %v1554, %v1554
    %v1564 = vmul.f32 %v1563, -0.00019511016
    %v1565 = vadd.f32 %v1564, 0.008332121
    %v1566 = vmul.f32 %v1563, %v1565
    %v1567 = vadd.f32 %v1566, -0.16666654
    %v1568 = vmul.f32 %v1563, %v1567
    %v1569 = vadd.f32 %v1568, 1.0
    %v1570 = vmul.f32 %v1569, %v1554
    %vm1571 = vweird.f32 %v165
    %v1572 = vadd.s32 %v1555, 3
    %v1573 = vand.u32 %v1572, 3
    %vm1574 = vcmp.lt.s32.totalorder %v1573, 2
    %vm1575 = vcmp.eq.s32.totalorder %v1573, 0
    %v1576 = vxor.u32 %v1570, 2147483648
    %v1577 = vsel %vm1575, %v1562, %v1576
    %vm1578 = vcmp.eq.s32.totalorder %v1573, 2
    %v1579 = vxor.u32 %v1562, 2147483648
    %v1580 = vsel %vm1578, %v1579, %v1570
    %v1581 = vsel %vm1574, %v1577, %v1580
    %v1582 = vsel %vm1571, nan, %v1581
    %v1583 = vand.u32 2147483647, %v168
    %vm1584 = vcmp.le.f32.partialorder %v1583, 0.7853982
    %vm1585 = vcmp.lt.s32.totalorder %v168, 0
    %v1586 = vand.u32 %v168, 2139095040
    %v1587 = vshrl.u32 %v1586, 23
    %v1588 = vsub.s32 %v1587, 127
    %v1589 = vand.u32 2147483647, %v168
    %v1590 = vand.u32 %v1589, 8388607
    %v1591 = vor.u32 %v1590, 8388608
    %v1592 = vsub.s32 0, %v1591
    %v1593 = vadd.s32 %v1588, 1
    %vm1594 = vcmp.gt.s32.totalorder %v1593, 0
    %v1595 = vsel %vm1594, %v1593, 0
    %v1596 = vshrl.u32 %v1595, 5
    %v1597 = vand.u32 %v1595, 31
    %v1598 = vsub.s32 32, %v1597
    %v1599 = vshrl.u32 683565275, %v1598
    %v1600 = vshll.u32 683565275, %v1597
    %v1601 = vshrl.u32 2475754826, %v1598
    %v1602 = vor.u32 %v1600, %v1601
    %v1603 = vshll.u32 2475754826, %v1597
    %v1604 = vshrl.u32 2131351028, %v1598
    %v1605 = vor.u32 %v1603, %v1604
    %v1606 = vshll.u32 2131351028, %v1597
    %v1607 = vshrl.u32 2102212464, %v1598
    %v1608 = vor.u32 %v1606, %v1607
    %v1609 = vshll.u32 2102212464, %v1597
    %v1610 = vshrl.u32 920167782, %v1598
    %v1611 = vor.u32 %v1609, %v1610
    %v1612 = vshll.u32 920167782, %v1597
    %v1613 = vshrl.u32 1326507024, %v1598
    %v1614 = vor.u32 %v1612, %v1613
    %vm1615 = vcmp.lt.s32.totalorder %v1596, 1
    %vm1616 = vcmp.lt.s32.totalorder %v1596, 2
    %vm1617 = vcmp.lt.s32.totalorder %v1596, 3
    %vm1618 = vcmp.lt.s32.totalorder %v1596, 4
    %v1619 = vsel %vm1615, %v1599, %v1602
    %v1620 = vsel %vm1618, %v1608, 2102212464
    %v1621 = vsel %vm1617, %v1605, %v1620
    %v1622 = vsel %vm1616, %v1619, %v1621
    %v1623 = vsel %vm1615, %v1602, %v1605
    %v1624 = vsel %vm1618, %v1611, 920167782
    %v1625 = vsel %vm1617, %v1608, %v1624
    %v1626 = vsel %vm1616, %v1623, %v1625
    %v1627 = vsel %vm1615, %v1605, %v1608
    %v1628 = vsel %vm1618, %v1614, 1326507024
    %v1629 = vsel %vm1617, %v1611, %v1628
    %v1630 = vsel %vm1616, %v1627, %v1629
    %v1631 = vshll.u32 %v1591, 8
    %v1632 = vand.u32 %v1631, 65535
    %v1633 = vshrl.u32 %v1631, 16
    %v1634 = vand.u32 %v1630, 65535
    %v1635 = vshrl.u32 %v1630, 16
    %v1636 = vmul.u32 %v1632, %v1634
    %v1637 = vmul.u32 %v1632, %v1635
    %v1638 = vmul.u32 %v1633, %v1634
    %v1639 = vmul.u32 %v1633, %v1635
    %v1640 = vshll.u32 %v1637, 16
    %v1641 = vshrl.u32 %v1637, 16
    %v1642 = vshll.u32 %v1638, 16
    %v1643 = vshrl.u32 %v1638, 16
    %vm1644 = vc.u32 %v1636, %v1640
    %v1645 = vsel %vm1644, 1, 0
    %v1646 = vadd.s32 %v1636, %v1640
    %v1647 = vadd.s32 %v1639, %v1645
    %vm1648 = vc.u32 %v1646, %v1642
    %v1649 = vsel %vm1648, 1, 0
    %v1650 = vadd.s32 %v1646, %v1642
    %v1651 = vadd.s32 %v1647, %v1649
    %v1652 = vadd.s32 %v1651, %v1641
    %v1653 = vadd.s32 %v1652, %v1643
    %v1654 = vand.u32 %v1631, 65535
    %v1655 = vshrl.u32 %v1631, 16
    %v1656 = vand.u32 %v1626, 65535
    %v1657 = vshrl.u32 %v1626, 16
    %v1658 = vmul.u32 %v1654, %v1656
    %v1659 = vmul.u32 %v1654, %v1657
    %v1660 = vmul.u32 %v1655, %v1656
    %v1661 = vmul.u32 %v1655, %v1657
    %v1662 = vshll.u32 %v1659, 16
    %v1663 = vshrl.u32 %v1659, 16
    %v1664 = vshll.u32 %v1660, 16
    %v1665 = vshrl.u32 %v1660, 16
    %vm1666 = vc.u32 %v1658, %v1662
    %v1667 = vsel %vm1666, 1, 0
    %v1668 = vadd.s32 %v1658, %v1662
    %v1669 = vadd.s32 %v1661, %v1667
    %vm1670 = vc.u32 %v1668, %v1664
    %v1671 = vsel %vm1670, 1, 0
    %v1672 = vadd.s32 %v1668, %v1664
    %v1673 = vadd.s32 %v1669, %v1671
    %v1674 = vadd.s32 %v1673, %v1663
    %v1675 = vadd.s32 %v1674, %v1665
    %v1676 = vmul.u32 %v1631, %v1622
    %v1677 = vadd.s32 %v1653, %v1672
    %vm1678 = vc.u32 %v1653, %v1672
    %v1679 = vadd.s32 %v1675, 1
    %v1680 = vsel %vm1678, %v1679, %v1675
    %v1681 = vadd.s32 %v1676, %v1680
    %v1682 = vadd.s32 %v1681, 536870912
    %v1683 = vshrl.u32 %v1682, 30
    %v1684 = vshll.u32 %v1683, 30
    %v1685 = vsub.s32 %v1681, %v1684
    %vm1686 = vcmp.lt.s32.totalorder %v1685, 0
    %v1687 = vsub.s32 0, %v1685
    %v1688 = vsel %vm1686, %v1687, %v1685
    %v1689 = vclz %v1688
    %v1690 = vsub.s32 %v1689, 2
    %vm1691 = vcmp.gt.s32.totalorder 0, %v1690
    %v1692 = vsel %vm1691, 0, %v1690
    %v1693 = vsub.s32 32, %v1692
    %v1694 = vshll.u32 %v1685, %v1692
    %v1695 = vshrl.u32 %v1677, %v1693
    %v1696 = vor.u32 %v1694, %v1695
    %v1697 = vsub.s32 4294967266, %v1692
    %v1698 = vadd.s32 %v1697, 127
    %v1699 = vshll.u32 %v1698, 23
    %v1700 = vor.u32 4788187, %v1699
    %v1701 = vand.u32 2147483647, %v1700
    %v1703 = vcvt.s32.f32 %v1696
    %v1704 = vmul.f32 %v1703, %v1701
    %v1705 = vxor.u32 %v1704, 2147483648
    %v1706 = vsel %vm1585, %v1705, %v1704
    %v1707 = vsub.s32 4, %v1683
    %v1708 = vsel %vm1585, %v1707, %v1683
    %v1709 = vsel %vm1584, %v168, %v1706
    %v1710 = vsel %vm1584, 0, %v1708
    %v1711 = vmul.f32 %v1709, %v1709
    %v1712 = vmul.f32 %v1711, -0.001358992
    %v1713 = vadd.f32 %v1712, 0.041655596
    %v1714 = vmul.f32 %v1711, %v1713
    %v1715 = vadd.f32 %v1714, -0.4999988
    %v1716 = vmul.f32 %v1711, %v1715
    %v1717 = vadd.f32 1.0, %v1716
    %v1718 = vmul.f32 %v1709, %v1709
    %v1719 = vmul.f32 %v1718, -0.00019511016
    %v1720 = vadd.f32 %v1719, 0.008332121
    %v1721 = vmul.f32 %v1718, %v1720
    %v1722 = vadd.f32 %v1721, -0.16666654
    %v1723 = vmul.f32 %v1718, %v1722
    %v1724 = vadd.f32 %v1723, 1.0
    %v1725 = vmul.f32 %v1724, %v1709
    %vm1726 = vweird.f32 %v168
    %v1727 = vadd.s32 %v1710, 3
    %v1728 = vand.u32 %v1727, 3
    %vm1729 = vcmp.lt.s32.totalorder %v1728, 2
    %vm1730 = vcmp.eq.s32.totalorder %v1728, 0
    %v1731 = vxor.u32 %v1725, 2147483648
    %v1732 = vsel %vm1730, %v1717, %v1731
    %vm1733 = vcmp.eq.s32.totalorder %v1728, 2
    %v1734 = vxor.u32 %v1717, 2147483648
    %v1735 = vsel %vm1733, %v1734, %v1725
    %v1736 = vsel %vm1729, %v1732, %v1735
    %v1737 = vsel %vm1726, nan, %v1736
    %v1738 = vand.u32 2147483647, %v171
    %vm1739 = vcmp.le.f32.partialorder %v1738, 0.7853982
    %vm1740 = vcmp.lt.s32.totalorder %v171, 0
    %v1741 = vand.u32 %v171, 2139095040
    %v1742 = vshrl.u32 %v1741, 23
    %v1743 = vsub.s32 %v1742, 127
    %v1744 = vand.u32 2147483647, %v171
    %v1745 = vand.u32 %v1744, 8388607
    %v1746 = vor.u32 %v1745, 8388608
    %v1747 = vsub.s32 0, %v1746
    %v1748 = vadd.s32 %v1743, 1
    %vm1749 = vcmp.gt.s32.totalorder %v1748, 0
    %v1750 = vsel %vm1749, %v1748, 0
    %v1751 = vshrl.u32 %v1750, 5
    %v1752 = vand.u32 %v1750, 31
    %v1753 = vsub.s32 32, %v1752
    %v1754 = vshrl.u32 683565275, %v1753
    %v1755 = vshll.u32 683565275, %v1752
    %v1756 = vshrl.u32 2475754826, %v1753
    %v1757 = vor.u32 %v1755, %v1756
    %v1758 = vshll.u32 2475754826, %v1752
    %v1759 = vshrl.u32 2131351028, %v1753
    %v1760 = vor.u32 %v1758, %v1759
    %v1761 = vshll.u32 2131351028, %v1752
    %v1762 = vshrl.u32 2102212464, %v1753
    %v1763 = vor.u32 %v1761, %v1762
    %v1764 = vshll.u32 2102212464, %v1752
    %v1765 = vshrl.u32 920167782, %v1753
    %v1766 = vor.u32 %v1764, %v1765
    %v1767 = vshll.u32 920167782, %v1752
    %v1768 = vshrl.u32 1326507024, %v1753
    %v1769 = vor.u32 %v1767, %v1768
    %vm1770 = vcmp.lt.s32.totalorder %v1751, 1
    %vm1771 = vcmp.lt.s32.totalorder %v1751, 2
    %vm1772 = vcmp.lt.s32.totalorder %v1751, 3
    %vm1773 = vcmp.lt.s32.totalorder %v1751, 4
    %v1774 = vsel %vm1770, %v1754, %v1757
    %v1775 = vsel %vm1773, %v1763, 2102212464
    %v1776 = vsel %vm1772, %v1760, %v1775
    %v1777 = vsel %vm1771, %v1774, %v1776
    %v1778 = vsel %vm1770, %v1757, %v1760
    %v1779 = vsel %vm1773, %v1766, 920167782
    %v1780 = vsel %vm1772, %v1763, %v1779
    %v1781 = vsel %vm1771, %v1778, %v1780
    %v1782 = vsel %vm1770, %v1760, %v1763
    %v1783 = vsel %vm1773, %v1769, 1326507024
    %v1784 = vsel %vm1772, %v1766, %v1783
    %v1785 = vsel %vm1771, %v1782, %v1784
    %v1786 = vshll.u32 %v1746, 8
    %v1787 = vand.u32 %v1786, 65535
    %v1788 = vshrl.u32 %v1786, 16
    %v1789 = vand.u32 %v1785, 65535
    %v1790 = vshrl.u32 %v1785, 16
    %v1791 = vmul.u32 %v1787, %v1789
    %v1792 = vmul.u32 %v1787, %v1790
    %v1793 = vmul.u32 %v1788, %v1789
    %v1794 = vmul.u32 %v1788, %v1790
    %v1795 = vshll.u32 %v1792, 16
    %v1796 = vshrl.u32 %v1792, 16
    %v1797 = vshll.u32 %v1793, 16
    %v1798 = vshrl.u32 %v1793, 16
    %vm1799 = vc.u32 %v1791, %v1795
    %v1800 = vsel %vm1799, 1, 0
    %v1801 = vadd.s32 %v1791, %v1795
    %v1802 = vadd.s32 %v1794, %v1800
    %vm1803 = vc.u32 %v1801, %v1797
    %v1804 = vsel %vm1803, 1, 0
    %v1805 = vadd.s32 %v1801, %v1797
    %v1806 = vadd.s32 %v1802, %v1804
    %v1807 = vadd.s32 %v1806, %v1796
    %v1808 = vadd.s32 %v1807, %v1798
    %v1809 = vand.u32 %v1786, 65535
    %v1810 = vshrl.u32 %v1786, 16
    %v1811 = vand.u32 %v1781, 65535
    %v1812 = vshrl.u32 %v1781, 16
    %v1813 = vmul.u32 %v1809, %v1811
    %v1814 = vmul.u32 %v1809, %v1812
    %v1815 = vmul.u32 %v1810, %v1811
    %v1816 = vmul.u32 %v1810, %v1812
    %v1817 = vshll.u32 %v1814, 16
    %v1818 = vshrl.u32 %v1814, 16
    %v1819 = vshll.u32 %v1815, 16
    %v1820 = vshrl.u32 %v1815, 16
    %vm1821 = vc.u32 %v1813, %v1817
    %v1822 = vsel %vm1821, 1, 0
    %v1823 = vadd.s32 %v1813, %v1817
    %v1824 = vadd.s32 %v1816, %v1822
    %vm1825 = vc.u32 %v1823, %v1819
    %v1826 = vsel %vm1825, 1, 0
    %v1827 = vadd.s32 %v1823, %v1819
    %v1828 = vadd.s32 %v1824, %v1826
    %v1829 = vadd.s32 %v1828, %v1818
    %v1830 = vadd.s32 %v1829, %v1820
    %v1831 = vmul.u32 %v1786, %v1777
    %v1832 = vadd.s32 %v1808, %v1827
    %vm1833 = vc.u32 %v1808, %v1827
    %v1834 = vadd.s32 %v1830, 1
    %v1835 = vsel %vm1833, %v1834, %v1830
    %v1836 = vadd.s32 %v1831, %v1835
    %v1837 = vadd.s32 %v1836, 536870912
    %v1838 = vshrl.u32 %v1837, 30
    %v1839 = vshll.u32 %v1838, 30
    %v1840 = vsub.s32 %v1836, %v1839
    %vm1841 = vcmp.lt.s32.totalorder %v1840, 0
    %v1842 = vsub.s32 0, %v1840
    %v1843 = vsel %vm1841, %v1842, %v1840
    %v1844 = vclz %v1843
    %v1845 = vsub.s32 %v1844, 2
    %vm1846 = vcmp.gt.s32.totalorder 0, %v1845
    %v1847 = vsel %vm1846, 0, %v1845
    %v1848 = vsub.s32 32, %v1847
    %v1849 = vshll.u32 %v1840, %v1847
    %v1850 = vshrl.u32 %v1832, %v1848
    %v1851 = vor.u32 %v1849, %v1850
    %v1852 = vsub.s32 4294967266, %v1847
    %v1853 = vadd.s32 %v1852, 127
    %v1854 = vshll.u32 %v1853, 23
    %v1855 = vor.u32 4788187, %v1854
    %v1856 = vand.u32 2147483647, %v1855
    %v1858 = vcvt.s32.f32 %v1851
    %v1859 = vmul.f32 %v1858, %v1856
    %v1860 = vxor.u32 %v1859, 2147483648
    %v1861 = vsel %vm1740, %v1860, %v1859
    %v1862 = vsub.s32 4, %v1838
    %v1863 = vsel %vm1740, %v1862, %v1838
    %v1864 = vsel %vm1739, %v171, %v1861
    %v1865 = vsel %vm1739, 0, %v1863
    %v1866 = vmul.f32 %v1864, %v1864
    %v1867 = vmul.f32 %v1866, -0.001358992
    %v1868 = vadd.f32 %v1867, 0.041655596
    %v1869 = vmul.f32 %v1866, %v1868
    %v1870 = vadd.f32 %v1869, -0.4999988
    %v1871 = vmul.f32 %v1866, %v1870
    %v1872 = vadd.f32 1.0, %v1871
    %v1873 = vmul.f32 %v1864, %v1864
    %v1874 = vmul.f32 %v1873, -0.00019511016
    %v1875 = vadd.f32 %v1874, 0.008332121
    %v1876 = vmul.f32 %v1873, %v1875
    %v1877 = vadd.f32 %v1876, -0.16666654
    %v1878 = vmul.f32 %v1873, %v1877
    %v1879 = vadd.f32 %v1878, 1.0
    %v1880 = vmul.f32 %v1879, %v1864
    %vm1881 = vweird.f32 %v171
    %v1882 = vadd.s32 %v1865, 3
    %v1883 = vand.u32 %v1882, 3
    %vm1884 = vcmp.lt.s32.totalorder %v1883, 2
    %vm1885 = vcmp.eq.s32.totalorder %v1883, 0
    %v1886 = vxor.u32 %v1880, 2147483648
    %v1887 = vsel %vm1885, %v1872, %v1886
    %vm1888 = vcmp.eq.s32.totalorder %v1883, 2
    %v1889 = vxor.u32 %v1872, 2147483648
    %v1890 = vsel %vm1888, %v1889, %v1880
    %v1891 = vsel %vm1884, %v1887, %v1890
    %v1892 = vsel %vm1881, nan, %v1891
    %v1893 = vand.u32 2147483647, %v174
    %vm1894 = vcmp.le.f32.partialorder %v1893, 0.7853982
    %vm1895 = vcmp.lt.s32.totalorder %v174, 0
    %v1896 = vand.u32 %v174, 2139095040
    %v1897 = vshrl.u32 %v1896, 23
    %v1898 = vsub.s32 %v1897, 127
    %v1899 = vand.u32 2147483647, %v174
    %v1900 = vand.u32 %v1899, 8388607
    %v1901 = vor.u32 %v1900, 8388608
    %v1902 = vsub.s32 0, %v1901
    %v1903 = vadd.s32 %v1898, 1
    %vm1904 = vcmp.gt.s32.totalorder %v1903, 0
    %v1905 = vsel %vm1904, %v1903, 0
    %v1906 = vshrl.u32 %v1905, 5
    %v1907 = vand.u32 %v1905, 31
    %v1908 = vsub.s32 32, %v1907
    %v1909 = vshrl.u32 683565275, %v1908
    %v1910 = vshll.u32 683565275, %v1907
    %v1911 = vshrl.u32 2475754826, %v1908
    %v1912 = vor.u32 %v1910, %v1911
    %v1913 = vshll.u32 2475754826, %v1907
    %v1914 = vshrl.u32 2131351028, %v1908
    %v1915 = vor.u32 %v1913, %v1914
    %v1916 = vshll.u32 2131351028, %v1907
    %v1917 = vshrl.u32 2102212464, %v1908
    %v1918 = vor.u32 %v1916, %v1917
    %v1919 = vshll.u32 2102212464, %v1907
    %v1920 = vshrl.u32 920167782, %v1908
    %v1921 = vor.u32 %v1919, %v1920
    %v1922 = vshll.u32 920167782, %v1907
    %v1923 = vshrl.u32 1326507024, %v1908
    %v1924 = vor.u32 %v1922, %v1923
    %vm1925 = vcmp.lt.s32.totalorder %v1906, 1
    %vm1926 = vcmp.lt.s32.totalorder %v1906, 2
    %vm1927 = vcmp.lt.s32.totalorder %v1906, 3
    %vm1928 = vcmp.lt.s32.totalorder %v1906, 4
    %v1929 = vsel %vm1925, %v1909, %v1912
    %v1930 = vsel %vm1928, %v1918, 2102212464
    %v1931 = vsel %vm1927, %v1915, %v1930
    %v1932 = vsel %vm1926, %v1929, %v1931
    %v1933 = vsel %vm1925, %v1912, %v1915
    %v1934 = vsel %vm1928, %v1921, 920167782
    %v1935 = vsel %vm1927, %v1918, %v1934
    %v1936 = vsel %vm1926, %v1933, %v1935
    %v1937 = vsel %vm1925, %v1915, %v1918
    %v1938 = vsel %vm1928, %v1924, 1326507024
    %v1939 = vsel %vm1927, %v1921, %v1938
    %v1940 = vsel %vm1926, %v1937, %v1939
    %v1941 = vshll.u32 %v1901, 8
    %v1942 = vand.u32 %v1941, 65535
    %v1943 = vshrl.u32 %v1941, 16
    %v1944 = vand.u32 %v1940, 65535
    %v1945 = vshrl.u32 %v1940, 16
    %v1946 = vmul.u32 %v1942, %v1944
    %v1947 = vmul.u32 %v1942, %v1945
    %v1948 = vmul.u32 %v1943, %v1944
    %v1949 = vmul.u32 %v1943, %v1945
    %v1950 = vshll.u32 %v1947, 16
    %v1951 = vshrl.u32 %v1947, 16
    %v1952 = vshll.u32 %v1948, 16
    %v1953 = vshrl.u32 %v1948, 16
    %vm1954 = vc.u32 %v1946, %v1950
    %v1955 = vsel %vm1954, 1, 0
    %v1956 = vadd.s32 %v1946, %v1950
    %v1957 = vadd.s32 %v1949, %v1955
    %vm1958 = vc.u32 %v1956, %v1952
    %v1959 = vsel %vm1958, 1, 0
    %v1960 = vadd.s32 %v1956, %v1952
    %v1961 = vadd.s32 %v1957, %v1959
    %v1962 = vadd.s32 %v1961, %v1951
    %v1963 = vadd.s32 %v1962, %v1953
    %v1964 = vand.u32 %v1941, 65535
    %v1965 = vshrl.u32 %v1941, 16
    %v1966 = vand.u32 %v1936, 65535
    %v1967 = vshrl.u32 %v1936, 16
    %v1968 = vmul.u32 %v1964, %v1966
    %v1969 = vmul.u32 %v1964, %v1967
    %v1970 = vmul.u32 %v1965, %v1966
    %v1971 = vmul.u32 %v1965, %v1967
    %v1972 = vshll.u32 %v1969, 16
    %v1973 = vshrl.u32 %v1969, 16
    %v1974 = vshll.u32 %v1970, 16
    %v1975 = vshrl.u32 %v1970, 16
    %vm1976 = vc.u32 %v1968, %v1972
    %v1977 = vsel %vm1976, 1, 0
    %v1978 = vadd.s32 %v1968, %v1972
    %v1979 = vadd.s32 %v1971, %v1977
    %vm1980 = vc.u32 %v1978, %v1974
    %v1981 = vsel %vm1980, 1, 0
    %v1982 = vadd.s32 %v1978, %v1974
    %v1983 = vadd.s32 %v1979, %v1981
    %v1984 = vadd.s32 %v1983, %v1973
    %v1985 = vadd.s32 %v1984, %v1975
    %v1986 = vmul.u32 %v1941, %v1932
    %v1987 = vadd.s32 %v1963, %v1982
    %vm1988 = vc.u32 %v1963, %v1982
    %v1989 = vadd.s32 %v1985, 1
    %v1990 = vsel %vm1988, %v1989, %v1985
    %v1991 = vadd.s32 %v1986, %v1990
    %v1992 = vadd.s32 %v1991, 536870912
    %v1993 = vshrl.u32 %v1992, 30
    %v1994 = vshll.u32 %v1993, 30
    %v1995 = vsub.s32 %v1991, %v1994
    %vm1996 = vcmp.lt.s32.totalorder %v1995, 0
    %v1997 = vsub.s32 0, %v1995
    %v1998 = vsel %vm1996, %v1997, %v1995
    %v1999 = vclz %v1998
    %v2000 = vsub.s32 %v1999, 2
    %vm2001 = vcmp.gt.s32.totalorder 0, %v2000
    %v2002 = vsel %vm2001, 0, %v2000
    %v2003 = vsub.s32 32, %v2002
    %v2004 = vshll.u32 %v1995, %v2002
    %v2005 = vshrl.u32 %v1987, %v2003
    %v2006 = vor.u32 %v2004, %v2005
    %v2007 = vsub.s32 4294967266, %v2002
    %v2008 = vadd.s32 %v2007, 127
    %v2009 = vshll.u32 %v2008, 23
    %v2010 = vor.u32 4788187, %v2009
    %v2011 = vand.u32 2147483647, %v2010
    %v2013 = vcvt.s32.f32 %v2006
    %v2014 = vmul.f32 %v2013, %v2011
    %v2015 = vxor.u32 %v2014, 2147483648
    %v2016 = vsel %vm1895, %v2015, %v2014
    %v2017 = vsub.s32 4, %v1993
    %v2018 = vsel %vm1895, %v2017, %v1993
    %v2019 = vsel %vm1894, %v174, %v2016
    %v2020 = vsel %vm1894, 0, %v2018
    %v2021 = vmul.f32 %v2019, %v2019
    %v2022 = vmul.f32 %v2021, -0.001358992
    %v2023 = vadd.f32 %v2022, 0.041655596
    %v2024 = vmul.f32 %v2021, %v2023
    %v2025 = vadd.f32 %v2024, -0.4999988
    %v2026 = vmul.f32 %v2021, %v2025
    %v2027 = vadd.f32 1.0, %v2026
    %v2028 = vmul.f32 %v2019, %v2019
    %v2029 = vmul.f32 %v2028, -0.00019511016
    %v2030 = vadd.f32 %v2029, 0.008332121
    %v2031 = vmul.f32 %v2028, %v2030
    %v2032 = vadd.f32 %v2031, -0.16666654
    %v2033 = vmul.f32 %v2028, %v2032
    %v2034 = vadd.f32 %v2033, 1.0
    %v2035 = vmul.f32 %v2034, %v2019
    %vm2036 = vweird.f32 %v174
    %v2037 = vadd.s32 %v2020, 3
    %v2038 = vand.u32 %v2037, 3
    %vm2039 = vcmp.lt.s32.totalorder %v2038, 2
    %vm2040 = vcmp.eq.s32.totalorder %v2038, 0
    %v2041 = vxor.u32 %v2035, 2147483648
    %v2042 = vsel %vm2040, %v2027, %v2041
    %vm2043 = vcmp.eq.s32.totalorder %v2038, 2
    %v2044 = vxor.u32 %v2027, 2147483648
    %v2045 = vsel %vm2043, %v2044, %v2035
    %v2046 = vsel %vm2039, %v2042, %v2045
    %v2047 = vsel %vm2036, nan, %v2046
    %v2048 = vand.u32 2147483647, %v177
    %vm2049 = vcmp.le.f32.partialorder %v2048, 0.7853982
    %vm2050 = vcmp.lt.s32.totalorder %v177, 0
    %v2051 = vand.u32 %v177, 2139095040
    %v2052 = vshrl.u32 %v2051, 23
    %v2053 = vsub.s32 %v2052, 127
    %v2054 = vand.u32 2147483647, %v177
    %v2055 = vand.u32 %v2054, 8388607
    %v2056 = vor.u32 %v2055, 8388608
    %v2057 = vsub.s32 0, %v2056
    %v2058 = vadd.s32 %v2053, 1
    %vm2059 = vcmp.gt.s32.totalorder %v2058, 0
    %v2060 = vsel %vm2059, %v2058, 0
    %v2061 = vshrl.u32 %v2060, 5
    %v2062 = vand.u32 %v2060, 31
    %v2063 = vsub.s32 32, %v2062
    %v2064 = vshrl.u32 683565275, %v2063
    %v2065 = vshll.u32 683565275, %v2062
    %v2066 = vshrl.u32 2475754826, %v2063
    %v2067 = vor.u32 %v2065, %v2066
    %v2068 = vshll.u32 2475754826, %v2062
    %v2069 = vshrl.u32 2131351028, %v2063
    %v2070 = vor.u32 %v2068, %v2069
    %v2071 = vshll.u32 2131351028, %v2062
    %v2072 = vshrl.u32 2102212464, %v2063
    %v2073 = vor.u32 %v2071, %v2072
    %v2074 = vshll.u32 2102212464, %v2062
    %v2075 = vshrl.u32 920167782, %v2063
    %v2076 = vor.u32 %v2074, %v2075
    %v2077 = vshll.u32 920167782, %v2062
    %v2078 = vshrl.u32 1326507024, %v2063
    %v2079 = vor.u32 %v2077, %v2078
    %vm2080 = vcmp.lt.s32.totalorder %v2061, 1
    %vm2081 = vcmp.lt.s32.totalorder %v2061, 2
    %vm2082 = vcmp.lt.s32.totalorder %v2061, 3
    %vm2083 = vcmp.lt.s32.totalorder %v2061, 4
    %v2084 = vsel %vm2080, %v2064, %v2067
    %v2085 = vsel %vm2083, %v2073, 2102212464
    %v2086 = vsel %vm2082, %v2070, %v2085
    %v2087 = vsel %vm2081, %v2084, %v2086
    %v2088 = vsel %vm2080, %v2067, %v2070
    %v2089 = vsel %vm2083, %v2076, 920167782
    %v2090 = vsel %vm2082, %v2073, %v2089
    %v2091 = vsel %vm2081, %v2088, %v2090
    %v2092 = vsel %vm2080, %v2070, %v2073
    %v2093 = vsel %vm2083, %v2079, 1326507024
    %v2094 = vsel %vm2082, %v2076, %v2093
    %v2095 = vsel %vm2081, %v2092, %v2094
    %v2096 = vshll.u32 %v2056, 8
    %v2097 = vand.u32 %v2096, 65535
    %v2098 = vshrl.u32 %v2096, 16
    %v2099 = vand.u32 %v2095, 65535
    %v2100 = vshrl.u32 %v2095, 16
    %v2101 = vmul.u32 %v2097, %v2099
    %v2102 = vmul.u32 %v2097, %v2100
    %v2103 = vmul.u32 %v2098, %v2099
    %v2104 = vmul.u32 %v2098, %v2100
    %v2105 = vshll.u32 %v2102, 16
    %v2106 = vshrl.u32 %v2102, 16
    %v2107 = vshll.u32 %v2103, 16
    %v2108 = vshrl.u32 %v2103, 16
    %vm2109 = vc.u32 %v2101, %v2105
    %v2110 = vsel %vm2109, 1, 0
    %v2111 = vadd.s32 %v2101, %v2105
    %v2112 = vadd.s32 %v2104, %v2110
    %vm2113 = vc.u32 %v2111, %v2107
    %v2114 = vsel %vm2113, 1, 0
    %v2115 = vadd.s32 %v2111, %v2107
    %v2116 = vadd.s32 %v2112, %v2114
    %v2117 = vadd.s32 %v2116, %v2106
    %v2118 = vadd.s32 %v2117, %v2108
    %v2119 = vand.u32 %v2096, 65535
    %v2120 = vshrl.u32 %v2096, 16
    %v2121 = vand.u32 %v2091, 65535
    %v2122 = vshrl.u32 %v2091, 16
    %v2123 = vmul.u32 %v2119, %v2121
    %v2124 = vmul.u32 %v2119, %v2122
    %v2125 = vmul.u32 %v2120, %v2121
    %v2126 = vmul.u32 %v2120, %v2122
    %v2127 = vshll.u32 %v2124, 16
    %v2128 = vshrl.u32 %v2124, 16
    %v2129 = vshll.u32 %v2125, 16
    %v2130 = vshrl.u32 %v2125, 16
    %vm2131 = vc.u32 %v2123, %v2127
    %v2132 = vsel %vm2131, 1, 0
    %v2133 = vadd.s32 %v2123, %v2127
    %v2134 = vadd.s32 %v2126, %v2132
    %vm2135 = vc.u32 %v2133, %v2129
    %v2136 = vsel %vm2135, 1, 0
    %v2137 = vadd.s32 %v2133, %v2129
    %v2138 = vadd.s32 %v2134, %v2136
    %v2139 = vadd.s32 %v2138, %v2128
    %v2140 = vadd.s32 %v2139, %v2130
    %v2141 = vmul.u32 %v2096, %v2087
    %v2142 = vadd.s32 %v2118, %v2137
    %vm2143 = vc.u32 %v2118, %v2137
    %v2144 = vadd.s32 %v2140, 1
    %v2145 = vsel %vm2143, %v2144, %v2140
    %v2146 = vadd.s32 %v2141, %v2145
    %v2147 = vadd.s32 %v2146, 536870912
    %v2148 = vshrl.u32 %v2147, 30
    %v2149 = vshll.u32 %v2148, 30
    %v2150 = vsub.s32 %v2146, %v2149
    %vm2151 = vcmp.lt.s32.totalorder %v2150, 0
    %v2152 = vsub.s32 0, %v2150
    %v2153 = vsel %vm2151, %v2152, %v2150
    %v2154 = vclz %v2153
    %v2155 = vsub.s32 %v2154, 2
    %vm2156 = vcmp.gt.s32.totalorder 0, %v2155
    %v2157 = vsel %vm2156, 0, %v2155
    %v2158 = vsub.s32 32, %v2157
    %v2159 = vshll.u32 %v2150, %v2157
    %v2160 = vshrl.u32 %v2142, %v2158
    %v2161 = vor.u32 %v2159, %v2160
    %v2162 = vsub.s32 4294967266, %v2157
    %v2163 = vadd.s32 %v2162, 127
    %v2164 = vshll.u32 %v2163, 23
    %v2165 = vor.u32 4788187, %v2164
    %v2166 = vand.u32 2147483647, %v2165
    %v2168 = vcvt.s32.f32 %v2161
    %v2169 = vmul.f32 %v2168, %v2166
    %v2170 = vxor.u32 %v2169, 2147483648
    %v2171 = vsel %vm2050, %v2170, %v2169
    %v2172 = vsub.s32 4, %v2148
    %v2173 = vsel %vm2050, %v2172, %v2148
    %v2174 = vsel %vm2049, %v177, %v2171
    %v2175 = vsel %vm2049, 0, %v2173
    %v2176 = vmul.f32 %v2174, %v2174
    %v2177 = vmul.f32 %v2176, -0.001358992
    %v2178 = vadd.f32 %v2177, 0.041655596
    %v2179 = vmul.f32 %v2176, %v2178
    %v2180 = vadd.f32 %v2179, -0.4999988
    %v2181 = vmul.f32 %v2176, %v2180
    %v2182 = vadd.f32 1.0, %v2181
    %v2183 = vmul.f32 %v2174, %v2174
    %v2184 = vmul.f32 %v2183, -0.00019511016
    %v2185 = vadd.f32 %v2184, 0.008332121
    %v2186 = vmul.f32 %v2183, %v2185
    %v2187 = vadd.f32 %v2186, -0.16666654
    %v2188 = vmul.f32 %v2183, %v2187
    %v2189 = vadd.f32 %v2188, 1.0
    %v2190 = vmul.f32 %v2189, %v2174
    %vm2191 = vweird.f32 %v177
    %v2192 = vadd.s32 %v2175, 3
    %v2193 = vand.u32 %v2192, 3
    %vm2194 = vcmp.lt.s32.totalorder %v2193, 2
    %vm2195 = vcmp.eq.s32.totalorder %v2193, 0
    %v2196 = vxor.u32 %v2190, 2147483648
    %v2197 = vsel %vm2195, %v2182, %v2196
    %vm2198 = vcmp.eq.s32.totalorder %v2193, 2
    %v2199 = vxor.u32 %v2182, 2147483648
    %v2200 = vsel %vm2198, %v2199, %v2190
    %v2201 = vsel %vm2194, %v2197, %v2200
    %v2202 = vsel %vm2191, nan, %v2201
    %v2203 = vand.u32 2147483647, %v180
    %vm2204 = vcmp.le.f32.partialorder %v2203, 0.7853982
    %vm2205 = vcmp.lt.s32.totalorder %v180, 0
    %v2206 = vand.u32 %v180, 2139095040
    %v2207 = vshrl.u32 %v2206, 23
    %v2208 = vsub.s32 %v2207, 127
    %v2209 = vand.u32 2147483647, %v180
    %v2210 = vand.u32 %v2209, 8388607
    %v2211 = vor.u32 %v2210, 8388608
    %v2212 = vsub.s32 0, %v2211
    %v2213 = vadd.s32 %v2208, 1
    %vm2214 = vcmp.gt.s32.totalorder %v2213, 0
    %v2215 = vsel %vm2214, %v2213, 0
    %v2216 = vshrl.u32 %v2215, 5
    %v2217 = vand.u32 %v2215, 31
    %v2218 = vsub.s32 32, %v2217
    %v2219 = vshrl.u32 683565275, %v2218
    %v2220 = vshll.u32 683565275, %v2217
    %v2221 = vshrl.u32 2475754826, %v2218
    %v2222 = vor.u32 %v2220, %v2221
    %v2223 = vshll.u32 2475754826, %v2217
    %v2224 = vshrl.u32 2131351028, %v2218
    %v2225 = vor.u32 %v2223, %v2224
    %v2226 = vshll.u32 2131351028, %v2217
    %v2227 = vshrl.u32 2102212464, %v2218
    %v2228 = vor.u32 %v2226, %v2227
    %v2229 = vshll.u32 2102212464, %v2217
    %v2230 = vshrl.u32 920167782, %v2218
    %v2231 = vor.u32 %v2229, %v2230
    %v2232 = vshll.u32 920167782, %v2217
    %v2233 = vshrl.u32 1326507024, %v2218
    %v2234 = vor.u32 %v2232, %v2233
    %vm2235 = vcmp.lt.s32.totalorder %v2216, 1
    %vm2236 = vcmp.lt.s32.totalorder %v2216, 2
    %vm2237 = vcmp.lt.s32.totalorder %v2216, 3
    %vm2238 = vcmp.lt.s32.totalorder %v2216, 4
    %v2239 = vsel %vm2235, %v2219, %v2222
    %v2240 = vsel %vm2238, %v2228, 2102212464
    %v2241 = vsel %vm2237, %v2225, %v2240
    %v2242 = vsel %vm2236, %v2239, %v2241
    %v2243 = vsel %vm2235, %v2222, %v2225
    %v2244 = vsel %vm2238, %v2231, 920167782
    %v2245 = vsel %vm2237, %v2228, %v2244
    %v2246 = vsel %vm2236, %v2243, %v2245
    %v2247 = vsel %vm2235, %v2225, %v2228
    %v2248 = vsel %vm2238, %v2234, 1326507024
    %v2249 = vsel %vm2237, %v2231, %v2248
    %v2250 = vsel %vm2236, %v2247, %v2249
    %v2251 = vshll.u32 %v2211, 8
    %v2252 = vand.u32 %v2251, 65535
    %v2253 = vshrl.u32 %v2251, 16
    %v2254 = vand.u32 %v2250, 65535
    %v2255 = vshrl.u32 %v2250, 16
    %v2256 = vmul.u32 %v2252, %v2254
    %v2257 = vmul.u32 %v2252, %v2255
    %v2258 = vmul.u32 %v2253, %v2254
    %v2259 = vmul.u32 %v2253, %v2255
    %v2260 = vshll.u32 %v2257, 16
    %v2261 = vshrl.u32 %v2257, 16
    %v2262 = vshll.u32 %v2258, 16
    %v2263 = vshrl.u32 %v2258, 16
    %vm2264 = vc.u32 %v2256, %v2260
    %v2265 = vsel %vm2264, 1, 0
    %v2266 = vadd.s32 %v2256, %v2260
    %v2267 = vadd.s32 %v2259, %v2265
    %vm2268 = vc.u32 %v2266, %v2262
    %v2269 = vsel %vm2268, 1, 0
    %v2270 = vadd.s32 %v2266, %v2262
    %v2271 = vadd.s32 %v2267, %v2269
    %v2272 = vadd.s32 %v2271, %v2261
    %v2273 = vadd.s32 %v2272, %v2263
    %v2274 = vand.u32 %v2251, 65535
    %v2275 = vshrl.u32 %v2251, 16
    %v2276 = vand.u32 %v2246, 65535
    %v2277 = vshrl.u32 %v2246, 16
    %v2278 = vmul.u32 %v2274, %v2276
    %v2279 = vmul.u32 %v2274, %v2277
    %v2280 = vmul.u32 %v2275, %v2276
    %v2281 = vmul.u32 %v2275, %v2277
    %v2282 = vshll.u32 %v2279, 16
    %v2283 = vshrl.u32 %v2279, 16
    %v2284 = vshll.u32 %v2280, 16
    %v2285 = vshrl.u32 %v2280, 16
    %vm2286 = vc.u32 %v2278, %v2282
    %v2287 = vsel %vm2286, 1, 0
    %v2288 = vadd.s32 %v2278, %v2282
    %v2289 = vadd.s32 %v2281, %v2287
    %vm2290 = vc.u32 %v2288, %v2284
    %v2291 = vsel %vm2290, 1, 0
    %v2292 = vadd.s32 %v2288, %v2284
    %v2293 = vadd.s32 %v2289, %v2291
    %v2294 = vadd.s32 %v2293, %v2283
    %v2295 = vadd.s32 %v2294, %v2285
    %v2296 = vmul.u32 %v2251, %v2242
    %v2297 = vadd.s32 %v2273, %v2292
    %vm2298 = vc.u32 %v2273, %v2292
    %v2299 = vadd.s32 %v2295, 1
    %v2300 = vsel %vm2298, %v2299, %v2295
    %v2301 = vadd.s32 %v2296, %v2300
    %v2302 = vadd.s32 %v2301, 536870912
    %v2303 = vshrl.u32 %v2302, 30
    %v2304 = vshll.u32 %v2303, 30
    %v2305 = vsub.s32 %v2301, %v2304
    %vm2306 = vcmp.lt.s32.totalorder %v2305, 0
    %v2307 = vsub.s32 0, %v2305
    %v2308 = vsel %vm2306, %v2307, %v2305
    %v2309 = vclz %v2308
    %v2310 = vsub.s32 %v2309, 2
    %vm2311 = vcmp.gt.s32.totalorder 0, %v2310
    %v2312 = vsel %vm2311, 0, %v2310
    %v2313 = vsub.s32 32, %v2312
    %v2314 = vshll.u32 %v2305, %v2312
    %v2315 = vshrl.u32 %v2297, %v2313
    %v2316 = vor.u32 %v2314, %v2315
    %v2317 = vsub.s32 4294967266, %v2312
    %v2318 = vadd.s32 %v2317, 127
    %v2319 = vshll.u32 %v2318, 23
    %v2320 = vor.u32 4788187, %v2319
    %v2321 = vand.u32 2147483647, %v2320
    %v2323 = vcvt.s32.f32 %v2316
    %v2324 = vmul.f32 %v2323, %v2321
    %v2325 = vxor.u32 %v2324, 2147483648
    %v2326 = vsel %vm2205, %v2325, %v2324
    %v2327 = vsub.s32 4, %v2303
    %v2328 = vsel %vm2205, %v2327, %v2303
    %v2329 = vsel %vm2204, %v180, %v2326
    %v2330 = vsel %vm2204, 0, %v2328
    %v2331 = vmul.f32 %v2329, %v2329
    %v2332 = vmul.f32 %v2331, -0.001358992
    %v2333 = vadd.f32 %v2332, 0.041655596
    %v2334 = vmul.f32 %v2331, %v2333
    %v2335 = vadd.f32 %v2334, -0.4999988
    %v2336 = vmul.f32 %v2331, %v2335
    %v2337 = vadd.f32 1.0, %v2336
    %v2338 = vmul.f32 %v2329, %v2329
    %v2339 = vmul.f32 %v2338, -0.00019511016
    %v2340 = vadd.f32 %v2339, 0.008332121
    %v2341 = vmul.f32 %v2338, %v2340
    %v2342 = vadd.f32 %v2341, -0.16666654
    %v2343 = vmul.f32 %v2338, %v2342
    %v2344 = vadd.f32 %v2343, 1.0
    %v2345 = vmul.f32 %v2344, %v2329
    %vm2346 = vweird.f32 %v180
    %v2347 = vadd.s32 %v2330, 3
    %v2348 = vand.u32 %v2347, 3
    %vm2349 = vcmp.lt.s32.totalorder %v2348, 2
    %vm2350 = vcmp.eq.s32.totalorder %v2348, 0
    %v2351 = vxor.u32 %v2345, 2147483648
    %v2352 = vsel %vm2350, %v2337, %v2351
    %vm2353 = vcmp.eq.s32.totalorder %v2348, 2
    %v2354 = vxor.u32 %v2337, 2147483648
    %v2355 = vsel %vm2353, %v2354, %v2345
    %v2356 = vsel %vm2349, %v2352, %v2355
    %v2357 = vsel %vm2346, nan, %v2356
    %v2358 = vand.u32 2147483647, %v183
    %vm2359 = vcmp.le.f32.partialorder %v2358, 0.7853982
    %vm2360 = vcmp.lt.s32.totalorder %v183, 0
    %v2361 = vand.u32 %v183, 2139095040
    %v2362 = vshrl.u32 %v2361, 23
    %v2363 = vsub.s32 %v2362, 127
    %v2364 = vand.u32 2147483647, %v183
    %v2365 = vand.u32 %v2364, 8388607
    %v2366 = vor.u32 %v2365, 8388608
    %v2367 = vsub.s32 0, %v2366
    %v2368 = vadd.s32 %v2363, 1
    %vm2369 = vcmp.gt.s32.totalorder %v2368, 0
    %v2370 = vsel %vm2369, %v2368, 0
    %v2371 = vshrl.u32 %v2370, 5
    %v2372 = vand.u32 %v2370, 31
    %v2373 = vsub.s32 32, %v2372
    %v2374 = vshrl.u32 683565275, %v2373
    %v2375 = vshll.u32 683565275, %v2372
    %v2376 = vshrl.u32 2475754826, %v2373
    %v2377 = vor.u32 %v2375, %v2376
    %v2378 = vshll.u32 2475754826, %v2372
    %v2379 = vshrl.u32 2131351028, %v2373
    %v2380 = vor.u32 %v2378, %v2379
    %v2381 = vshll.u32 2131351028, %v2372
    %v2382 = vshrl.u32 2102212464, %v2373
    %v2383 = vor.u32 %v2381, %v2382
    %v2384 = vshll.u32 2102212464, %v2372
    %v2385 = vshrl.u32 920167782, %v2373
    %v2386 = vor.u32 %v2384, %v2385
    %v2387 = vshll.u32 920167782, %v2372
    %v2388 = vshrl.u32 1326507024, %v2373
    %v2389 = vor.u32 %v2387, %v2388
    %vm2390 = vcmp.lt.s32.totalorder %v2371, 1
    %vm2391 = vcmp.lt.s32.totalorder %v2371, 2
    %vm2392 = vcmp.lt.s32.totalorder %v2371, 3
    %vm2393 = vcmp.lt.s32.totalorder %v2371, 4
    %v2394 = vsel %vm2390, %v2374, %v2377
    %v2395 = vsel %vm2393, %v2383, 2102212464
    %v2396 = vsel %vm2392, %v2380, %v2395
    %v2397 = vsel %vm2391, %v2394, %v2396
    %v2398 = vsel %vm2390, %v2377, %v2380
    %v2399 = vsel %vm2393, %v2386, 920167782
    %v2400 = vsel %vm2392, %v2383, %v2399
    %v2401 = vsel %vm2391, %v2398, %v2400
    %v2402 = vsel %vm2390, %v2380, %v2383
    %v2403 = vsel %vm2393, %v2389, 1326507024
    %v2404 = vsel %vm2392, %v2386, %v2403
    %v2405 = vsel %vm2391, %v2402, %v2404
    %v2406 = vshll.u32 %v2366, 8
    %v2407 = vand.u32 %v2406, 65535
    %v2408 = vshrl.u32 %v2406, 16
    %v2409 = vand.u32 %v2405, 65535
    %v2410 = vshrl.u32 %v2405, 16
    %v2411 = vmul.u32 %v2407, %v2409
    %v2412 = vmul.u32 %v2407, %v2410
    %v2413 = vmul.u32 %v2408, %v2409
    %v2414 = vmul.u32 %v2408, %v2410
    %v2415 = vshll.u32 %v2412, 16
    %v2416 = vshrl.u32 %v2412, 16
    %v2417 = vshll.u32 %v2413, 16
    %v2418 = vshrl.u32 %v2413, 16
    %vm2419 = vc.u32 %v2411, %v2415
    %v2420 = vsel %vm2419, 1, 0
    %v2421 = vadd.s32 %v2411, %v2415
    %v2422 = vadd.s32 %v2414, %v2420
    %vm2423 = vc.u32 %v2421, %v2417
    %v2424 = vsel %vm2423, 1, 0
    %v2425 = vadd.s32 %v2421, %v2417
    %v2426 = vadd.s32 %v2422, %v2424
    %v2427 = vadd.s32 %v2426, %v2416
    %v2428 = vadd.s32 %v2427, %v2418
    %v2429 = vand.u32 %v2406, 65535
    %v2430 = vshrl.u32 %v2406, 16
    %v2431 = vand.u32 %v2401, 65535
    %v2432 = vshrl.u32 %v2401, 16
    %v2433 = vmul.u32 %v2429, %v2431
    %v2434 = vmul.u32 %v2429, %v2432
    %v2435 = vmul.u32 %v2430, %v2431
    %v2436 = vmul.u32 %v2430, %v2432
    %v2437 = vshll.u32 %v2434, 16
    %v2438 = vshrl.u32 %v2434, 16
    %v2439 = vshll.u32 %v2435, 16
    %v2440 = vshrl.u32 %v2435, 16
    %vm2441 = vc.u32 %v2433, %v2437
    %v2442 = vsel %vm2441, 1, 0
    %v2443 = vadd.s32 %v2433, %v2437
    %v2444 = vadd.s32 %v2436, %v2442
    %vm2445 = vc.u32 %v2443, %v2439
    %v2446 = vsel %vm2445, 1, 0
    %v2447 = vadd.s32 %v2443, %v2439
    %v2448 = vadd.s32 %v2444, %v2446
    %v2449 = vadd.s32 %v2448, %v2438
    %v2450 = vadd.s32 %v2449, %v2440
    %v2451 = vmul.u32 %v2406, %v2397
    %v2452 = vadd.s32 %v2428, %v2447
    %vm2453 = vc.u32 %v2428, %v2447
    %v2454 = vadd.s32 %v2450, 1
    %v2455 = vsel %vm2453, %v2454, %v2450
    %v2456 = vadd.s32 %v2451, %v2455
    %v2457 = vadd.s32 %v2456, 536870912
    %v2458 = vshrl.u32 %v2457, 30
    %v2459 = vshll.u32 %v2458, 30
    %v2460 = vsub.s32 %v2456, %v2459
    %vm2461 = vcmp.lt.s32.totalorder %v2460, 0
    %v2462 = vsub.s32 0, %v2460
    %v2463 = vsel %vm2461, %v2462, %v2460
    %v2464 = vclz %v2463
    %v2465 = vsub.s32 %v2464, 2
    %vm2466 = vcmp.gt.s32.totalorder 0, %v2465
    %v2467 = vsel %vm2466, 0, %v2465
    %v2468 = vsub.s32 32, %v2467
    %v2469 = vshll.u32 %v2460, %v2467
    %v2470 = vshrl.u32 %v2452, %v2468
    %v2471 = vor.u32 %v2469, %v2470
    %v2472 = vsub.s32 4294967266, %v2467
    %v2473 = vadd.s32 %v2472, 127
    %v2474 = vshll.u32 %v2473, 23
    %v2475 = vor.u32 4788187, %v2474
    %v2476 = vand.u32 2147483647, %v2475
    %v2478 = vcvt.s32.f32 %v2471
    %v2479 = vmul.f32 %v2478, %v2476
    %v2480 = vxor.u32 %v2479, 2147483648
    %v2481 = vsel %vm2360, %v2480, %v2479
    %v2482 = vsub.s32 4, %v2458
    %v2483 = vsel %vm2360, %v2482, %v2458
    %v2484 = vsel %vm2359, %v183, %v2481
    %v2485 = vsel %vm2359, 0, %v2483
    %v2486 = vmul.f32 %v2484, %v2484
    %v2487 = vmul.f32 %v2486, -0.001358992
    %v2488 = vadd.f32 %v2487, 0.041655596
    %v2489 = vmul.f32 %v2486, %v2488
    %v2490 = vadd.f32 %v2489, -0.4999988
    %v2491 = vmul.f32 %v2486, %v2490
    %v2492 = vadd.f32 1.0, %v2491
    %v2493 = vmul.f32 %v2484, %v2484
    %v2494 = vmul.f32 %v2493, -0.00019511016
    %v2495 = vadd.f32 %v2494, 0.008332121
    %v2496 = vmul.f32 %v2493, %v2495
    %v2497 = vadd.f32 %v2496, -0.16666654
    %v2498 = vmul.f32 %v2493, %v2497
    %v2499 = vadd.f32 %v2498, 1.0
    %v2500 = vmul.f32 %v2499, %v2484
    %vm2501 = vweird.f32 %v183
    %v2502 = vadd.s32 %v2485, 3
    %v2503 = vand.u32 %v2502, 3
    %vm2504 = vcmp.lt.s32.totalorder %v2503, 2
    %vm2505 = vcmp.eq.s32.totalorder %v2503, 0
    %v2506 = vxor.u32 %v2500, 2147483648
    %v2507 = vsel %vm2505, %v2492, %v2506
    %vm2508 = vcmp.eq.s32.totalorder %v2503, 2
    %v2509 = vxor.u32 %v2492, 2147483648
    %v2510 = vsel %vm2508, %v2509, %v2500
    %v2511 = vsel %vm2504, %v2507, %v2510
    %v2512 = vsel %vm2501, nan, %v2511
    %v2513 = vand.u32 2147483647, %v186
    %vm2514 = vcmp.le.f32.partialorder %v2513, 0.7853982
    %vm2515 = vcmp.lt.s32.totalorder %v186, 0
    %v2516 = vand.u32 %v186, 2139095040
    %v2517 = vshrl.u32 %v2516, 23
    %v2518 = vsub.s32 %v2517, 127
    %v2519 = vand.u32 2147483647, %v186
    %v2520 = vand.u32 %v2519, 8388607
    %v2521 = vor.u32 %v2520, 8388608
    %v2522 = vsub.s32 0, %v2521
    %v2523 = vadd.s32 %v2518, 1
    %vm2524 = vcmp.gt.s32.totalorder %v2523, 0
    %v2525 = vsel %vm2524, %v2523, 0
    %v2526 = vshrl.u32 %v2525, 5
    %v2527 = vand.u32 %v2525, 31
    %v2528 = vsub.s32 32, %v2527
    %v2529 = vshrl.u32 683565275, %v2528
    %v2530 = vshll.u32 683565275, %v2527
    %v2531 = vshrl.u32 2475754826, %v2528
    %v2532 = vor.u32 %v2530, %v2531
    %v2533 = vshll.u32 2475754826, %v2527
    %v2534 = vshrl.u32 2131351028, %v2528
    %v2535 = vor.u32 %v2533, %v2534
    %v2536 = vshll.u32 2131351028, %v2527
    %v2537 = vshrl.u32 2102212464, %v2528
    %v2538 = vor.u32 %v2536, %v2537
    %v2539 = vshll.u32 2102212464, %v2527
    %v2540 = vshrl.u32 920167782, %v2528
    %v2541 = vor.u32 %v2539, %v2540
    %v2542 = vshll.u32 920167782, %v2527
    %v2543 = vshrl.u32 1326507024, %v2528
    %v2544 = vor.u32 %v2542, %v2543
    %vm2545 = vcmp.lt.s32.totalorder %v2526, 1
    %vm2546 = vcmp.lt.s32.totalorder %v2526, 2
    %vm2547 = vcmp.lt.s32.totalorder %v2526, 3
    %vm2548 = vcmp.lt.s32.totalorder %v2526, 4
    %v2549 = vsel %vm2545, %v2529, %v2532
    %v2550 = vsel %vm2548, %v2538, 2102212464
    %v2551 = vsel %vm2547, %v2535, %v2550
    %v2552 = vsel %vm2546, %v2549, %v2551
    %v2553 = vsel %vm2545, %v2532, %v2535
    %v2554 = vsel %vm2548, %v2541, 920167782
    %v2555 = vsel %vm2547, %v2538, %v2554
    %v2556 = vsel %vm2546, %v2553, %v2555
    %v2557 = vsel %vm2545, %v2535, %v2538
    %v2558 = vsel %vm2548, %v2544, 1326507024
    %v2559 = vsel %vm2547, %v2541, %v2558
    %v2560 = vsel %vm2546, %v2557, %v2559
    %v2561 = vshll.u32 %v2521, 8
    %v2562 = vand.u32 %v2561, 65535
    %v2563 = vshrl.u32 %v2561, 16
    %v2564 = vand.u32 %v2560, 65535
    %v2565 = vshrl.u32 %v2560, 16
    %v2566 = vmul.u32 %v2562, %v2564
    %v2567 = vmul.u32 %v2562, %v2565
    %v2568 = vmul.u32 %v2563, %v2564
    %v2569 = vmul.u32 %v2563, %v2565
    %v2570 = vshll.u32 %v2567, 16
    %v2571 = vshrl.u32 %v2567, 16
    %v2572 = vshll.u32 %v2568, 16
    %v2573 = vshrl.u32 %v2568, 16
    %vm2574 = vc.u32 %v2566, %v2570
    %v2575 = vsel %vm2574, 1, 0
    %v2576 = vadd.s32 %v2566, %v2570
    %v2577 = vadd.s32 %v2569, %v2575
    %vm2578 = vc.u32 %v2576, %v2572
    %v2579 = vsel %vm2578, 1, 0
    %v2580 = vadd.s32 %v2576, %v2572
    %v2581 = vadd.s32 %v2577, %v2579
    %v2582 = vadd.s32 %v2581, %v2571
    %v2583 = vadd.s32 %v2582, %v2573
    %v2584 = vand.u32 %v2561, 65535
    %v2585 = vshrl.u32 %v2561, 16
    %v2586 = vand.u32 %v2556, 65535
    %v2587 = vshrl.u32 %v2556, 16
    %v2588 = vmul.u32 %v2584, %v2586
    %v2589 = vmul.u32 %v2584, %v2587
    %v2590 = vmul.u32 %v2585, %v2586
    %v2591 = vmul.u32 %v2585, %v2587
    %v2592 = vshll.u32 %v2589, 16
    %v2593 = vshrl.u32 %v2589, 16
    %v2594 = vshll.u32 %v2590, 16
    %v2595 = vshrl.u32 %v2590, 16
    %vm2596 = vc.u32 %v2588, %v2592
    %v2597 = vsel %vm2596, 1, 0
    %v2598 = vadd.s32 %v2588, %v2592
    %v2599 = vadd.s32 %v2591, %v2597
    %vm2600 = vc.u32 %v2598, %v2594
    %v2601 = vsel %vm2600, 1, 0
    %v2602 = vadd.s32 %v2598, %v2594
    %v2603 = vadd.s32 %v2599, %v2601
    %v2604 = vadd.s32 %v2603, %v2593
    %v2605 = vadd.s32 %v2604, %v2595
    %v2606 = vmul.u32 %v2561, %v2552
    %v2607 = vadd.s32 %v2583, %v2602
    %vm2608 = vc.u32 %v2583, %v2602
    %v2609 = vadd.s32 %v2605, 1
    %v2610 = vsel %vm2608, %v2609, %v2605
    %v2611 = vadd.s32 %v2606, %v2610
    %v2612 = vadd.s32 %v2611, 536870912
    %v2613 = vshrl.u32 %v2612, 30
    %v2614 = vshll.u32 %v2613, 30
    %v2615 = vsub.s32 %v2611, %v2614
    %vm2616 = vcmp.lt.s32.totalorder %v2615, 0
    %v2617 = vsub.s32 0, %v2615
    %v2618 = vsel %vm2616, %v2617, %v2615
    %v2619 = vclz %v2618
    %v2620 = vsub.s32 %v2619, 2
    %vm2621 = vcmp.gt.s32.totalorder 0, %v2620
    %v2622 = vsel %vm2621, 0, %v2620
    %v2623 = vsub.s32 32, %v2622
    %v2624 = vshll.u32 %v2615, %v2622
    %v2625 = vshrl.u32 %v2607, %v2623
    %v2626 = vor.u32 %v2624, %v2625
    %v2627 = vsub.s32 4294967266, %v2622
    %v2628 = vadd.s32 %v2627, 127
    %v2629 = vshll.u32 %v2628, 23
    %v2630 = vor.u32 4788187, %v2629
    %v2631 = vand.u32 2147483647, %v2630
    %v2633 = vcvt.s32.f32 %v2626
    %v2634 = vmul.f32 %v2633, %v2631
    %v2635 = vxor.u32 %v2634, 2147483648
    %v2636 = vsel %vm2515, %v2635, %v2634
    %v2637 = vsub.s32 4, %v2613
    %v2638 = vsel %vm2515, %v2637, %v2613
    %v2639 = vsel %vm2514, %v186, %v2636
    %v2640 = vsel %vm2514, 0, %v2638
    %v2641 = vmul.f32 %v2639, %v2639
    %v2642 = vmul.f32 %v2641, -0.001358992
    %v2643 = vadd.f32 %v2642, 0.041655596
    %v2644 = vmul.f32 %v2641, %v2643
    %v2645 = vadd.f32 %v2644, -0.4999988
    %v2646 = vmul.f32 %v2641, %v2645
    %v2647 = vadd.f32 1.0, %v2646
    %v2648 = vmul.f32 %v2639, %v2639
    %v2649 = vmul.f32 %v2648, -0.00019511016
    %v2650 = vadd.f32 %v2649, 0.008332121
    %v2651 = vmul.f32 %v2648, %v2650
    %v2652 = vadd.f32 %v2651, -0.16666654
    %v2653 = vmul.f32 %v2648, %v2652
    %v2654 = vadd.f32 %v2653, 1.0
    %v2655 = vmul.f32 %v2654, %v2639
    %vm2656 = vweird.f32 %v186
    %v2657 = vadd.s32 %v2640, 3
    %v2658 = vand.u32 %v2657, 3
    %vm2659 = vcmp.lt.s32.totalorder %v2658, 2
    %vm2660 = vcmp.eq.s32.totalorder %v2658, 0
    %v2661 = vxor.u32 %v2655, 2147483648
    %v2662 = vsel %vm2660, %v2647, %v2661
    %vm2663 = vcmp.eq.s32.totalorder %v2658, 2
    %v2664 = vxor.u32 %v2647, 2147483648
    %v2665 = vsel %vm2663, %v2664, %v2655
    %v2666 = vsel %vm2659, %v2662, %v2665
    %v2667 = vsel %vm2656, nan, %v2666
    %v2668 = vpack.c.bf16 %v497, %v342
    %v2669 = vpack.c.bf16 %v807, %v652
    %v2670 = vpack.c.bf16 %v1117, %v962
    %v2671 = vpack.c.bf16 %v1427, %v1272
    %v2672 = vpack.c.bf16 %v1737, %v1582
    %v2673 = vpack.c.bf16 %v2047, %v1892
    %v2674 = vpack.c.bf16 %v2357, %v2202
    %v2675 = vpack.c.bf16 %v2667, %v2512
    %v2676 = vld [vmem:[%s5] sm:$0xf]
    %v2677 = vld [vmem:[%s5 + $0x4] sm:$0xf]
    %v2678 = vld [vmem:[%s5 + $0x8] sm:$0xf]
    %v2679 = vld [vmem:[%s5 + $0xc] sm:$0xf]
    %v2680 = vld [vmem:[%s5 + $0x10] sm:$0xf]
    %v2681 = vld [vmem:[%s5 + $0x14] sm:$0xf]
    %v2682 = vld [vmem:[%s6] sm:$0x1]
    %v2684 = vperm.slane %v2682, 0
    %v2692 = vunpack.c.l.b16 %v2676
    %v2693 = vunpack.c.l.b16 %v2677
    %v2694 = vunpack.c.l.b16 %v2678
    %v2695 = vunpack.c.l.b16 %v2679
    %v2696 = vunpack.c.l.b16 %v2680
    %v2697 = vunpack.c.l.b16 %v2681
    %v2698 = vpack.c.b16 %v2693, %v2692
    %v2699 = vpack.c.b16 %v2695, %v2694
    %v2700 = vpack.c.b16 %v2697, %v2696
    %vm2704 = vcmask 392192
    %v2706 = vsel %vm2704, %v2668, 0
    %v2709 = vsel %vm2704, %v2669, 0
    %v2712 = vsel %vm2704, %v2670, 0
    %v2715 = vsel %vm2704, %v2671, 0
    %v2718 = vsel %vm2704, %v2672, 0
    %v2721 = vsel %vm2704, %v2673, 0
    %v2724 = vsel %vm2704, %v2674, 0
    %v2727 = vsel %vm2704, %v2675, 0
    %2729 = vmatpush.bf16.msra.mxu0 0
    %2730 = vmatpush.bf16.msra.mxu0 0
    %2731 = vmatpush.bf16.msra.mxu0 0
    %2732 = vmatpush.bf16.msra.mxu0 0
    %2733 = vmatpush.bf16.msra.mxu0 0
    %2734 = vmatpush.bf16.msra.mxu0 %v2700
    %2735 = vmatpush.bf16.msra.mxu0 %v2699
    %2736 = vmatpush.bf16.msra.mxu0 %v2698
    %2737 = vmatmul.bf16.gmra.mxu0 %v2706
    %v2738 = vpop.f32.mrf.mxu0
    %v2739 = vadd.f32 %v2684, %v2738
    %v2740 = vpop.f32.mrf.mxu0
    %v2741 = vadd.f32 %v2684, %v2740
    %2742 = vmatmul.bf16.gmra.mxu0 %v2709
    %v2743 = vpop.f32.mrf.mxu0
    %v2744 = vadd.f32 %v2684, %v2743
    %v2745 = vpop.f32.mrf.mxu0
    %v2746 = vadd.f32 %v2684, %v2745
    %2747 = vmatmul.bf16.gmra.mxu0 %v2712
    %v2748 = vpop.f32.mrf.mxu0
    %v2749 = vadd.f32 %v2684, %v2748
    %v2750 = vpop.f32.mrf.mxu0
    %v2751 = vadd.f32 %v2684, %v2750
    %2752 = vmatmul.bf16.gmra.mxu0 %v2715
    %v2753 = vpop.f32.mrf.mxu0
    %v2754 = vadd.f32 %v2684, %v2753
    %v2755 = vpop.f32.mrf.mxu0
    %v2756 = vadd.f32 %v2684, %v2755
    %2757 = vmatmul.bf16.gmra.mxu0 %v2718
    %v2758 = vpop.f32.mrf.mxu0
    %v2759 = vadd.f32 %v2684, %v2758
    %v2760 = vpop.f32.mrf.mxu0
    %v2761 = vadd.f32 %v2684, %v2760
    %2762 = vmatmul.bf16.gmra.mxu0 %v2721
    %v2763 = vpop.f32.mrf.mxu0
    %v2764 = vadd.f32 %v2684, %v2763
    %v2765 = vpop.f32.mrf.mxu0
    %v2766 = vadd.f32 %v2684, %v2765
    %2767 = vmatmul.bf16.gmra.mxu0 %v2724
    %v2768 = vpop.f32.mrf.mxu0
    %v2769 = vadd.f32 %v2684, %v2768
    %v2770 = vpop.f32.mrf.mxu0
    %v2771 = vadd.f32 %v2684, %v2770
    %2772 = vmatmul.bf16.gmra.mxu0 %v2727
    %v2773 = vpop.f32.mrf.mxu0
    %v2774 = vadd.f32 %v2684, %v2773
    %v2775 = vpop.f32.mrf.mxu0
    %v2776 = vadd.f32 %v2684, %v2775
    %2777 = vdwg.mxu0
    %v2778 = vxor.u32 %v2739, 2147483648
    %v2779 = vxor.u32 %v2741, 2147483648
    %v2780 = vxor.u32 %v2744, 2147483648
    %v2781 = vxor.u32 %v2746, 2147483648
    %v2782 = vxor.u32 %v2749, 2147483648
    %v2783 = vxor.u32 %v2751, 2147483648
    %v2784 = vxor.u32 %v2754, 2147483648
    %v2785 = vxor.u32 %v2756, 2147483648
    %v2786 = vxor.u32 %v2759, 2147483648
    %v2787 = vxor.u32 %v2761, 2147483648
    %v2788 = vxor.u32 %v2764, 2147483648
    %v2789 = vxor.u32 %v2766, 2147483648
    %v2790 = vxor.u32 %v2769, 2147483648
    %v2791 = vxor.u32 %v2771, 2147483648
    %v2792 = vxor.u32 %v2774, 2147483648
    %v2793 = vxor.u32 %v2776, 2147483648
    %v2794 = vmul.f32 %v2778, 1.442695
    %v2795 = vpow.pop %v2794
    %v2796 = vmul.f32 %v2779, 1.442695
    %v2797 = vpow.pop %v2796
    %v2798 = vmul.f32 %v2780, 1.442695
    %v2799 = vpow.pop %v2798
    %v2800 = vmul.f32 %v2781, 1.442695
    %v2801 = vpow.pop %v2800
    %v2802 = vmul.f32 %v2782, 1.442695
    %v2803 = vpow.pop %v2802
    %v2804 = vmul.f32 %v2783, 1.442695
    %v2805 = vpow.pop %v2804
    %v2806 = vmul.f32 %v2784, 1.442695
    %v2807 = vpow.pop %v2806
    %v2808 = vmul.f32 %v2785, 1.442695
    %v2809 = vpow.pop %v2808
    %v2810 = vmul.f32 %v2786, 1.442695
    %v2811 = vpow.pop %v2810
    %v2812 = vmul.f32 %v2787, 1.442695
    %v2813 = vpow.pop %v2812
    %v2814 = vmul.f32 %v2788, 1.442695
    %v2815 = vpow.pop %v2814
    %v2816 = vmul.f32 %v2789, 1.442695
    %v2817 = vpow.pop %v2816
    %v2818 = vmul.f32 %v2790, 1.442695
    %v2819 = vpow.pop %v2818
    %v2820 = vmul.f32 %v2791, 1.442695
    %v2821 = vpow.pop %v2820
    %v2822 = vmul.f32 %v2792, 1.442695
    %v2823 = vpow.pop %v2822
    %v2824 = vmul.f32 %v2793, 1.442695
    %v2825 = vpow.pop %v2824
    %v2826 = vadd.f32 %v2795, 1.0
    %v2827 = vadd.f32 %v2797, 1.0
    %v2828 = vadd.f32 %v2799, 1.0
    %v2829 = vadd.f32 %v2801, 1.0
    %v2830 = vadd.f32 %v2803, 1.0
    %v2831 = vadd.f32 %v2805, 1.0
    %v2832 = vadd.f32 %v2807, 1.0
    %v2833 = vadd.f32 %v2809, 1.0
    %v2834 = vadd.f32 %v2811, 1.0
    %v2835 = vadd.f32 %v2813, 1.0
    %v2836 = vadd.f32 %v2815, 1.0
    %v2837 = vadd.f32 %v2817, 1.0
    %v2838 = vadd.f32 %v2819, 1.0
    %v2839 = vadd.f32 %v2821, 1.0
    %v2840 = vadd.f32 %v2823, 1.0
    %v2841 = vadd.f32 %v2825, 1.0
    %v2842 = vrcp.pop %v2826
    %v2843 = vmul.f32 %v2826, %v2842
    %v2844 = vsub.f32 1.0, %v2843
    %v2845 = vmul.f32 %v2842, %v2844
    %v2846 = vadd.f32 %v2842, %v2845
    %vm2847 = vweird.f32 %v2826
    %vm2848 = vweird.f32 %v2842
    %vm2849 = vmor %vm2847, %vm2848
    %v2850 = vsel %vm2849, %v2842, %v2846
    %v2851 = vand.u32 2147483647, %v2826
    %vm2852 = vcmp.eq.f32.partialorder %v2851, 8.507059e+37
    %v2853 = vand.u32 %v2826, 2147483648
    %v2854 = vor.u32 1.1754944e-38, %v2853
    %v2855 = vsel %vm2852, %v2854, %v2850
    %v2856 = vmul.f32 1.0, %v2855
    %v2857 = vrcp.pop %v2827
    %v2858 = vmul.f32 %v2827, %v2857
    %v2859 = vsub.f32 1.0, %v2858
    %v2860 = vmul.f32 %v2857, %v2859
    %v2861 = vadd.f32 %v2857, %v2860
    %vm2862 = vweird.f32 %v2827
    %vm2863 = vweird.f32 %v2857
    %vm2864 = vmor %vm2862, %vm2863
    %v2865 = vsel %vm2864, %v2857, %v2861
    %v2866 = vand.u32 2147483647, %v2827
    %vm2867 = vcmp.eq.f32.partialorder %v2866, 8.507059e+37
    %v2868 = vand.u32 %v2827, 2147483648
    %v2869 = vor.u32 1.1754944e-38, %v2868
    %v2870 = vsel %vm2867, %v2869, %v2865
    %v2871 = vmul.f32 1.0, %v2870
    %v2872 = vrcp.pop %v2828
    %v2873 = vmul.f32 %v2828, %v2872
    %v2874 = vsub.f32 1.0, %v2873
    %v2875 = vmul.f32 %v2872, %v2874
    %v2876 = vadd.f32 %v2872, %v2875
    %vm2877 = vweird.f32 %v2828
    %vm2878 = vweird.f32 %v2872
    %vm2879 = vmor %vm2877, %vm2878
    %v2880 = vsel %vm2879, %v2872, %v2876
    %v2881 = vand.u32 2147483647, %v2828
    %vm2882 = vcmp.eq.f32.partialorder %v2881, 8.507059e+37
    %v2883 = vand.u32 %v2828, 2147483648
    %v2884 = vor.u32 1.1754944e-38, %v2883
    %v2885 = vsel %vm2882, %v2884, %v2880
    %v2886 = vmul.f32 1.0, %v2885
    %v2887 = vrcp.pop %v2829
    %v2888 = vmul.f32 %v2829, %v2887
    %v2889 = vsub.f32 1.0, %v2888
    %v2890 = vmul.f32 %v2887, %v2889
    %v2891 = vadd.f32 %v2887, %v2890
    %vm2892 = vweird.f32 %v2829
    %vm2893 = vweird.f32 %v2887
    %vm2894 = vmor %vm2892, %vm2893
    %v2895 = vsel %vm2894, %v2887, %v2891
    %v2896 = vand.u32 2147483647, %v2829
    %vm2897 = vcmp.eq.f32.partialorder %v2896, 8.507059e+37
    %v2898 = vand.u32 %v2829, 2147483648
    %v2899 = vor.u32 1.1754944e-38, %v2898
    %v2900 = vsel %vm2897, %v2899, %v2895
    %v2901 = vmul.f32 1.0, %v2900
    %v2902 = vrcp.pop %v2830
    %v2903 = vmul.f32 %v2830, %v2902
    %v2904 = vsub.f32 1.0, %v2903
    %v2905 = vmul.f32 %v2902, %v2904
    %v2906 = vadd.f32 %v2902, %v2905
    %vm2907 = vweird.f32 %v2830
    %vm2908 = vweird.f32 %v2902
    %vm2909 = vmor %vm2907, %vm2908
    %v2910 = vsel %vm2909, %v2902, %v2906
    %v2911 = vand.u32 2147483647, %v2830
    %vm2912 = vcmp.eq.f32.partialorder %v2911, 8.507059e+37
    %v2913 = vand.u32 %v2830, 2147483648
    %v2914 = vor.u32 1.1754944e-38, %v2913
    %v2915 = vsel %vm2912, %v2914, %v2910
    %v2916 = vmul.f32 1.0, %v2915
    %v2917 = vrcp.pop %v2831
    %v2918 = vmul.f32 %v2831, %v2917
    %v2919 = vsub.f32 1.0, %v2918
    %v2920 = vmul.f32 %v2917, %v2919
    %v2921 = vadd.f32 %v2917, %v2920
    %vm2922 = vweird.f32 %v2831
    %vm2923 = vweird.f32 %v2917
    %vm2924 = vmor %vm2922, %vm2923
    %v2925 = vsel %vm2924, %v2917, %v2921
    %v2926 = vand.u32 2147483647, %v2831
    %vm2927 = vcmp.eq.f32.partialorder %v2926, 8.507059e+37
    %v2928 = vand.u32 %v2831, 2147483648
    %v2929 = vor.u32 1.1754944e-38, %v2928
    %v2930 = vsel %vm2927, %v2929, %v2925
    %v2931 = vmul.f32 1.0, %v2930
    %v2932 = vrcp.pop %v2832
    %v2933 = vmul.f32 %v2832, %v2932
    %v2934 = vsub.f32 1.0, %v2933
    %v2935 = vmul.f32 %v2932, %v2934
    %v2936 = vadd.f32 %v2932, %v2935
    %vm2937 = vweird.f32 %v2832
    %vm2938 = vweird.f32 %v2932
    %vm2939 = vmor %vm2937, %vm2938
    %v2940 = vsel %vm2939, %v2932, %v2936
    %v2941 = vand.u32 2147483647, %v2832
    %vm2942 = vcmp.eq.f32.partialorder %v2941, 8.507059e+37
    %v2943 = vand.u32 %v2832, 2147483648
    %v2944 = vor.u32 1.1754944e-38, %v2943
    %v2945 = vsel %vm2942, %v2944, %v2940
    %v2946 = vmul.f32 1.0, %v2945
    %v2947 = vrcp.pop %v2833
    %v2948 = vmul.f32 %v2833, %v2947
    %v2949 = vsub.f32 1.0, %v2948
    %v2950 = vmul.f32 %v2947, %v2949
    %v2951 = vadd.f32 %v2947, %v2950
    %vm2952 = vweird.f32 %v2833
    %vm2953 = vweird.f32 %v2947
    %vm2954 = vmor %vm2952, %vm2953
    %v2955 = vsel %vm2954, %v2947, %v2951
    %v2956 = vand.u32 2147483647, %v2833
    %vm2957 = vcmp.eq.f32.partialorder %v2956, 8.507059e+37
    %v2958 = vand.u32 %v2833, 2147483648
    %v2959 = vor.u32 1.1754944e-38, %v2958
    %v2960 = vsel %vm2957, %v2959, %v2955
    %v2961 = vmul.f32 1.0, %v2960
    %v2962 = vrcp.pop %v2834
    %v2963 = vmul.f32 %v2834, %v2962
    %v2964 = vsub.f32 1.0, %v2963
    %v2965 = vmul.f32 %v2962, %v2964
    %v2966 = vadd.f32 %v2962, %v2965
    %vm2967 = vweird.f32 %v2834
    %vm2968 = vweird.f32 %v2962
    %vm2969 = vmor %vm2967, %vm2968
    %v2970 = vsel %vm2969, %v2962, %v2966
    %v2971 = vand.u32 2147483647, %v2834
    %vm2972 = vcmp.eq.f32.partialorder %v2971, 8.507059e+37
    %v2973 = vand.u32 %v2834, 2147483648
    %v2974 = vor.u32 1.1754944e-38, %v2973
    %v2975 = vsel %vm2972, %v2974, %v2970
    %v2976 = vmul.f32 1.0, %v2975
    %v2977 = vrcp.pop %v2835
    %v2978 = vmul.f32 %v2835, %v2977
    %v2979 = vsub.f32 1.0, %v2978
    %v2980 = vmul.f32 %v2977, %v2979
    %v2981 = vadd.f32 %v2977, %v2980
    %vm2982 = vweird.f32 %v2835
    %vm2983 = vweird.f32 %v2977
    %vm2984 = vmor %vm2982, %vm2983
    %v2985 = vsel %vm2984, %v2977, %v2981
    %v2986 = vand.u32 2147483647, %v2835
    %vm2987 = vcmp.eq.f32.partialorder %v2986, 8.507059e+37
    %v2988 = vand.u32 %v2835, 2147483648
    %v2989 = vor.u32 1.1754944e-38, %v2988
    %v2990 = vsel %vm2987, %v2989, %v2985
    %v2991 = vmul.f32 1.0, %v2990
    %v2992 = vrcp.pop %v2836
    %v2993 = vmul.f32 %v2836, %v2992
    %v2994 = vsub.f32 1.0, %v2993
    %v2995 = vmul.f32 %v2992, %v2994
    %v2996 = vadd.f32 %v2992, %v2995
    %vm2997 = vweird.f32 %v2836
    %vm2998 = vweird.f32 %v2992
    %vm2999 = vmor %vm2997, %vm2998
    %v3000 = vsel %vm2999, %v2992, %v2996
    %v3001 = vand.u32 2147483647, %v2836
    %vm3002 = vcmp.eq.f32.partialorder %v3001, 8.507059e+37
    %v3003 = vand.u32 %v2836, 2147483648
    %v3004 = vor.u32 1.1754944e-38, %v3003
    %v3005 = vsel %vm3002, %v3004, %v3000
    %v3006 = vmul.f32 1.0, %v3005
    %v3007 = vrcp.pop %v2837
    %v3008 = vmul.f32 %v2837, %v3007
    %v3009 = vsub.f32 1.0, %v3008
    %v3010 = vmul.f32 %v3007, %v3009
    %v3011 = vadd.f32 %v3007, %v3010
    %vm3012 = vweird.f32 %v2837
    %vm3013 = vweird.f32 %v3007
    %vm3014 = vmor %vm3012, %vm3013
    %v3015 = vsel %vm3014, %v3007, %v3011
    %v3016 = vand.u32 2147483647, %v2837
    %vm3017 = vcmp.eq.f32.partialorder %v3016, 8.507059e+37
    %v3018 = vand.u32 %v2837, 2147483648
    %v3019 = vor.u32 1.1754944e-38, %v3018
    %v3020 = vsel %vm3017, %v3019, %v3015
    %v3021 = vmul.f32 1.0, %v3020
    %v3022 = vrcp.pop %v2838
    %v3023 = vmul.f32 %v2838, %v3022
    %v3024 = vsub.f32 1.0, %v3023
    %v3025 = vmul.f32 %v3022, %v3024
    %v3026 = vadd.f32 %v3022, %v3025
    %vm3027 = vweird.f32 %v2838
    %vm3028 = vweird.f32 %v3022
    %vm3029 = vmor %vm3027, %vm3028
    %v3030 = vsel %vm3029, %v3022, %v3026
    %v3031 = vand.u32 2147483647, %v2838
    %vm3032 = vcmp.eq.f32.partialorder %v3031, 8.507059e+37
    %v3033 = vand.u32 %v2838, 2147483648
    %v3034 = vor.u32 1.1754944e-38, %v3033
    %v3035 = vsel %vm3032, %v3034, %v3030
    %v3036 = vmul.f32 1.0, %v3035
    %v3037 = vrcp.pop %v2839
    %v3038 = vmul.f32 %v2839, %v3037
    %v3039 = vsub.f32 1.0, %v3038
    %v3040 = vmul.f32 %v3037, %v3039
    %v3041 = vadd.f32 %v3037, %v3040
    %vm3042 = vweird.f32 %v2839
    %vm3043 = vweird.f32 %v3037
    %vm3044 = vmor %vm3042, %vm3043
    %v3045 = vsel %vm3044, %v3037, %v3041
    %v3046 = vand.u32 2147483647, %v2839
    %vm3047 = vcmp.eq.f32.partialorder %v3046, 8.507059e+37
    %v3048 = vand.u32 %v2839, 2147483648
    %v3049 = vor.u32 1.1754944e-38, %v3048
    %v3050 = vsel %vm3047, %v3049, %v3045
    %v3051 = vmul.f32 1.0, %v3050
    %v3052 = vrcp.pop %v2840
    %v3053 = vmul.f32 %v2840, %v3052
    %v3054 = vsub.f32 1.0, %v3053
    %v3055 = vmul.f32 %v3052, %v3054
    %v3056 = vadd.f32 %v3052, %v3055
    %vm3057 = vweird.f32 %v2840
    %vm3058 = vweird.f32 %v3052
    %vm3059 = vmor %vm3057, %vm3058
    %v3060 = vsel %vm3059, %v3052, %v3056
    %v3061 = vand.u32 2147483647, %v2840
    %vm3062 = vcmp.eq.f32.partialorder %v3061, 8.507059e+37
    %v3063 = vand.u32 %v2840, 2147483648
    %v3064 = vor.u32 1.1754944e-38, %v3063
    %v3065 = vsel %vm3062, %v3064, %v3060
    %v3066 = vmul.f32 1.0, %v3065
    %v3067 = vrcp.pop %v2841
    %v3068 = vmul.f32 %v2841, %v3067
    %v3069 = vsub.f32 1.0, %v3068
    %v3070 = vmul.f32 %v3067, %v3069
    %v3071 = vadd.f32 %v3067, %v3070
    %vm3072 = vweird.f32 %v2841
    %vm3073 = vweird.f32 %v3067
    %vm3074 = vmor %vm3072, %vm3073
    %v3075 = vsel %vm3074, %v3067, %v3071
    %v3076 = vand.u32 2147483647, %v2841
    %vm3077 = vcmp.eq.f32.partialorder %v3076, 8.507059e+37
    %v3078 = vand.u32 %v2841, 2147483648
    %v3079 = vor.u32 1.1754944e-38, %v3078
    %v3080 = vsel %vm3077, %v3079, %v3075
    %v3081 = vmul.f32 1.0, %v3080
    %v3082 = vmul.f32 %v2739, %v2856
    %v3083 = vmul.f32 %v2741, %v2871
    %v3084 = vmul.f32 %v2744, %v2886
    %v3085 = vmul.f32 %v2746, %v2901
    %v3086 = vmul.f32 %v2749, %v2916
    %v3087 = vmul.f32 %v2751, %v2931
    %v3088 = vmul.f32 %v2754, %v2946
    %v3089 = vmul.f32 %v2756, %v2961
    %v3090 = vmul.f32 %v2759, %v2976
    %v3091 = vmul.f32 %v2761, %v2991
    %v3092 = vmul.f32 %v2764, %v3006
    %v3093 = vmul.f32 %v2766, %v3021
    %v3094 = vmul.f32 %v2769, %v3036
    %v3095 = vmul.f32 %v2771, %v3051
    %v3096 = vmul.f32 %v2774, %v3066
    %v3097 = vmul.f32 %v2776, %v3081
    %v3098 = vpack.c.bf16 %v3083, %v3082
    %v3099 = vpack.c.bf16 %v3085, %v3084
    %v3100 = vpack.c.bf16 %v3087, %v3086
    %v3101 = vpack.c.bf16 %v3089, %v3088
    %v3102 = vpack.c.bf16 %v3091, %v3090
    %v3103 = vpack.c.bf16 %v3093, %v3092
    %v3104 = vpack.c.bf16 %v3095, %v3094
    %v3105 = vpack.c.bf16 %v3097, %v3096
    %v3106 = vld [vmem:[%s7] sm:$0xf]
    %v3107 = vld [vmem:[%s7 + $0x4] sm:$0xf]
    %v3108 = vld [vmem:[%s7 + $0x8] sm:$0xf]
    %v3109 = vld [vmem:[%s7 + $0xc] sm:$0xf]
    %v3110 = vld [vmem:[%s7 + $0x10] sm:$0xf]
    %v3111 = vld [vmem:[%s7 + $0x14] sm:$0xf]
    %v3112 = vld [vmem:[%s8] sm:$0x1]
    %v3114 = vperm.slane %v3112, 0
    %v3122 = vunpack.c.l.b16 %v3106
    %v3123 = vunpack.c.l.b16 %v3107
    %v3124 = vunpack.c.l.b16 %v3108
    %v3125 = vunpack.c.l.b16 %v3109
    %v3126 = vunpack.c.l.b16 %v3110
    %v3127 = vunpack.c.l.b16 %v3111
    %v3128 = vpack.c.b16 %v3123, %v3122
    %v3129 = vpack.c.b16 %v3125, %v3124
    %v3130 = vpack.c.b16 %v3127, %v3126
    %v3135 = vsel %vm2704, %v3098, 0
    %v3138 = vsel %vm2704, %v3099, 0
    %v3141 = vsel %vm2704, %v3100, 0
    %v3144 = vsel %vm2704, %v3101, 0
    %v3147 = vsel %vm2704, %v3102, 0
    %v3150 = vsel %vm2704, %v3103, 0
    %v3153 = vsel %vm2704, %v3104, 0
    %v3156 = vsel %vm2704, %v3105, 0
    %3158 = vmatpush.bf16.msra.mxu0 0
    %3159 = vmatpush.bf16.msra.mxu0 0
    %3160 = vmatpush.bf16.msra.mxu0 0
    %3161 = vmatpush.bf16.msra.mxu0 0
    %3162 = vmatpush.bf16.msra.mxu0 0
    %3163 = vmatpush.bf16.msra.mxu0 %v3130
    %3164 = vmatpush.bf16.msra.mxu0 %v3129
    %3165 = vmatpush.bf16.msra.mxu0 %v3128
    %3166 = vmatmul.bf16.gmra.mxu0 %v3135
    %v3167 = vpop.f32.mrf.mxu0
    %v3168 = vadd.f32 %v3114, %v3167
    %v3169 = vpop.f32.mrf.mxu0
    %v3170 = vadd.f32 %v3114, %v3169
    %3171 = vmatmul.bf16.gmra.mxu0 %v3138
    %v3172 = vpop.f32.mrf.mxu0
    %v3173 = vadd.f32 %v3114, %v3172
    %v3174 = vpop.f32.mrf.mxu0
    %v3175 = vadd.f32 %v3114, %v3174
    %3176 = vmatmul.bf16.gmra.mxu0 %v3141
    %v3177 = vpop.f32.mrf.mxu0
    %v3178 = vadd.f32 %v3114, %v3177
    %v3179 = vpop.f32.mrf.mxu0
    %v3180 = vadd.f32 %v3114, %v3179
    %3181 = vmatmul.bf16.gmra.mxu0 %v3144
    %v3182 = vpop.f32.mrf.mxu0
    %v3183 = vadd.f32 %v3114, %v3182
    %v3184 = vpop.f32.mrf.mxu0
    %v3185 = vadd.f32 %v3114, %v3184
    %3186 = vmatmul.bf16.gmra.mxu0 %v3147
    %v3187 = vpop.f32.mrf.mxu0
    %v3188 = vadd.f32 %v3114, %v3187
    %v3189 = vpop.f32.mrf.mxu0
    %v3190 = vadd.f32 %v3114, %v3189
    %3191 = vmatmul.bf16.gmra.mxu0 %v3150
    %v3192 = vpop.f32.mrf.mxu0
    %v3193 = vadd.f32 %v3114, %v3192
    %v3194 = vpop.f32.mrf.mxu0
    %v3195 = vadd.f32 %v3114, %v3194
    %3196 = vmatmul.bf16.gmra.mxu0 %v3153
    %v3197 = vpop.f32.mrf.mxu0
    %v3198 = vadd.f32 %v3114, %v3197
    %v3199 = vpop.f32.mrf.mxu0
    %v3200 = vadd.f32 %v3114, %v3199
    %3201 = vmatmul.bf16.gmra.mxu0 %v3156
    %v3202 = vpop.f32.mrf.mxu0
    %v3203 = vadd.f32 %v3114, %v3202
    %v3204 = vpop.f32.mrf.mxu0
    %v3205 = vadd.f32 %v3114, %v3204
    %3206 = vdwg.mxu0
    %v3207 = vld [vmem:[%s3] sm:$0x3f]
    %v3209 = vsel %vm119, %v3207, 0
    %3211 = vmatpush.msra.mxu0 0.0
    %3212 = vmatpush.msra.mxu0 0.0
    %3213 = vmatpush.msra.mxu0 0.0
    %3214 = vmatpush.msra.mxu0 0.0
    %3215 = vmatpush.msra.mxu0 0.0
    %3216 = vmatpush.msra.mxu0 0.0
    %3217 = vmatpush.msra.mxu0 0.0
    %3218 = vmatpush.msra.mxu0 0.0
    %3219 = vmatpush.msra.mxu0 0.0
    %3220 = vmatpush.msra.mxu0 0.0
    %3221 = vmatpush.msra.mxu0 0.0
    %3222 = vmatpush.msra.mxu0 0.0
    %3223 = vmatpush.msra.mxu0 0.0
    %3224 = vmatpush.msra.mxu0 0.0
    %3225 = vmatpush.msra.mxu0 0.0
    %3226 = vmatpush.msra.mxu0 %v3209
    %3227 = vmatmul.f32.gmra.mxu0 %v72
    %v3228 = vpop.f32.mrf.mxu0
    %v3229 = vadd.f32 0.0, %v3228
    %3230 = vmatmul.f32.gmra.mxu0 %v75
    %v3231 = vpop.f32.mrf.mxu0
    %v3232 = vadd.f32 0.0, %v3231
    %3233 = vmatmul.f32.gmra.mxu0 %v78
    %v3234 = vpop.f32.mrf.mxu0
    %v3235 = vadd.f32 0.0, %v3234
    %3236 = vmatmul.f32.gmra.mxu0 %v81
    %v3237 = vpop.f32.mrf.mxu0
    %v3238 = vadd.f32 0.0, %v3237
    %3239 = vmatmul.f32.gmra.mxu0 %v84
    %v3240 = vpop.f32.mrf.mxu0
    %v3241 = vadd.f32 0.0, %v3240
    %3242 = vmatmul.f32.gmra.mxu0 %v87
    %v3243 = vpop.f32.mrf.mxu0
    %v3244 = vadd.f32 0.0, %v3243
    %3245 = vmatmul.f32.gmra.mxu0 %v90
    %v3246 = vpop.f32.mrf.mxu0
    %v3247 = vadd.f32 0.0, %v3246
    %3248 = vmatmul.f32.gmra.mxu0 %v93
    %v3249 = vpop.f32.mrf.mxu0
    %v3250 = vadd.f32 0.0, %v3249
    %3251 = vmatmul.f32.gmra.mxu0 %v96
    %v3252 = vpop.f32.mrf.mxu0
    %v3253 = vadd.f32 0.0, %v3252
    %3254 = vmatmul.f32.gmra.mxu0 %v99
    %v3255 = vpop.f32.mrf.mxu0
    %v3256 = vadd.f32 0.0, %v3255
    %3257 = vmatmul.f32.gmra.mxu0 %v102
    %v3258 = vpop.f32.mrf.mxu0
    %v3259 = vadd.f32 0.0, %v3258
    %3260 = vmatmul.f32.gmra.mxu0 %v105
    %v3261 = vpop.f32.mrf.mxu0
    %v3262 = vadd.f32 0.0, %v3261
    %3263 = vmatmul.f32.gmra.mxu0 %v108
    %v3264 = vpop.f32.mrf.mxu0
    %v3265 = vadd.f32 0.0, %v3264
    %3266 = vmatmul.f32.gmra.mxu0 %v111
    %v3267 = vpop.f32.mrf.mxu0
    %v3268 = vadd.f32 0.0, %v3267
    %3269 = vmatmul.f32.gmra.mxu0 %v114
    %v3270 = vpop.f32.mrf.mxu0
    %v3271 = vadd.f32 0.0, %v3270
    %3272 = vmatmul.f32.gmra.mxu0 %v117
    %v3273 = vpop.f32.mrf.mxu0
    %v3274 = vadd.f32 0.0, %v3273
    %3275 = vdwg.mxu0
    %v3276 = vfloor.f32 %v3229
    %v3277 = vfloor.f32 %v3232
    %v3278 = vfloor.f32 %v3235
    %v3279 = vfloor.f32 %v3238
    %v3280 = vfloor.f32 %v3241
    %v3281 = vfloor.f32 %v3244
    %v3282 = vfloor.f32 %v3247
    %v3283 = vfloor.f32 %v3250
    %v3284 = vfloor.f32 %v3253
    %v3285 = vfloor.f32 %v3256
    %v3286 = vfloor.f32 %v3259
    %v3287 = vfloor.f32 %v3262
    %v3288 = vfloor.f32 %v3265
    %v3289 = vfloor.f32 %v3268
    %v3290 = vfloor.f32 %v3271
    %v3291 = vfloor.f32 %v3274
    %v3292 = vld [vmem:[%s4] sm:$0x1]
    %v3294 = vperm.slane %v3292, 0
    %vm3296 = vcmp.eq.f32.partialorder %v3276, %v3294
    %vm3297 = vcmp.eq.f32.partialorder %v3277, %v3294
    %vm3298 = vcmp.eq.f32.partialorder %v3278, %v3294
    %vm3299 = vcmp.eq.f32.partialorder %v3279, %v3294
    %vm3300 = vcmp.eq.f32.partialorder %v3280, %v3294
    %vm3301 = vcmp.eq.f32.partialorder %v3281, %v3294
    %vm3302 = vcmp.eq.f32.partialorder %v3282, %v3294
    %vm3303 = vcmp.eq.f32.partialorder %v3283, %v3294
    %vm3304 = vcmp.eq.f32.partialorder %v3284, %v3294
    %vm3305 = vcmp.eq.f32.partialorder %v3285, %v3294
    %vm3306 = vcmp.eq.f32.partialorder %v3286, %v3294
    %vm3307 = vcmp.eq.f32.partialorder %v3287, %v3294
    %vm3308 = vcmp.eq.f32.partialorder %v3288, %v3294
    %vm3309 = vcmp.eq.f32.partialorder %v3289, %v3294
    %vm3310 = vcmp.eq.f32.partialorder %v3290, %v3294
    %vm3311 = vcmp.eq.f32.partialorder %v3291, %v3294
    %v3312 = vsel %vm3296, 1, 0
    %v3313 = vsel %vm3297, 1, 0
    %v3314 = vsel %vm3298, 1, 0
    %v3315 = vsel %vm3299, 1, 0
    %v3316 = vsel %vm3300, 1, 0
    %v3317 = vsel %vm3301, 1, 0
    %v3318 = vsel %vm3302, 1, 0
    %v3319 = vsel %vm3303, 1, 0
    %v3320 = vsel %vm3304, 1, 0
    %v3321 = vsel %vm3305, 1, 0
    %v3322 = vsel %vm3306, 1, 0
    %v3323 = vsel %vm3307, 1, 0
    %v3324 = vsel %vm3308, 1, 0
    %v3325 = vsel %vm3309, 1, 0
    %v3326 = vsel %vm3310, 1, 0
    %v3327 = vsel %vm3311, 1, 0
    %v3328 = vcvt.s32.f32 %v3312
    %v3329 = vcvt.s32.f32 %v3313
    %v3330 = vcvt.s32.f32 %v3314
    %v3331 = vcvt.s32.f32 %v3315
    %v3332 = vcvt.s32.f32 %v3316
    %v3333 = vcvt.s32.f32 %v3317
    %v3334 = vcvt.s32.f32 %v3318
    %v3335 = vcvt.s32.f32 %v3319
    %v3336 = vcvt.s32.f32 %v3320
    %v3337 = vcvt.s32.f32 %v3321
    %v3338 = vcvt.s32.f32 %v3322
    %v3339 = vcvt.s32.f32 %v3323
    %v3340 = vcvt.s32.f32 %v3324
    %v3341 = vcvt.s32.f32 %v3325
    %v3342 = vcvt.s32.f32 %v3326
    %v3343 = vcvt.s32.f32 %v3327
    %v3344 = vpack.c.bf16 %v3329, %v3328
    %v3345 = vpack.c.bf16 %v3331, %v3330
    %v3346 = vpack.c.bf16 %v3333, %v3332
    %v3347 = vpack.c.bf16 %v3335, %v3334
    %v3348 = vpack.c.bf16 %v3337, %v3336
    %v3349 = vpack.c.bf16 %v3339, %v3338
    %v3350 = vpack.c.bf16 %v3341, %v3340
    %v3351 = vpack.c.bf16 %v3343, %v3342
    %v3352 = vld [vmem:[%s9] sm:$0xf]
    %v3353 = vld [vmem:[%s9 + $0x4] sm:$0x1]
    %v3354 = vpack.c.bf16 %v3170, %v3168
    %v3355 = vpack.c.bf16 %v3175, %v3173
    %v3356 = vpack.c.bf16 %v3180, %v3178
    %v3357 = vpack.c.bf16 %v3185, %v3183
    %v3358 = vpack.c.bf16 %v3190, %v3188
    %v3359 = vpack.c.bf16 %v3195, %v3193
    %v3360 = vpack.c.bf16 %v3200, %v3198
    %v3361 = vpack.c.bf16 %v3205, %v3203
    %v3362 = vld [vmem:[%s10] sm:$0xf]
    %v3363 = vld [vmem:[%s10 + $0x4] sm:$0xf]
    %v3364 = vld [vmem:[%s10 + $0x8] sm:$0xf]
    %v3365 = vld [vmem:[%s10 + $0xc] sm:$0xf]
    %v3366 = vld [vmem:[%s10 + $0x10] sm:$0xf]
    %v3367 = vld [vmem:[%s10 + $0x14] sm:$0xf]
    %v3374 = vunpack.c.l.b16 %v3362
    %v3375 = vunpack.c.l.b16 %v3363
    %v3376 = vunpack.c.l.b16 %v3364
    %v3377 = vunpack.c.l.b16 %v3365
    %v3378 = vunpack.c.l.b16 %v3366
    %v3379 = vunpack.c.l.b16 %v3367
    %v3380 = vpack.c.b16 %v3375, %v3374
    %v3381 = vpack.c.b16 %v3377, %v3376
    %v3382 = vpack.c.b16 %v3379, %v3378
    %v3387 = vsel %vm2704, %v3354, 0
    %v3390 = vsel %vm2704, %v3355, 0
    %v3393 = vsel %vm2704, %v3356, 0
    %v3396 = vsel %vm2704, %v3357, 0
    %v3399 = vsel %vm2704, %v3358, 0
    %v3402 = vsel %vm2704, %v3359, 0
    %v3405 = vsel %vm2704, %v3360, 0
    %v3408 = vsel %vm2704, %v3361, 0
    %3410 = vmatpush.bf16.msra.mxu0 0
    %3411 = vmatpush.bf16.msra.mxu0 0
    %3412 = vmatpush.bf16.msra.mxu0 0
    %3413 = vmatpush.bf16.msra.mxu0 0
    %3414 = vmatpush.bf16.msra.mxu0 0
    %3415 = vmatpush.bf16.msra.mxu0 %v3382
    %3416 = vmatpush.bf16.msra.mxu0 %v3381
    %3417 = vmatpush.bf16.msra.mxu0 %v3380
    %3418 = vmatmul.bf16.gmra.mxu0 %v3387
    %v3419 = vpop.f32.mrf.mxu0
    %v3420 = vadd.f32 0.0, %v3419
    %v3421 = vpop.f32.mrf.mxu0
    %v3422 = vadd.f32 0.0, %v3421
    %3423 = vmatmul.bf16.gmra.mxu0 %v3390
    %v3424 = vpop.f32.mrf.mxu0
    %v3425 = vadd.f32 0.0, %v3424
    %v3426 = vpop.f32.mrf.mxu0
    %v3427 = vadd.f32 0.0, %v3426
    %3428 = vmatmul.bf16.gmra.mxu0 %v3393
    %v3429 = vpop.f32.mrf.mxu0
    %v3430 = vadd.f32 0.0, %v3429
    %v3431 = vpop.f32.mrf.mxu0
    %v3432 = vadd.f32 0.0, %v3431
    %3433 = vmatmul.bf16.gmra.mxu0 %v3396
    %v3434 = vpop.f32.mrf.mxu0
    %v3435 = vadd.f32 0.0, %v3434
    %v3436 = vpop.f32.mrf.mxu0
    %v3437 = vadd.f32 0.0, %v3436
    %3438 = vmatmul.bf16.gmra.mxu0 %v3399
    %v3439 = vpop.f32.mrf.mxu0
    %v3440 = vadd.f32 0.0, %v3439
    %v3441 = vpop.f32.mrf.mxu0
    %v3442 = vadd.f32 0.0, %v3441
    %3443 = vmatmul.bf16.gmra.mxu0 %v3402
    %v3444 = vpop.f32.mrf.mxu0
    %v3445 = vadd.f32 0.0, %v3444
    %v3446 = vpop.f32.mrf.mxu0
    %v3447 = vadd.f32 0.0, %v3446
    %3448 = vmatmul.bf16.gmra.mxu0 %v3405
    %v3449 = vpop.f32.mrf.mxu0
    %v3450 = vadd.f32 0.0, %v3449
    %v3451 = vpop.f32.mrf.mxu0
    %v3452 = vadd.f32 0.0, %v3451
    %3453 = vmatmul.bf16.gmra.mxu0 %v3408
    %v3454 = vpop.f32.mrf.mxu0
    %v3455 = vadd.f32 0.0, %v3454
    %v3456 = vpop.f32.mrf.mxu0
    %v3457 = vadd.f32 0.0, %v3456
    %3458 = vdwg.mxu0
    %v3461 = vunpack.c.l.b16 %v3352
    %v3462 = vunpack.c.l.b16 %v3353
    %v3463 = vpack.c.b16 %v3462, %v3461
    %vm3464 = vcmask 72704
    %v3466 = vsel %vm3464, %v3344, 0
    %v3469 = vsel %vm3464, %v3345, 0
    %v3472 = vsel %vm3464, %v3346, 0
    %v3475 = vsel %vm3464, %v3347, 0
    %v3478 = vsel %vm3464, %v3348, 0
    %v3481 = vsel %vm3464, %v3349, 0
    %v3484 = vsel %vm3464, %v3350, 0
    %v3487 = vsel %vm3464, %v3351, 0
    %vm3489 = vcmask 1043456
    %vm3490 = vcmask 1044480
    %v3491 = vsel %vm3489, 4294967295, 65535
    %v3492 = vsel %vm3490, %v3491, 0
    %v3494 = vand.u32 %v3463, %v3492
    %3496 = vmatpush.bf16.msra.mxu0 0
    %3497 = vmatpush.bf16.msra.mxu0 0
    %3498 = vmatpush.bf16.msra.mxu0 0
    %3499 = vmatpush.bf16.msra.mxu0 0
    %3500 = vmatpush.bf16.msra.mxu0 0
    %3501 = vmatpush.bf16.msra.mxu0 0
    %3502 = vmatpush.bf16.msra.mxu0 0
    %3503 = vmatpush.bf16.msra.mxu0 %v3494
    %3504 = vmatmul.bf16.gmra.mxu0 %v3466
    %v3505 = vpop.f32.mrf.mxu0
    %v3506 = vadd.f32 %v3420, %v3505
    %v3507 = vpop.f32.mrf.mxu0
    %v3508 = vadd.f32 %v3422, %v3507
    %3509 = vmatmul.bf16.gmra.mxu0 %v3469
    %v3510 = vpop.f32.mrf.mxu0
    %v3511 = vadd.f32 %v3425, %v3510
    %v3512 = vpop.f32.mrf.mxu0
    %v3513 = vadd.f32 %v3427, %v3512
    %3514 = vmatmul.bf16.gmra.mxu0 %v3472
    %v3515 = vpop.f32.mrf.mxu0
    %v3516 = vadd.f32 %v3430, %v3515
    %v3517 = vpop.f32.mrf.mxu0
    %v3518 = vadd.f32 %v3432, %v3517
    %3519 = vmatmul.bf16.gmra.mxu0 %v3475
    %v3520 = vpop.f32.mrf.mxu0
    %v3521 = vadd.f32 %v3435, %v3520
    %v3522 = vpop.f32.mrf.mxu0
    %v3523 = vadd.f32 %v3437, %v3522
    %3524 = vmatmul.bf16.gmra.mxu0 %v3478
    %v3525 = vpop.f32.mrf.mxu0
    %v3526 = vadd.f32 %v3440, %v3525
    %v3527 = vpop.f32.mrf.mxu0
    %v3528 = vadd.f32 %v3442, %v3527
    %3529 = vmatmul.bf16.gmra.mxu0 %v3481
    %v3530 = vpop.f32.mrf.mxu0
    %v3531 = vadd.f32 %v3445, %v3530
    %v3532 = vpop.f32.mrf.mxu0
    %v3533 = vadd.f32 %v3447, %v3532
    %3534 = vmatmul.bf16.gmra.mxu0 %v3484
    %v3535 = vpop.f32.mrf.mxu0
    %v3536 = vadd.f32 %v3450, %v3535
    %v3537 = vpop.f32.mrf.mxu0
    %v3538 = vadd.f32 %v3452, %v3537
    %3539 = vmatmul.bf16.gmra.mxu0 %v3487
    %v3540 = vpop.f32.mrf.mxu0
    %v3541 = vadd.f32 %v3455, %v3540
    %v3542 = vpop.f32.mrf.mxu0
    %v3543 = vadd.f32 %v3457, %v3542
    %3544 = vdwg.mxu0
    %v3545 = vld [vmem:[%s11] sm:$0x1]
    %v3547 = vperm.slane %v3545, 0
    %v3549 = vadd.f32 %v3506, %v3547
    %v3550 = vadd.f32 %v3508, %v3547
    %v3551 = vadd.f32 %v3511, %v3547
    %v3552 = vadd.f32 %v3513, %v3547
    %v3553 = vadd.f32 %v3516, %v3547
    %v3554 = vadd.f32 %v3518, %v3547
    %v3555 = vadd.f32 %v3521, %v3547
    %v3556 = vadd.f32 %v3523, %v3547
    %v3557 = vadd.f32 %v3526, %v3547
    %v3558 = vadd.f32 %v3528, %v3547
    %v3559 = vadd.f32 %v3531, %v3547
    %v3560 = vadd.f32 %v3533, %v3547
    %v3561 = vadd.f32 %v3536, %v3547
    %v3562 = vadd.f32 %v3538, %v3547
    %v3563 = vadd.f32 %v3541, %v3547
    %v3564 = vadd.f32 %v3543, %v3547
    %v3565 = vmax.f32 %v3549, 0.0
    %v3566 = vmax.f32 %v3550, 0.0
    %v3567 = vmax.f32 %v3551, 0.0
    %v3568 = vmax.f32 %v3552, 0.0
    %v3569 = vmax.f32 %v3553, 0.0
    %v3570 = vmax.f32 %v3554, 0.0
    %v3571 = vmax.f32 %v3555, 0.0
    %v3572 = vmax.f32 %v3556, 0.0
    %v3573 = vmax.f32 %v3557, 0.0
    %v3574 = vmax.f32 %v3558, 0.0
    %v3575 = vmax.f32 %v3559, 0.0
    %v3576 = vmax.f32 %v3560, 0.0
    %v3577 = vmax.f32 %v3561, 0.0
    %v3578 = vmax.f32 %v3562, 0.0
    %v3579 = vmax.f32 %v3563, 0.0
    %v3580 = vmax.f32 %v3564, 0.0
    %v3581 = vpack.c.bf16 %v3566, %v3565
    %v3582 = vpack.c.bf16 %v3568, %v3567
    %v3583 = vpack.c.bf16 %v3570, %v3569
    %v3584 = vpack.c.bf16 %v3572, %v3571
    %v3585 = vpack.c.bf16 %v3574, %v3573
    %v3586 = vpack.c.bf16 %v3576, %v3575
    %v3587 = vpack.c.bf16 %v3578, %v3577
    %v3588 = vpack.c.bf16 %v3580, %v3579
    %v3589 = vld [vmem:[%s12] sm:$0x7]
    %v3590 = vld [vmem:[%s13] sm:$0x3f]
    %3592 = vset.pattern.permute.xlu0 0
    %3593 = vperm.xlu0 %3592, %v3590
    %v3594 = vpop.permute.xlu0 %3593
    %vm3596 = vcmask 64512
    %v3598 = vsel %vm3596, %v3589, 0
    %v3601 = vsel %vm3596, %v3581, 0
    %v3604 = vsel %vm3596, %v3582, 0
    %v3607 = vsel %vm3596, %v3583, 0
    %v3610 = vsel %vm3596, %v3584, 0
    %v3613 = vsel %vm3596, %v3585, 0
    %v3616 = vsel %vm3596, %v3586, 0
    %v3619 = vsel %vm3596, %v3587, 0
    %v3622 = vsel %vm3596, %v3588, 0
    %3624 = vmatpush.bf16.xpose.msra.mxu0 %v3622
    %3625 = vmatpush.bf16.xpose.msra.mxu0 %v3619
    %3626 = vmatpush.bf16.xpose.msra.mxu0 %v3616
    %3627 = vmatpush.bf16.xpose.msra.mxu0 %v3613
    %3628 = vmatpush.bf16.xpose.msra.mxu0 %v3610
    %3629 = vmatpush.bf16.xpose.msra.mxu0 %v3607
    %3630 = vmatpush.bf16.xpose.msra.mxu0 %v3604
    %3631 = vmatpush.bf16.xpose.msra.mxu0 %v3601
    %3632 = vmatmul.bf16.gmra.mxu0 %v3598
    %v3633 = vpop.f32.mrf.mxu0
    %v3634 = vadd.f32 %v3594, %v3633
    %v3635 = vpop.f32.mrf.mxu0
    %3636 = vdwg.mxu0
    %3637 = vst [vmem:[#allocation2] sm:$0x3f] %v3634
    // Predicated region
    $region58: #{tpu_custom_call.1} parent=1 // pred_check
      _
    $region59: #{tpu_custom_call.1} parent=1 // pred_check_branch
      %3639 = sbr.rel (0) target = $region61
    $region60: #{tpu_custom_call.1} parent=1 // pred_region
      %3641 = vsyncadd [#allocation3], 0
      %s3643 = sshll.u32 [#allocation2], 4
      %s3644 = int_to_ptr.vmem [resolvable:$true] %s3643
      %s3645 = sshll.u32 %s14, 4
      %s3646 = int_to_ptr.hbm [resolvable:$true] %s3645
      %3648 = dma.vmem_to_hbm [thread:$0]  %s3644, 128, %s3646, [#allocation3]
    $region61: #{tpu_custom_call.1} parent=1 // pred_fallthru
      _
    // Predicated region
    $region62: #{tpu_custom_call.1} parent=1 // pred_check
      _
    $region63: #{tpu_custom_call.1} parent=1 // pred_check_branch
      %3650 = sbr.rel (0) target = $region65
    $region64: #{tpu_custom_call.1} parent=1 // pred_region
      %3652 = dma.done [#allocation3], 128
    $region65: #{tpu_custom_call.1} parent=1 // pred_fallthru
      _
    %3653 = vsyncpa [#allocation3], 1

</llo_original>
